<compile_context>
chip_gen: v7x
topology: tpu7x:2x2x1
jax: 0.10.0
libtpu: 0.0.40
codegen_flags: <defaults>
</compile_context>

<pallas_src>
import math

import jax
import jax.numpy as jnp
from jax.experimental import pallas as pl
from jax.experimental.pallas import tpu as pltpu

# ---- MultiStepEIFNode parameter init values (module __init__ defaults) ----
EIF_THRESHOLD = 1.0
EIF_REST = 0.0
EIF_TAU = 1.0
EIF_DELTA_T = 1.0
EIF_THETA_RH = 0.8
BN_EPS = 1e-5

C = 128      # channels after conv1/conv2
L1 = 75      # conv1 output length: (300 + 2*6 - 16)//4 + 1
L2 = 18      # conv2 / SAB length:  (75 + 2*6 - 16)//4 + 1
FR = 24      # per-sample frame rows in the conv2/SAB stage (L2 rounded up to 8)
PK = 28      # conv1 "4-packed" window: 4 consecutive conv1 outputs read 28 input samples

_EIF_CONST = EIF_REST + EIF_DELTA_T * math.exp((0.0 - EIF_THETA_RH) / EIF_DELTA_T)


def _eif_spike(y):
    # mem starts at 0:  mem = (y - (0 - rest) + delta_T * exp((0 - theta_rh)/delta_T)) / tau
    mem = (y + _EIF_CONST) / EIF_TAU
    return (mem >= EIF_THRESHOLD).astype(jnp.float32)


def _fold_bn(bias, gamma, beta, mean, var):
    scale = gamma / jnp.sqrt(var + BN_EPS)
    shift = (bias - mean) * scale + beta
    return (scale.reshape(1, -1).astype(jnp.float32),
            shift.reshape(1, -1).astype(jnp.float32))


# ------------------------------------------------------------------
# Fused kernel: conv1 -> conv2 -> ConvSAB -> avgpool -> fc, per batch tile
# ------------------------------------------------------------------
def tcsn_kernel(gates_ref, x1_ref, w1b_ref, sc1_ref, sh1_ref, mcol_ref, mrow_ref,
                w2c_ref, sc2_ref, sh2_ref,
                ws1c_ref, ssc1_ref, ssh1_ref,
                ws2c_ref, ssc2_ref, ssh2_ref,
                caw1_ref, cab1_ref, caw2_ref, cab2_ref,
                spw_ref, fcw_ref, fcb_ref, out_ref):
    f32, bf16 = jnp.float32, jnp.bfloat16
    bt = x1_ref.shape[0] // FR          # samples per grid step

    # ---- conv1 (Cin=1, K=16, s=4, p=6) + BN + ReLU -----------------------------------
    # "4-packed" banded matmul: one (bt*24, 28) x (28, 512) MXU matmul; lane block s of
    # row (b, j) holds conv1 output at padded position 4j+s.
    h = jnp.dot(x1_ref[...], w1b_ref[...], preferred_element_type=f32)        # (bt*24, 512)
    h = jnp.maximum(h * sc1_ref[...] + sh1_ref[...], 0.0)
    # positions outside conv1's valid output range are conv2's zero padding -> mask them
    hm = h.reshape(bt, FR, 4 * C) * mcol_ref[...]                             # (bt, 24, 512)

    # ---- conv2 (K=16, s=4, p=6) + BN + ReLU -------------------------------------------
    # 16 taps grouped 4-at-a-time: 4 accumulated matmuls with K=512 (instead of 16 tiny ones).
    acc = jnp.zeros((bt * FR, C), f32)
    for w in range(4):
        if w == 0:
            piece = hm
        else:
            piece = jnp.concatenate([hm[:, w:, :], jnp.zeros((bt, w, 4 * C), f32)], axis=1)
        acc = acc + jnp.dot(piece.reshape(bt * FR, 4 * C).astype(bf16),
                            w2c_ref[4 * C * w:4 * C * (w + 1), :],
                            preferred_element_type=f32)
    a2 = jnp.maximum(acc * sc2_ref[...] + sh2_ref[...], 0.0)                  # relu2
    a2_3 = a2.reshape(bt, FR, C) * mrow_ref[...]                              # rows >= 18 zeroed
    a2_sum = jnp.sum(a2_3, axis=1)                                            # residual sum, (bt, 128)

    zrow = jnp.zeros((bt, 1, C), f32)

    def conv3(v3, w_ref):
        # k=3 / pad=1 conv over 24-row frames (rows >= 18 of v3 are zero):
        # shifted operands built with zero-row concats, 3 accumulated matmuls.
        taps = (jnp.concatenate([zrow, v3[:, :FR - 1, :]], axis=1),           # v[m-1]
                v3,                                                           # v[m]
                jnp.concatenate([v3[:, 1:, :], zrow], axis=1))                # v[m+1]
        y = jnp.zeros((bt * FR, C), f32)
        for j in range(3):
            y = y + jnp.dot(taps[j].reshape(bt * FR, C).astype(bf16),
                            w_ref[C * j:C * (j + 1), :],
                            preferred_element_type=f32)
        return y

    # ---- SAB conv1 + BN + EIF spike ----
    y = conv3(a2_3, ws1c_ref)
    s1_3 = _eif_spike(y * ssc1_ref[...] + ssh1_ref[...]).reshape(bt, FR, C) * mrow_ref[...]

    # ---- SAB conv2 + BN + EIF spike ----
    y = conv3(s1_3, ws2c_ref)
    s2_3 = _eif_spike(y * ssc2_ref[...] + ssh2_ref[...]).reshape(bt, FR, C) * mrow_ref[...]
    s2_sum = jnp.sum(s2_3, axis=1)                                            # (bt, 128)

    # ---- channel attention: avgpool -> 1x1 conv -> ReLU -> 1x1 conv -> sigmoid ----
    pooled = (s2_sum * (1.0 / L2)).astype(bf16)                               # (bt, 128)
    hc = jnp.maximum(jnp.dot(pooled, caw1_ref[...], preferred_element_type=f32)
                     + cab1_ref[...], 0.0)                                    # (bt, 8)
    ch_att = jax.nn.sigmoid(jnp.dot(hc.astype(bf16), caw2_ref[...],
                                    preferred_element_type=f32) + cab2_ref[...])   # (bt, 128)

    # ---- spatial attention: Conv1d(C->1, k=7, p=3) as 7 shifted VPU MACs + lane reduce ----
    acc7 = jnp.zeros((bt, FR, C), f32)
    for j in range(7):
        d = j - 3
        if d < 0:
            sh = jnp.concatenate([jnp.zeros((bt, -d, C), f32), s2_3[:, :FR + d, :]], axis=1)
        elif d > 0:
            sh = jnp.concatenate([s2_3[:, d:, :], jnp.zeros((bt, d, C), f32)], axis=1)
        else:
            sh = s2_3
        acc7 = acc7 + sh * spw_ref[j:j + 1, :]
    sp_att = jax.nn.sigmoid(jnp.sum(acc7, axis=-1, keepdims=True) + gates_ref[2])   # (bt, 24, 1)

    # ---- gated attention + residual + global avg-pool + fc ----------------------------
    # mean_m[g_ch*s2*ch + g_sp*s2*sp + a2] = (g_ch*ch*sum(s2) + g_sp*sum(s2*sp) + sum(a2)) / 18
    sp_term = jnp.sum(s2_3 * sp_att, axis=1)                                  # (bt, 128)
    pooled_o = (gates_ref[0] * (ch_att * s2_sum)
                + gates_ref[1] * sp_term + a2_sum) * (1.0 / L2)
    logits = jnp.dot(pooled_o.astype(bf16), fcw_ref[...],
                     preferred_element_type=f32) + fcb_ref[...]
    out_ref[...] = logits.astype(out_ref.dtype)


# ------------------------------------------------------------------
# TCSN forward
# ------------------------------------------------------------------
def tcsn_forward(x, p, *, bt=None):
    """x: (B, 300) float32 -> logits (B, num_classes)."""
    B, Lin = x.shape
    assert Lin == 300, "kernel constants assume input_size == 300"
    num_classes = p["fc_w"].shape[0]
    assert num_classes <= C

    # Batch tile folded into the MXU M dimension (M = bt*24 rows per grid step).
    # bt=8 -> ~192 rows (fills a 128-row MXU); on v6e/v7x bt=16 fills a 256-row MXU
    # (cap at B//2 on v7x to keep >= 2 grid steps for its two TensorCores).
    if bt is None:
        bt = min(8, B)
    bpad = ((B + bt - 1) // bt) * bt
    xb = jnp.pad(x, ((0, bpad - B), (0, 0))) if bpad != B else x

    # ---- conv1 input, im2col'd in "4-packed" form: X1[b, j, t] = x[b, 16j + t - 30] ----
    xp = jnp.pad(xb, ((0, 0), (30, 16 * (FR - 1) + PK - 30 - Lin)))
    idx = (16 * jnp.arange(FR)[:, None] + jnp.arange(PK)[None, :]).reshape(-1)
    x1 = jnp.take(xp, idx, axis=1).reshape(bpad * FR, PK).astype(jnp.float32)

    # conv1 banded weight: W1blk[4s+k, 128s+c] = conv1_w[c, 0, k]
    w1kc = jnp.transpose(p["conv1_w"][:, 0, :], (1, 0)).astype(jnp.float32)   # (16, 128)
    w1b = jnp.zeros((PK, 4 * C), jnp.float32)
    for s in range(4):
        w1b = w1b.at[4 * s:4 * s + 16, C * s:C * (s + 1)].set(w1kc)

    sc1, sh1 = _fold_bn(p["conv1_b"], p["bn1_g"], p["bn1_b"], p["bn1_m"], p["bn1_v"])
    sc1_4, sh1_4 = jnp.tile(sc1, (1, 4)), jnp.tile(sh1, (1, 4))

    # validity masks (conv1 output position valid iff 6 <= 4j+s < 6+75; frame rows < 18 valid)
    pos = 4 * jnp.arange(FR)[:, None] + (jnp.arange(4 * C)[None, :] // C)
    mcol = ((pos >= 6) & (pos < 6 + L1)).astype(jnp.float32)                  # (24, 512)
    mrow = jnp.broadcast_to((jnp.arange(FR) < L2).astype(jnp.float32)[:, None], (FR, C))

    # conv2 / SAB weights, taps stacked along K (k-major), bf16 MXU operands
    w2c = jnp.transpose(p["conv2_w"], (2, 1, 0)).reshape(16 * C, C).astype(jnp.bfloat16)
    sc2, sh2 = _fold_bn(p["conv2_b"], p["bn2_g"], p["bn2_b"], p["bn2_m"], p["bn2_v"])
    ws1c = jnp.transpose(p["sab_conv1_w"], (2, 1, 0)).reshape(3 * C, C).astype(jnp.bfloat16)
    ssc1, ssh1 = _fold_bn(p["sab_conv1_b"], p["sab_bn1_g"], p["sab_bn1_b"],
                          p["sab_bn1_m"], p["sab_bn1_v"])
    ws2c = jnp.transpose(p["sab_conv2_w"], (2, 1, 0)).reshape(3 * C, C).astype(jnp.bfloat16)
    ssc2, ssh2 = _fold_bn(p["sab_conv2_b"], p["sab_bn2_g"], p["sab_bn2_b"],
                          p["sab_bn2_m"], p["sab_bn2_v"])

    caw1 = p["ca_w1"][:, :, 0].T.astype(jnp.bfloat16)                         # (128, 8)
    cab1 = p["ca_b1"].reshape(1, -1).astype(jnp.float32)                      # (1, 8)
    caw2 = p["ca_w2"][:, :, 0].T.astype(jnp.bfloat16)                         # (8, 128)
    cab2 = p["ca_b2"].reshape(1, -1).astype(jnp.float32)                      # (1, 128)
    spw = p["sp_w"][0].T.astype(jnp.float32)                                  # (7, 128)

    # fc weight / bias lane-padded to 128 so the kernel output stays lane-dense
    fcw = jnp.zeros((C, C), jnp.float32).at[:, :num_classes].set(p["fc_w"].T).astype(jnp.bfloat16)
    fcb = jnp.zeros((1, C), jnp.float32).at[0, :num_classes].set(p["fc_b"])

    # attention gates + spatial-conv bias as SMEM scalars (no host pull, no recompile)
    gates = jnp.concatenate([p["channel_gate"], p["spatial_gate"], p["sp_b"]]).astype(jnp.float32)

    cr = caw1.shape[1]
    const = lambda b: (0, 0)
    out = pl.pallas_call(
        tcsn_kernel,
        out_shape=jax.ShapeDtypeStruct((bpad, C), jnp.float32),
        grid=(bpad // bt,),
        in_specs=[
            pl.BlockSpec(memory_space=pltpu.MemorySpace.SMEM),        # gates (3,)
            pl.BlockSpec((bt * FR, PK), lambda b: (b, 0)),            # conv1 im2col input
            pl.BlockSpec((PK, 4 * C), const),                         # conv1 banded weight
            pl.BlockSpec((1, 4 * C), const),                          # bn1 scale (tiled x4)
            pl.BlockSpec((1, 4 * C), const),                          # bn1 shift (tiled x4)
            pl.BlockSpec((FR, 4 * C), const),                         # conv1 validity mask
            pl.BlockSpec((FR, C), const),                             # frame-row mask
            pl.BlockSpec((16 * C, C), const),                         # conv2 taps (K-stacked)
            pl.BlockSpec((1, C), const),                              # bn2 scale
            pl.BlockSpec((1, C), const),                              # bn2 shift
            pl.BlockSpec((3 * C, C), const),                          # sab conv1 taps
            pl.BlockSpec((1, C), const),
            pl.BlockSpec((1, C), const),
            pl.BlockSpec((3 * C, C), const),                          # sab conv2 taps
            pl.BlockSpec((1, C), const),
            pl.BlockSpec((1, C), const),
            pl.BlockSpec((C, cr), const),                             # ch-attn w1
            pl.BlockSpec((1, cr), const),                             # ch-attn b1
            pl.BlockSpec((cr, C), const),                             # ch-attn w2
            pl.BlockSpec((1, C), const),                              # ch-attn b2
            pl.BlockSpec((7, C), const),                              # spatial-attn w
            pl.BlockSpec((C, C), const),                              # fc w (lane-padded)
            pl.BlockSpec((1, C), const),                              # fc b (lane-padded)
        ],
        out_specs=pl.BlockSpec((bt, C), lambda b: (b, 0)),
        compiler_params=pltpu.CompilerParams(dimension_semantics=("parallel",)),
    )(gates, x1, w1b, sc1_4, sh1_4, mcol, mrow, w2c, sc2, sh2,
      ws1c, ssc1, ssh1, ws2c, ssc2, ssh2, caw1, cab1, caw2, cab2, spw, fcw, fcb)

    # dropout(p=0.1) is identity at inference; strip batch / fc lane padding
    return out[:B, :num_classes]


# ------------------------------------------------------------------
# deterministic parameter initialization (shapes from the module __init__)
# ------------------------------------------------------------------
def init_params(key, num_classes=4):
    c, r = 128, 16
    ks = jax.random.split(key, 8)

    def kaiming(k, shape):
        fan = shape[1] * shape[2] if len(shape) == 3 else shape[1]
        return (math.sqrt(2.0 / fan) * jax.random.normal(k, shape)).astype(jnp.float32)

    def bn():
        return (jnp.ones((c,), jnp.float32), jnp.zeros((c,), jnp.float32),
                jnp.zeros((c,), jnp.float32), jnp.ones((c,), jnp.float32))

    p = {}
    p["conv1_w"] = kaiming(ks[0], (c, 1, 16));   p["conv1_b"] = jnp.zeros((c,), jnp.float32)
    p["bn1_g"], p["bn1_b"], p["bn1_m"], p["bn1_v"] = bn()
    p["conv2_w"] = kaiming(ks[1], (c, c, 16));   p["conv2_b"] = jnp.zeros((c,), jnp.float32)
    p["bn2_g"], p["bn2_b"], p["bn2_m"], p["bn2_v"] = bn()

    p["sab_conv1_w"] = kaiming(ks[2], (c, c, 3)); p["sab_conv1_b"] = jnp.zeros((c,), jnp.float32)
    p["sab_bn1_g"], p["sab_bn1_b"], p["sab_bn1_m"], p["sab_bn1_v"] = bn()
    p["sab_conv2_w"] = kaiming(ks[3], (c, c, 3)); p["sab_conv2_b"] = jnp.zeros((c,), jnp.float32)
    p["sab_bn2_g"], p["sab_bn2_b"], p["sab_bn2_m"], p["sab_bn2_v"] = bn()

    p["ca_w1"] = kaiming(ks[4], (c // r, c, 1)); p["ca_b1"] = jnp.zeros((c // r,), jnp.float32)
    p["ca_w2"] = kaiming(ks[5], (c, c // r, 1)); p["ca_b2"] = jnp.zeros((c,), jnp.float32)
    p["sp_w"] = kaiming(ks[6], (1, c, 7));       p["sp_b"] = jnp.zeros((1,), jnp.float32)

    # module inits these gates to 0 (which zeroes the attention branch);
    # set deterministic non-zero values so the attention path is exercised.
    p["channel_gate"] = jnp.array([0.7], jnp.float32)
    p["spatial_gate"] = jnp.array([0.3], jnp.float32)

    p["fc_w"] = (math.sqrt(1.0 / c) * jax.random.normal(ks[7], (num_classes, c))).astype(jnp.float32)
    p["fc_b"] = jnp.zeros((num_classes,), jnp.float32)
    return p


if __name__ == "__main__":
    B, input_size, num_classes = 2, 300, 4
    key = jax.random.PRNGKey(0)
    kx, kp = jax.random.split(key)
    x = jax.random.normal(kx, (B, input_size), dtype=jnp.float32)
    params = init_params(kp, num_classes=num_classes)

    logits = jax.jit(tcsn_forward)(x, params)
    logits = jax.block_until_ready(logits)

    assert logits.shape == (B, num_classes), logits.shape
    assert bool(jnp.all(jnp.isfinite(logits)))
    print("KERNEL_OK")
</pallas_src>

<mosaic_0001>
module attributes {stable_mosaic.version = 11 : i64} {
  func.func @tcsn_kernel(%arg0: i32, %arg1: memref<3xf32, #tpu.memory_space<smem>>, %arg2: memref<48x28xf32, #tpu.memory_space<vmem>>, %arg3: memref<28x512xf32, #tpu.memory_space<vmem>>, %arg4: memref<1x512xf32, #tpu.memory_space<vmem>>, %arg5: memref<1x512xf32, #tpu.memory_space<vmem>>, %arg6: memref<24x512xf32, #tpu.memory_space<vmem>>, %arg7: memref<24x128xf32, #tpu.memory_space<vmem>>, %arg8: memref<2048x128xbf16, #tpu.memory_space<vmem>>, %arg9: memref<1x128xf32, #tpu.memory_space<vmem>>, %arg10: memref<1x128xf32, #tpu.memory_space<vmem>>, %arg11: memref<384x128xbf16, #tpu.memory_space<vmem>>, %arg12: memref<1x128xf32, #tpu.memory_space<vmem>>, %arg13: memref<1x128xf32, #tpu.memory_space<vmem>>, %arg14: memref<384x128xbf16, #tpu.memory_space<vmem>>, %arg15: memref<1x128xf32, #tpu.memory_space<vmem>>, %arg16: memref<1x128xf32, #tpu.memory_space<vmem>>, %arg17: memref<128x8xbf16, #tpu.memory_space<vmem>>, %arg18: memref<1x8xf32, #tpu.memory_space<vmem>>, %arg19: memref<8x128xbf16, #tpu.memory_space<vmem>>, %arg20: memref<1x128xf32, #tpu.memory_space<vmem>>, %arg21: memref<7x128xf32, #tpu.memory_space<vmem>>, %arg22: memref<128x128xbf16, #tpu.memory_space<vmem>>, %arg23: memref<1x128xf32, #tpu.memory_space<vmem>>, %arg24: memref<2x128xf32, #tpu.memory_space<vmem>>) attributes {dimension_semantics = [#tpu.dimension_semantics<parallel>], iteration_bounds = array<i64: 1>, scalar_prefetch = 0 : i64, scratch_operands = 0 : i64, tpu.core_type = #tpu.core_type<tc>, window_params = [{transform_indices = @transform_0, window_bounds = array<i64: 3>}, {transform_indices = @transform_1, window_bounds = array<i64: 48, 28>}, {pipeline_mode = #tpu.pipeline_mode<synchronous>, transform_indices = @transform_2, window_bounds = array<i64: 28, 512>}, {pipeline_mode = #tpu.pipeline_mode<synchronous>, transform_indices = @transform_3, window_bounds = array<i64: 1, 512>}, {pipeline_mode = #tpu.pipeline_mode<synchronous>, transform_indices = @transform_4, window_bounds = array<i64: 1, 512>}, {pipeline_mode = #tpu.pipeline_mode<synchronous>, transform_indices = @transform_5, window_bounds = array<i64: 24, 512>}, {pipeline_mode = #tpu.pipeline_mode<synchronous>, transform_indices = @transform_6, window_bounds = array<i64: 24, 128>}, {pipeline_mode = #tpu.pipeline_mode<synchronous>, transform_indices = @transform_7, window_bounds = array<i64: 2048, 128>}, {pipeline_mode = #tpu.pipeline_mode<synchronous>, transform_indices = @transform_8, window_bounds = array<i64: 1, 128>}, {pipeline_mode = #tpu.pipeline_mode<synchronous>, transform_indices = @transform_9, window_bounds = array<i64: 1, 128>}, {pipeline_mode = #tpu.pipeline_mode<synchronous>, transform_indices = @transform_10, window_bounds = array<i64: 384, 128>}, {pipeline_mode = #tpu.pipeline_mode<synchronous>, transform_indices = @transform_11, window_bounds = array<i64: 1, 128>}, {pipeline_mode = #tpu.pipeline_mode<synchronous>, transform_indices = @transform_12, window_bounds = array<i64: 1, 128>}, {pipeline_mode = #tpu.pipeline_mode<synchronous>, transform_indices = @transform_13, window_bounds = array<i64: 384, 128>}, {pipeline_mode = #tpu.pipeline_mode<synchronous>, transform_indices = @transform_14, window_bounds = array<i64: 1, 128>}, {pipeline_mode = #tpu.pipeline_mode<synchronous>, transform_indices = @transform_15, window_bounds = array<i64: 1, 128>}, {pipeline_mode = #tpu.pipeline_mode<synchronous>, transform_indices = @transform_16, window_bounds = array<i64: 128, 8>}, {pipeline_mode = #tpu.pipeline_mode<synchronous>, transform_indices = @transform_17, window_bounds = array<i64: 1, 8>}, {pipeline_mode = #tpu.pipeline_mode<synchronous>, transform_indices = @transform_18, window_bounds = array<i64: 8, 128>}, {pipeline_mode = #tpu.pipeline_mode<synchronous>, transform_indices = @transform_19, window_bounds = array<i64: 1, 128>}, {pipeline_mode = #tpu.pipeline_mode<synchronous>, transform_indices = @transform_20, window_bounds = array<i64: 7, 128>}, {pipeline_mode = #tpu.pipeline_mode<synchronous>, transform_indices = @transform_21, window_bounds = array<i64: 128, 128>}, {pipeline_mode = #tpu.pipeline_mode<synchronous>, transform_indices = @transform_22, window_bounds = array<i64: 1, 128>}, {transform_indices = @transform_23, window_bounds = array<i64: 2, 128>}]} {
    %c0 = arith.constant 0 : index
    %c0_0 = arith.constant 0 : index
    %0 = vector.load %arg2[%c0, %c0_0] : memref<48x28xf32, #tpu.memory_space<vmem>>, vector<48x28xf32>
    %c0_1 = arith.constant 0 : index
    %c0_2 = arith.constant 0 : index
    %1 = vector.load %arg3[%c0_1, %c0_2] : memref<28x512xf32, #tpu.memory_space<vmem>>, vector<28x512xf32>
    %cst = arith.constant dense<0.000000e+00> : vector<48x512xf32>
    %2 = tpu.matmul %0, %1, %cst {dimension_numbers = #tpu.dot_dimension_numbers<[1], [0], [0], [1], [0, 0, 1, 1], [], []>} : vector<48x28xf32>, vector<28x512xf32>, vector<48x512xf32> -> vector<48x512xf32>
    %c0_3 = arith.constant 0 : index
    %c0_4 = arith.constant 0 : index
    %3 = vector.load %arg4[%c0_3, %c0_4] : memref<1x512xf32, #tpu.memory_space<vmem>>, vector<1x512xf32>
    %4 = vector.broadcast %3 : vector<1x512xf32> to vector<48x512xf32>
    %5 = arith.mulf %2, %4 : vector<48x512xf32>
    %c0_5 = arith.constant 0 : index
    %c0_6 = arith.constant 0 : index
    %6 = vector.load %arg5[%c0_5, %c0_6] : memref<1x512xf32, #tpu.memory_space<vmem>>, vector<1x512xf32>
    %7 = vector.broadcast %6 : vector<1x512xf32> to vector<48x512xf32>
    %8 = arith.addf %5, %7 : vector<48x512xf32>
    %cst_7 = arith.constant 0.000000e+00 : f32
    %9 = vector.broadcast %cst_7 : f32 to vector<48x512xf32>
    %10 = arith.maximumf %8, %9 : vector<48x512xf32>
    %11 = vector.shape_cast %10 : vector<48x512xf32> to vector<2x24x512xf32>
    %c0_8 = arith.constant 0 : index
    %c0_9 = arith.constant 0 : index
    %12 = vector.load %arg6[%c0_8, %c0_9] : memref<24x512xf32, #tpu.memory_space<vmem>>, vector<24x512xf32>
    %13 = vector.shape_cast %12 : vector<24x512xf32> to vector<1x24x512xf32>
    %14 = vector.broadcast %13 : vector<1x24x512xf32> to vector<2x24x512xf32>
    %15 = arith.mulf %11, %14 : vector<2x24x512xf32>
    %cst_10 = arith.constant 0.000000e+00 : f32
    %16 = vector.broadcast %cst_10 : f32 to vector<48x128xf32>
    %17 = vector.shape_cast %15 : vector<2x24x512xf32> to vector<48x512xf32>
    %18 = arith.truncf %17 : vector<48x512xf32> to vector<48x512xbf16>
    %c0_11 = arith.constant 0 : index
    %c0_12 = arith.constant 0 : index
    %19 = vector.load %arg8[%c0_11, %c0_12] : memref<2048x128xbf16, #tpu.memory_space<vmem>>, vector<512x128xbf16>
    %cst_13 = arith.constant dense<0.000000e+00> : vector<48x128xf32>
    %20 = tpu.matmul %18, %19, %cst_13 {dimension_numbers = #tpu.dot_dimension_numbers<[1], [0], [0], [1], [0, 0, 1, 1], [], []>} : vector<48x512xbf16>, vector<512x128xbf16>, vector<48x128xf32> -> vector<48x128xf32>
    %21 = arith.addf %16, %20 : vector<48x128xf32>
    %22 = vector.extract_strided_slice %15 {offsets = [0, 1, 0], sizes = [2, 23, 512], strides = [1, 1, 1]} : vector<2x24x512xf32> to vector<2x23x512xf32>
    %cst_14 = arith.constant 0.000000e+00 : f32
    %23 = vector.broadcast %cst_14 : f32 to vector<2x1x512xf32>
    %24 = tpu.concatenate %22, %23 in 1 : vector<2x23x512xf32>, vector<2x1x512xf32> -> vector<2x24x512xf32>
    %25 = vector.shape_cast %24 : vector<2x24x512xf32> to vector<48x512xf32>
    %26 = arith.truncf %25 : vector<48x512xf32> to vector<48x512xbf16>
    %c512 = arith.constant 512 : index
    %c0_15 = arith.constant 0 : index
    %27 = vector.load %arg8[%c512, %c0_15] : memref<2048x128xbf16, #tpu.memory_space<vmem>>, vector<512x128xbf16>
    %cst_16 = arith.constant dense<0.000000e+00> : vector<48x128xf32>
    %28 = tpu.matmul %26, %27, %cst_16 {dimension_numbers = #tpu.dot_dimension_numbers<[1], [0], [0], [1], [0, 0, 1, 1], [], []>} : vector<48x512xbf16>, vector<512x128xbf16>, vector<48x128xf32> -> vector<48x128xf32>
    %29 = arith.addf %21, %28 : vector<48x128xf32>
    %30 = vector.extract_strided_slice %15 {offsets = [0, 2, 0], sizes = [2, 22, 512], strides = [1, 1, 1]} : vector<2x24x512xf32> to vector<2x22x512xf32>
    %cst_17 = arith.constant 0.000000e+00 : f32
    %31 = vector.broadcast %cst_17 : f32 to vector<2x2x512xf32>
    %32 = tpu.concatenate %30, %31 in 1 : vector<2x22x512xf32>, vector<2x2x512xf32> -> vector<2x24x512xf32>
    %33 = vector.shape_cast %32 : vector<2x24x512xf32> to vector<48x512xf32>
    %34 = arith.truncf %33 : vector<48x512xf32> to vector<48x512xbf16>
    %c1024 = arith.constant 1024 : index
    %c0_18 = arith.constant 0 : index
    %35 = vector.load %arg8[%c1024, %c0_18] : memref<2048x128xbf16, #tpu.memory_space<vmem>>, vector<512x128xbf16>
    %cst_19 = arith.constant dense<0.000000e+00> : vector<48x128xf32>
    %36 = tpu.matmul %34, %35, %cst_19 {dimension_numbers = #tpu.dot_dimension_numbers<[1], [0], [0], [1], [0, 0, 1, 1], [], []>} : vector<48x512xbf16>, vector<512x128xbf16>, vector<48x128xf32> -> vector<48x128xf32>
    %37 = arith.addf %29, %36 : vector<48x128xf32>
    %38 = vector.extract_strided_slice %15 {offsets = [0, 3, 0], sizes = [2, 21, 512], strides = [1, 1, 1]} : vector<2x24x512xf32> to vector<2x21x512xf32>
    %cst_20 = arith.constant 0.000000e+00 : f32
    %39 = vector.broadcast %cst_20 : f32 to vector<2x3x512xf32>
    %40 = tpu.concatenate %38, %39 in 1 : vector<2x21x512xf32>, vector<2x3x512xf32> -> vector<2x24x512xf32>
    %41 = vector.shape_cast %40 : vector<2x24x512xf32> to vector<48x512xf32>
    %42 = arith.truncf %41 : vector<48x512xf32> to vector<48x512xbf16>
    %c1536 = arith.constant 1536 : index
    %c0_21 = arith.constant 0 : index
    %43 = vector.load %arg8[%c1536, %c0_21] : memref<2048x128xbf16, #tpu.memory_space<vmem>>, vector<512x128xbf16>
    %cst_22 = arith.constant dense<0.000000e+00> : vector<48x128xf32>
    %44 = tpu.matmul %42, %43, %cst_22 {dimension_numbers = #tpu.dot_dimension_numbers<[1], [0], [0], [1], [0, 0, 1, 1], [], []>} : vector<48x512xbf16>, vector<512x128xbf16>, vector<48x128xf32> -> vector<48x128xf32>
    %45 = arith.addf %37, %44 : vector<48x128xf32>
    %c0_23 = arith.constant 0 : index
    %c0_24 = arith.constant 0 : index
    %46 = vector.load %arg9[%c0_23, %c0_24] : memref<1x128xf32, #tpu.memory_space<vmem>>, vector<1x128xf32>
    %47 = vector.broadcast %46 : vector<1x128xf32> to vector<48x128xf32>
    %48 = arith.mulf %45, %47 : vector<48x128xf32>
    %c0_25 = arith.constant 0 : index
    %c0_26 = arith.constant 0 : index
    %49 = vector.load %arg10[%c0_25, %c0_26] : memref<1x128xf32, #tpu.memory_space<vmem>>, vector<1x128xf32>
    %50 = vector.broadcast %49 : vector<1x128xf32> to vector<48x128xf32>
    %51 = arith.addf %48, %50 : vector<48x128xf32>
    %cst_27 = arith.constant 0.000000e+00 : f32
    %52 = vector.broadcast %cst_27 : f32 to vector<48x128xf32>
    %53 = arith.maximumf %51, %52 : vector<48x128xf32>
    %54 = vector.shape_cast %53 : vector<48x128xf32> to vector<2x24x128xf32>
    %c0_28 = arith.constant 0 : index
    %c0_29 = arith.constant 0 : index
    %55 = vector.load %arg7[%c0_28, %c0_29] : memref<24x128xf32, #tpu.memory_space<vmem>>, vector<24x128xf32>
    %56 = vector.shape_cast %55 : vector<24x128xf32> to vector<1x24x128xf32>
    %57 = vector.broadcast %56 : vector<1x24x128xf32> to vector<2x24x128xf32>
    %58 = arith.mulf %54, %57 : vector<2x24x128xf32>
    %cst_30 = arith.constant dense<0.000000e+00> : vector<2x128xf32>
    %59 = vector.multi_reduction <add>, %58, %cst_30 [1] : vector<2x24x128xf32> to vector<2x128xf32>
    %cst_31 = arith.constant 0.000000e+00 : f32
    %60 = vector.broadcast %cst_31 : f32 to vector<2x1x128xf32>
    %61 = vector.extract_strided_slice %58 {offsets = [0, 0, 0], sizes = [2, 23, 128], strides = [1, 1, 1]} : vector<2x24x128xf32> to vector<2x23x128xf32>
    %62 = tpu.concatenate %60, %61 in 1 : vector<2x1x128xf32>, vector<2x23x128xf32> -> vector<2x24x128xf32>
    %63 = vector.extract_strided_slice %58 {offsets = [0, 1, 0], sizes = [2, 23, 128], strides = [1, 1, 1]} : vector<2x24x128xf32> to vector<2x23x128xf32>
    %64 = tpu.concatenate %63, %60 in 1 : vector<2x23x128xf32>, vector<2x1x128xf32> -> vector<2x24x128xf32>
    %cst_32 = arith.constant 0.000000e+00 : f32
    %65 = vector.broadcast %cst_32 : f32 to vector<48x128xf32>
    %66 = vector.shape_cast %62 : vector<2x24x128xf32> to vector<48x128xf32>
    %67 = arith.truncf %66 : vector<48x128xf32> to vector<48x128xbf16>
    %c0_33 = arith.constant 0 : index
    %c0_34 = arith.constant 0 : index
    %68 = vector.load %arg11[%c0_33, %c0_34] : memref<384x128xbf16, #tpu.memory_space<vmem>>, vector<128x128xbf16>
    %cst_35 = arith.constant dense<0.000000e+00> : vector<48x128xf32>
    %69 = tpu.matmul %67, %68, %cst_35 {dimension_numbers = #tpu.dot_dimension_numbers<[1], [0], [0], [1], [0, 0, 1, 1], [], []>} : vector<48x128xbf16>, vector<128x128xbf16>, vector<48x128xf32> -> vector<48x128xf32>
    %70 = arith.addf %65, %69 : vector<48x128xf32>
    %71 = vector.shape_cast %58 : vector<2x24x128xf32> to vector<48x128xf32>
    %72 = arith.truncf %71 : vector<48x128xf32> to vector<48x128xbf16>
    %c128 = arith.constant 128 : index
    %c0_36 = arith.constant 0 : index
    %73 = vector.load %arg11[%c128, %c0_36] : memref<384x128xbf16, #tpu.memory_space<vmem>>, vector<128x128xbf16>
    %cst_37 = arith.constant dense<0.000000e+00> : vector<48x128xf32>
    %74 = tpu.matmul %72, %73, %cst_37 {dimension_numbers = #tpu.dot_dimension_numbers<[1], [0], [0], [1], [0, 0, 1, 1], [], []>} : vector<48x128xbf16>, vector<128x128xbf16>, vector<48x128xf32> -> vector<48x128xf32>
    %75 = arith.addf %70, %74 : vector<48x128xf32>
    %76 = vector.shape_cast %64 : vector<2x24x128xf32> to vector<48x128xf32>
    %77 = arith.truncf %76 : vector<48x128xf32> to vector<48x128xbf16>
    %c256 = arith.constant 256 : index
    %c0_38 = arith.constant 0 : index
    %78 = vector.load %arg11[%c256, %c0_38] : memref<384x128xbf16, #tpu.memory_space<vmem>>, vector<128x128xbf16>
    %cst_39 = arith.constant dense<0.000000e+00> : vector<48x128xf32>
    %79 = tpu.matmul %77, %78, %cst_39 {dimension_numbers = #tpu.dot_dimension_numbers<[1], [0], [0], [1], [0, 0, 1, 1], [], []>} : vector<48x128xbf16>, vector<128x128xbf16>, vector<48x128xf32> -> vector<48x128xf32>
    %80 = arith.addf %75, %79 : vector<48x128xf32>
    %c0_40 = arith.constant 0 : index
    %c0_41 = arith.constant 0 : index
    %81 = vector.load %arg12[%c0_40, %c0_41] : memref<1x128xf32, #tpu.memory_space<vmem>>, vector<1x128xf32>
    %82 = vector.broadcast %81 : vector<1x128xf32> to vector<48x128xf32>
    %83 = arith.mulf %80, %82 : vector<48x128xf32>
    %c0_42 = arith.constant 0 : index
    %c0_43 = arith.constant 0 : index
    %84 = vector.load %arg13[%c0_42, %c0_43] : memref<1x128xf32, #tpu.memory_space<vmem>>, vector<1x128xf32>
    %85 = vector.broadcast %84 : vector<1x128xf32> to vector<48x128xf32>
    %86 = arith.addf %83, %85 : vector<48x128xf32>
    %cst_44 = arith.constant 0.449328959 : f32
    %87 = vector.broadcast %cst_44 : f32 to vector<48x128xf32>
    %88 = arith.addf %86, %87 : vector<48x128xf32>
    %cst_45 = arith.constant 1.000000e+00 : f32
    %89 = vector.broadcast %cst_45 : f32 to vector<48x128xf32>
    %90 = arith.divf %88, %89 : vector<48x128xf32>
    %cst_46 = arith.constant 1.000000e+00 : f32
    %91 = vector.broadcast %cst_46 : f32 to vector<48x128xf32>
    %92 = arith.cmpf oge, %90, %91 : vector<48x128xf32>
    %93 = arith.extui %92 : vector<48x128xi1> to vector<48x128xi32>
    %94 = arith.sitofp %93 : vector<48x128xi32> to vector<48x128xf32>
    %95 = vector.shape_cast %94 : vector<48x128xf32> to vector<2x24x128xf32>
    %c0_47 = arith.constant 0 : index
    %c0_48 = arith.constant 0 : index
    %96 = vector.load %arg7[%c0_47, %c0_48] : memref<24x128xf32, #tpu.memory_space<vmem>>, vector<24x128xf32>
    %97 = vector.shape_cast %96 : vector<24x128xf32> to vector<1x24x128xf32>
    %98 = vector.broadcast %97 : vector<1x24x128xf32> to vector<2x24x128xf32>
    %99 = arith.mulf %95, %98 : vector<2x24x128xf32>
    %100 = vector.extract_strided_slice %99 {offsets = [0, 0, 0], sizes = [2, 23, 128], strides = [1, 1, 1]} : vector<2x24x128xf32> to vector<2x23x128xf32>
    %101 = tpu.concatenate %60, %100 in 1 : vector<2x1x128xf32>, vector<2x23x128xf32> -> vector<2x24x128xf32>
    %102 = vector.extract_strided_slice %99 {offsets = [0, 1, 0], sizes = [2, 23, 128], strides = [1, 1, 1]} : vector<2x24x128xf32> to vector<2x23x128xf32>
    %103 = tpu.concatenate %102, %60 in 1 : vector<2x23x128xf32>, vector<2x1x128xf32> -> vector<2x24x128xf32>
    %cst_49 = arith.constant 0.000000e+00 : f32
    %104 = vector.broadcast %cst_49 : f32 to vector<48x128xf32>
    %105 = vector.shape_cast %101 : vector<2x24x128xf32> to vector<48x128xf32>
    %106 = arith.truncf %105 : vector<48x128xf32> to vector<48x128xbf16>
    %c0_50 = arith.constant 0 : index
    %c0_51 = arith.constant 0 : index
    %107 = vector.load %arg14[%c0_50, %c0_51] : memref<384x128xbf16, #tpu.memory_space<vmem>>, vector<128x128xbf16>
    %cst_52 = arith.constant dense<0.000000e+00> : vector<48x128xf32>
    %108 = tpu.matmul %106, %107, %cst_52 {dimension_numbers = #tpu.dot_dimension_numbers<[1], [0], [0], [1], [0, 0, 1, 1], [], []>} : vector<48x128xbf16>, vector<128x128xbf16>, vector<48x128xf32> -> vector<48x128xf32>
    %109 = arith.addf %104, %108 : vector<48x128xf32>
    %110 = vector.shape_cast %99 : vector<2x24x128xf32> to vector<48x128xf32>
    %111 = arith.truncf %110 : vector<48x128xf32> to vector<48x128xbf16>
    %c128_53 = arith.constant 128 : index
    %c0_54 = arith.constant 0 : index
    %112 = vector.load %arg14[%c128_53, %c0_54] : memref<384x128xbf16, #tpu.memory_space<vmem>>, vector<128x128xbf16>
    %cst_55 = arith.constant dense<0.000000e+00> : vector<48x128xf32>
    %113 = tpu.matmul %111, %112, %cst_55 {dimension_numbers = #tpu.dot_dimension_numbers<[1], [0], [0], [1], [0, 0, 1, 1], [], []>} : vector<48x128xbf16>, vector<128x128xbf16>, vector<48x128xf32> -> vector<48x128xf32>
    %114 = arith.addf %109, %113 : vector<48x128xf32>
    %115 = vector.shape_cast %103 : vector<2x24x128xf32> to vector<48x128xf32>
    %116 = arith.truncf %115 : vector<48x128xf32> to vector<48x128xbf16>
    %c256_56 = arith.constant 256 : index
    %c0_57 = arith.constant 0 : index
    %117 = vector.load %arg14[%c256_56, %c0_57] : memref<384x128xbf16, #tpu.memory_space<vmem>>, vector<128x128xbf16>
    %cst_58 = arith.constant dense<0.000000e+00> : vector<48x128xf32>
    %118 = tpu.matmul %116, %117, %cst_58 {dimension_numbers = #tpu.dot_dimension_numbers<[1], [0], [0], [1], [0, 0, 1, 1], [], []>} : vector<48x128xbf16>, vector<128x128xbf16>, vector<48x128xf32> -> vector<48x128xf32>
    %119 = arith.addf %114, %118 : vector<48x128xf32>
    %c0_59 = arith.constant 0 : index
    %c0_60 = arith.constant 0 : index
    %120 = vector.load %arg15[%c0_59, %c0_60] : memref<1x128xf32, #tpu.memory_space<vmem>>, vector<1x128xf32>
    %121 = vector.broadcast %120 : vector<1x128xf32> to vector<48x128xf32>
    %122 = arith.mulf %119, %121 : vector<48x128xf32>
    %c0_61 = arith.constant 0 : index
    %c0_62 = arith.constant 0 : index
    %123 = vector.load %arg16[%c0_61, %c0_62] : memref<1x128xf32, #tpu.memory_space<vmem>>, vector<1x128xf32>
    %124 = vector.broadcast %123 : vector<1x128xf32> to vector<48x128xf32>
    %125 = arith.addf %122, %124 : vector<48x128xf32>
    %cst_63 = arith.constant 0.449328959 : f32
    %126 = vector.broadcast %cst_63 : f32 to vector<48x128xf32>
    %127 = arith.addf %125, %126 : vector<48x128xf32>
    %cst_64 = arith.constant 1.000000e+00 : f32
    %128 = vector.broadcast %cst_64 : f32 to vector<48x128xf32>
    %129 = arith.divf %127, %128 : vector<48x128xf32>
    %cst_65 = arith.constant 1.000000e+00 : f32
    %130 = vector.broadcast %cst_65 : f32 to vector<48x128xf32>
    %131 = arith.cmpf oge, %129, %130 : vector<48x128xf32>
    %132 = arith.extui %131 : vector<48x128xi1> to vector<48x128xi32>
    %133 = arith.sitofp %132 : vector<48x128xi32> to vector<48x128xf32>
    %134 = vector.shape_cast %133 : vector<48x128xf32> to vector<2x24x128xf32>
    %c0_66 = arith.constant 0 : index
    %c0_67 = arith.constant 0 : index
    %135 = vector.load %arg7[%c0_66, %c0_67] : memref<24x128xf32, #tpu.memory_space<vmem>>, vector<24x128xf32>
    %136 = vector.shape_cast %135 : vector<24x128xf32> to vector<1x24x128xf32>
    %137 = vector.broadcast %136 : vector<1x24x128xf32> to vector<2x24x128xf32>
    %138 = arith.mulf %134, %137 : vector<2x24x128xf32>
    %cst_68 = arith.constant dense<0.000000e+00> : vector<2x128xf32>
    %139 = vector.multi_reduction <add>, %138, %cst_68 [1] : vector<2x24x128xf32> to vector<2x128xf32>
    %cst_69 = arith.constant 0.055555556 : f32
    %140 = vector.broadcast %cst_69 : f32 to vector<2x128xf32>
    %141 = arith.mulf %139, %140 : vector<2x128xf32>
    %142 = arith.truncf %141 : vector<2x128xf32> to vector<2x128xbf16>
    %c0_70 = arith.constant 0 : index
    %c0_71 = arith.constant 0 : index
    %143 = vector.load %arg17[%c0_70, %c0_71] : memref<128x8xbf16, #tpu.memory_space<vmem>>, vector<128x8xbf16>
    %cst_72 = arith.constant dense<0.000000e+00> : vector<2x8xf32>
    %144 = tpu.matmul %142, %143, %cst_72 {dimension_numbers = #tpu.dot_dimension_numbers<[1], [0], [0], [1], [0, 0, 1, 1], [], []>} : vector<2x128xbf16>, vector<128x8xbf16>, vector<2x8xf32> -> vector<2x8xf32>
    %c0_73 = arith.constant 0 : index
    %c0_74 = arith.constant 0 : index
    %145 = vector.load %arg18[%c0_73, %c0_74] : memref<1x8xf32, #tpu.memory_space<vmem>>, vector<1x8xf32>
    %146 = vector.broadcast %145 : vector<1x8xf32> to vector<2x8xf32>
    %147 = arith.addf %144, %146 : vector<2x8xf32>
    %cst_75 = arith.constant 0.000000e+00 : f32
    %148 = vector.broadcast %cst_75 : f32 to vector<2x8xf32>
    %149 = arith.maximumf %147, %148 : vector<2x8xf32>
    %150 = arith.truncf %149 : vector<2x8xf32> to vector<2x8xbf16>
    %c0_76 = arith.constant 0 : index
    %c0_77 = arith.constant 0 : index
    %151 = vector.load %arg19[%c0_76, %c0_77] : memref<8x128xbf16, #tpu.memory_space<vmem>>, vector<8x128xbf16>
    %cst_78 = arith.constant dense<0.000000e+00> : vector<2x128xf32>
    %152 = tpu.matmul %150, %151, %cst_78 {dimension_numbers = #tpu.dot_dimension_numbers<[1], [0], [0], [1], [0, 0, 1, 1], [], []>} : vector<2x8xbf16>, vector<8x128xbf16>, vector<2x128xf32> -> vector<2x128xf32>
    %c0_79 = arith.constant 0 : index
    %c0_80 = arith.constant 0 : index
    %153 = vector.load %arg20[%c0_79, %c0_80] : memref<1x128xf32, #tpu.memory_space<vmem>>, vector<1x128xf32>
    %154 = vector.broadcast %153 : vector<1x128xf32> to vector<2x128xf32>
    %155 = arith.addf %152, %154 : vector<2x128xf32>
    %156 = arith.negf %155 : vector<2x128xf32>
    %157 = math.exp %156 : vector<2x128xf32>
    %cst_81 = arith.constant 1.000000e+00 : f32
    %158 = vector.broadcast %cst_81 : f32 to vector<2x128xf32>
    %159 = arith.addf %158, %157 : vector<2x128xf32>
    %160 = arith.divf %158, %159 : vector<2x128xf32>
    %cst_82 = arith.constant 0.000000e+00 : f32
    %161 = vector.broadcast %cst_82 : f32 to vector<2x24x128xf32>
    %cst_83 = arith.constant 0.000000e+00 : f32
    %162 = vector.broadcast %cst_83 : f32 to vector<2x3x128xf32>
    %163 = vector.extract_strided_slice %138 {offsets = [0, 0, 0], sizes = [2, 21, 128], strides = [1, 1, 1]} : vector<2x24x128xf32> to vector<2x21x128xf32>
    %164 = tpu.concatenate %162, %163 in 1 : vector<2x3x128xf32>, vector<2x21x128xf32> -> vector<2x24x128xf32>
    %c0_84 = arith.constant 0 : index
    %c0_85 = arith.constant 0 : index
    %165 = vector.load %arg21[%c0_84, %c0_85] : memref<7x128xf32, #tpu.memory_space<vmem>>, vector<1x128xf32>
    %166 = vector.shape_cast %165 : vector<1x128xf32> to vector<1x1x128xf32>
    %167 = vector.broadcast %166 : vector<1x1x128xf32> to vector<2x24x128xf32>
    %168 = arith.mulf %164, %167 : vector<2x24x128xf32>
    %169 = arith.addf %161, %168 : vector<2x24x128xf32>
    %cst_86 = arith.constant 0.000000e+00 : f32
    %170 = vector.broadcast %cst_86 : f32 to vector<2x2x128xf32>
    %171 = vector.extract_strided_slice %138 {offsets = [0, 0, 0], sizes = [2, 22, 128], strides = [1, 1, 1]} : vector<2x24x128xf32> to vector<2x22x128xf32>
    %172 = tpu.concatenate %170, %171 in 1 : vector<2x2x128xf32>, vector<2x22x128xf32> -> vector<2x24x128xf32>
    %c1 = arith.constant 1 : index
    %c0_87 = arith.constant 0 : index
    %173 = vector.load %arg21[%c1, %c0_87] : memref<7x128xf32, #tpu.memory_space<vmem>>, vector<1x128xf32>
    %174 = vector.shape_cast %173 : vector<1x128xf32> to vector<1x1x128xf32>
    %175 = vector.broadcast %174 : vector<1x1x128xf32> to vector<2x24x128xf32>
    %176 = arith.mulf %172, %175 : vector<2x24x128xf32>
    %177 = arith.addf %169, %176 : vector<2x24x128xf32>
    %cst_88 = arith.constant 0.000000e+00 : f32
    %178 = vector.broadcast %cst_88 : f32 to vector<2x1x128xf32>
    %179 = vector.extract_strided_slice %138 {offsets = [0, 0, 0], sizes = [2, 23, 128], strides = [1, 1, 1]} : vector<2x24x128xf32> to vector<2x23x128xf32>
    %180 = tpu.concatenate %178, %179 in 1 : vector<2x1x128xf32>, vector<2x23x128xf32> -> vector<2x24x128xf32>
    %c2 = arith.constant 2 : index
    %c0_89 = arith.constant 0 : index
    %181 = vector.load %arg21[%c2, %c0_89] : memref<7x128xf32, #tpu.memory_space<vmem>>, vector<1x128xf32>
    %182 = vector.shape_cast %181 : vector<1x128xf32> to vector<1x1x128xf32>
    %183 = vector.broadcast %182 : vector<1x1x128xf32> to vector<2x24x128xf32>
    %184 = arith.mulf %180, %183 : vector<2x24x128xf32>
    %185 = arith.addf %177, %184 : vector<2x24x128xf32>
    %c3 = arith.constant 3 : index
    %c0_90 = arith.constant 0 : index
    %186 = vector.load %arg21[%c3, %c0_90] : memref<7x128xf32, #tpu.memory_space<vmem>>, vector<1x128xf32>
    %187 = vector.shape_cast %186 : vector<1x128xf32> to vector<1x1x128xf32>
    %188 = vector.broadcast %187 : vector<1x1x128xf32> to vector<2x24x128xf32>
    %189 = arith.mulf %138, %188 : vector<2x24x128xf32>
    %190 = arith.addf %185, %189 : vector<2x24x128xf32>
    %191 = vector.extract_strided_slice %138 {offsets = [0, 1, 0], sizes = [2, 23, 128], strides = [1, 1, 1]} : vector<2x24x128xf32> to vector<2x23x128xf32>
    %cst_91 = arith.constant 0.000000e+00 : f32
    %192 = vector.broadcast %cst_91 : f32 to vector<2x1x128xf32>
    %193 = tpu.concatenate %191, %192 in 1 : vector<2x23x128xf32>, vector<2x1x128xf32> -> vector<2x24x128xf32>
    %c4 = arith.constant 4 : index
    %c0_92 = arith.constant 0 : index
    %194 = vector.load %arg21[%c4, %c0_92] : memref<7x128xf32, #tpu.memory_space<vmem>>, vector<1x128xf32>
    %195 = vector.shape_cast %194 : vector<1x128xf32> to vector<1x1x128xf32>
    %196 = vector.broadcast %195 : vector<1x1x128xf32> to vector<2x24x128xf32>
    %197 = arith.mulf %193, %196 : vector<2x24x128xf32>
    %198 = arith.addf %190, %197 : vector<2x24x128xf32>
    %199 = vector.extract_strided_slice %138 {offsets = [0, 2, 0], sizes = [2, 22, 128], strides = [1, 1, 1]} : vector<2x24x128xf32> to vector<2x22x128xf32>
    %cst_93 = arith.constant 0.000000e+00 : f32
    %200 = vector.broadcast %cst_93 : f32 to vector<2x2x128xf32>
    %201 = tpu.concatenate %199, %200 in 1 : vector<2x22x128xf32>, vector<2x2x128xf32> -> vector<2x24x128xf32>
    %c5 = arith.constant 5 : index
    %c0_94 = arith.constant 0 : index
    %202 = vector.load %arg21[%c5, %c0_94] : memref<7x128xf32, #tpu.memory_space<vmem>>, vector<1x128xf32>
    %203 = vector.shape_cast %202 : vector<1x128xf32> to vector<1x1x128xf32>
    %204 = vector.broadcast %203 : vector<1x1x128xf32> to vector<2x24x128xf32>
    %205 = arith.mulf %201, %204 : vector<2x24x128xf32>
    %206 = arith.addf %198, %205 : vector<2x24x128xf32>
    %207 = vector.extract_strided_slice %138 {offsets = [0, 3, 0], sizes = [2, 21, 128], strides = [1, 1, 1]} : vector<2x24x128xf32> to vector<2x21x128xf32>
    %cst_95 = arith.constant 0.000000e+00 : f32
    %208 = vector.broadcast %cst_95 : f32 to vector<2x3x128xf32>
    %209 = tpu.concatenate %207, %208 in 1 : vector<2x21x128xf32>, vector<2x3x128xf32> -> vector<2x24x128xf32>
    %c6 = arith.constant 6 : index
    %c0_96 = arith.constant 0 : index
    %210 = vector.load %arg21[%c6, %c0_96] : memref<7x128xf32, #tpu.memory_space<vmem>>, vector<1x128xf32>
    %211 = vector.shape_cast %210 : vector<1x128xf32> to vector<1x1x128xf32>
    %212 = vector.broadcast %211 : vector<1x1x128xf32> to vector<2x24x128xf32>
    %213 = arith.mulf %209, %212 : vector<2x24x128xf32>
    %214 = arith.addf %206, %213 : vector<2x24x128xf32>
    %cst_97 = arith.constant dense<0.000000e+00> : vector<2x24xf32>
    %215 = vector.multi_reduction <add>, %214, %cst_97 [2] : vector<2x24x128xf32> to vector<2x24xf32>
    %216 = vector.shape_cast %215 : vector<2x24xf32> to vector<2x24x1xf32>
    %c2_98 = arith.constant 2 : index
    %217 = memref.load %arg1[%c2_98] : memref<3xf32, #tpu.memory_space<smem>>
    %218 = vector.broadcast %217 : f32 to vector<2x24x1xf32>
    %219 = arith.addf %216, %218 : vector<2x24x1xf32>
    %220 = arith.negf %219 : vector<2x24x1xf32>
    %221 = math.exp %220 : vector<2x24x1xf32>
    %cst_99 = arith.constant 1.000000e+00 : f32
    %222 = vector.broadcast %cst_99 : f32 to vector<2x24x1xf32>
    %223 = arith.addf %222, %221 : vector<2x24x1xf32>
    %224 = arith.divf %222, %223 : vector<2x24x1xf32>
    %225 = vector.broadcast %224 : vector<2x24x1xf32> to vector<2x24x128xf32>
    %226 = arith.mulf %138, %225 : vector<2x24x128xf32>
    %cst_100 = arith.constant dense<0.000000e+00> : vector<2x128xf32>
    %227 = vector.multi_reduction <add>, %226, %cst_100 [1] : vector<2x24x128xf32> to vector<2x128xf32>
    %c0_101 = arith.constant 0 : index
    %228 = memref.load %arg1[%c0_101] : memref<3xf32, #tpu.memory_space<smem>>
    %229 = arith.mulf %160, %139 : vector<2x128xf32>
    %230 = vector.broadcast %228 : f32 to vector<2x128xf32>
    %231 = arith.mulf %230, %229 : vector<2x128xf32>
    %c1_102 = arith.constant 1 : index
    %232 = memref.load %arg1[%c1_102] : memref<3xf32, #tpu.memory_space<smem>>
    %233 = vector.broadcast %232 : f32 to vector<2x128xf32>
    %234 = arith.mulf %233, %227 : vector<2x128xf32>
    %235 = arith.addf %231, %234 : vector<2x128xf32>
    %236 = arith.addf %235, %59 : vector<2x128xf32>
    %cst_103 = arith.constant 0.055555556 : f32
    %237 = vector.broadcast %cst_103 : f32 to vector<2x128xf32>
    %238 = arith.mulf %236, %237 : vector<2x128xf32>
    %239 = arith.truncf %238 : vector<2x128xf32> to vector<2x128xbf16>
    %c0_104 = arith.constant 0 : index
    %c0_105 = arith.constant 0 : index
    %240 = vector.load %arg22[%c0_104, %c0_105] : memref<128x128xbf16, #tpu.memory_space<vmem>>, vector<128x128xbf16>
    %cst_106 = arith.constant dense<0.000000e+00> : vector<2x128xf32>
    %241 = tpu.matmul %239, %240, %cst_106 {dimension_numbers = #tpu.dot_dimension_numbers<[1], [0], [0], [1], [0, 0, 1, 1], [], []>} : vector<2x128xbf16>, vector<128x128xbf16>, vector<2x128xf32> -> vector<2x128xf32>
    %c0_107 = arith.constant 0 : index
    %c0_108 = arith.constant 0 : index
    %242 = vector.load %arg23[%c0_107, %c0_108] : memref<1x128xf32, #tpu.memory_space<vmem>>, vector<1x128xf32>
    %243 = vector.broadcast %242 : vector<1x128xf32> to vector<2x128xf32>
    %244 = arith.addf %241, %243 : vector<2x128xf32>
    %c0_109 = arith.constant 0 : index
    %c0_110 = arith.constant 0 : index
    %245 = vector.load %arg24[%c0_109, %c0_110] : memref<2x128xf32, #tpu.memory_space<vmem>>, vector<2x128xf32>
    tpu.vector_store %arg24[%c0_109, %c0_110], %244 {strides = array<i32>} : memref<2x128xf32, #tpu.memory_space<vmem>>, vector<2x128xf32>,
    return
  }
  func.func @transform_0(%arg0: i32) -> i32 {
    %c0_i32 = arith.constant 0 : i32
    %c0_i32_0 = arith.constant 0 : i32
    return %c0_i32 : i32
  }
  func.func @transform_1(%arg0: i32) -> (i32, i32) {
    %c0_i32 = arith.constant 0 : i32
    %c0_i32_0 = arith.constant 0 : i32
    return %arg0, %c0_i32 : i32, i32
  }
  func.func @transform_2(%arg0: i32) -> (i32, i32) {
    %c0_i32 = arith.constant 0 : i32
    %c0_i32_0 = arith.constant 0 : i32
    %c0_i32_1 = arith.constant 0 : i32
    return %c0_i32, %c0_i32_0 : i32, i32
  }
  func.func @transform_3(%arg0: i32) -> (i32, i32) {
    %c0_i32 = arith.constant 0 : i32
    %c0_i32_0 = arith.constant 0 : i32
    %c0_i32_1 = arith.constant 0 : i32
    return %c0_i32, %c0_i32_0 : i32, i32
  }
  func.func @transform_4(%arg0: i32) -> (i32, i32) {
    %c0_i32 = arith.constant 0 : i32
    %c0_i32_0 = arith.constant 0 : i32
    %c0_i32_1 = arith.constant 0 : i32
    return %c0_i32, %c0_i32_0 : i32, i32
  }
  func.func @transform_5(%arg0: i32) -> (i32, i32) {
    %c0_i32 = arith.constant 0 : i32
    %c0_i32_0 = arith.constant 0 : i32
    %c0_i32_1 = arith.constant 0 : i32
    return %c0_i32, %c0_i32_0 : i32, i32
  }
  func.func @transform_6(%arg0: i32) -> (i32, i32) {
    %c0_i32 = arith.constant 0 : i32
    %c0_i32_0 = arith.constant 0 : i32
    %c0_i32_1 = arith.constant 0 : i32
    return %c0_i32, %c0_i32_0 : i32, i32
  }
  func.func @transform_7(%arg0: i32) -> (i32, i32) {
    %c0_i32 = arith.constant 0 : i32
    %c0_i32_0 = arith.constant 0 : i32
    %c0_i32_1 = arith.constant 0 : i32
    return %c0_i32, %c0_i32_0 : i32, i32
  }
  func.func @transform_8(%arg0: i32) -> (i32, i32) {
    %c0_i32 = arith.constant 0 : i32
    %c0_i32_0 = arith.constant 0 : i32
    %c0_i32_1 = arith.constant 0 : i32
    return %c0_i32, %c0_i32_0 : i32, i32
  }
  func.func @transform_9(%arg0: i32) -> (i32, i32) {
    %c0_i32 = arith.constant 0 : i32
    %c0_i32_0 = arith.constant 0 : i32
    %c0_i32_1 = arith.constant 0 : i32
    return %c0_i32, %c0_i32_0 : i32, i32
  }
  func.func @transform_10(%arg0: i32) -> (i32, i32) {
    %c0_i32 = arith.constant 0 : i32
    %c0_i32_0 = arith.constant 0 : i32
    %c0_i32_1 = arith.constant 0 : i32
    return %c0_i32, %c0_i32_0 : i32, i32
  }
  func.func @transform_11(%arg0: i32) -> (i32, i32) {
    %c0_i32 = arith.constant 0 : i32
    %c0_i32_0 = arith.constant 0 : i32
    %c0_i32_1 = arith.constant 0 : i32
    return %c0_i32, %c0_i32_0 : i32, i32
  }
  func.func @transform_12(%arg0: i32) -> (i32, i32) {
    %c0_i32 = arith.constant 0 : i32
    %c0_i32_0 = arith.constant 0 : i32
    %c0_i32_1 = arith.constant 0 : i32
    return %c0_i32, %c0_i32_0 : i32, i32
  }
  func.func @transform_13(%arg0: i32) -> (i32, i32) {
    %c0_i32 = arith.constant 0 : i32
    %c0_i32_0 = arith.constant 0 : i32
    %c0_i32_1 = arith.constant 0 : i32
    return %c0_i32, %c0_i32_0 : i32, i32
  }
  func.func @transform_14(%arg0: i32) -> (i32, i32) {
    %c0_i32 = arith.constant 0 : i32
    %c0_i32_0 = arith.constant 0 : i32
    %c0_i32_1 = arith.constant 0 : i32
    return %c0_i32, %c0_i32_0 : i32, i32
  }
  func.func @transform_15(%arg0: i32) -> (i32, i32) {
    %c0_i32 = arith.constant 0 : i32
    %c0_i32_0 = arith.constant 0 : i32
    %c0_i32_1 = arith.constant 0 : i32
    return %c0_i32, %c0_i32_0 : i32, i32
  }
  func.func @transform_16(%arg0: i32) -> (i32, i32) {
    %c0_i32 = arith.constant 0 : i32
    %c0_i32_0 = arith.constant 0 : i32
    %c0_i32_1 = arith.constant 0 : i32
    return %c0_i32, %c0_i32_0 : i32, i32
  }
  func.func @transform_17(%arg0: i32) -> (i32, i32) {
    %c0_i32 = arith.constant 0 : i32
    %c0_i32_0 = arith.constant 0 : i32
    %c0_i32_1 = arith.constant 0 : i32
    return %c0_i32, %c0_i32_0 : i32, i32
  }
  func.func @transform_18(%arg0: i32) -> (i32, i32) {
    %c0_i32 = arith.constant 0 : i32
    %c0_i32_0 = arith.constant 0 : i32
    %c0_i32_1 = arith.constant 0 : i32
    return %c0_i32, %c0_i32_0 : i32, i32
  }
  func.func @transform_19(%arg0: i32) -> (i32, i32) {
    %c0_i32 = arith.constant 0 : i32
    %c0_i32_0 = arith.constant 0 : i32
    %c0_i32_1 = arith.constant 0 : i32
    return %c0_i32, %c0_i32_0 : i32, i32
  }
  func.func @transform_20(%arg0: i32) -> (i32, i32) {
    %c0_i32 = arith.constant 0 : i32
    %c0_i32_0 = arith.constant 0 : i32
    %c0_i32_1 = arith.constant 0 : i32
    return %c0_i32, %c0_i32_0 : i32, i32
  }
  func.func @transform_21(%arg0: i32) -> (i32, i32) {
    %c0_i32 = arith.constant 0 : i32
    %c0_i32_0 = arith.constant 0 : i32
    %c0_i32_1 = arith.constant 0 : i32
    return %c0_i32, %c0_i32_0 : i32, i32
  }
  func.func @transform_22(%arg0: i32) -> (i32, i32) {
    %c0_i32 = arith.constant 0 : i32
    %c0_i32_0 = arith.constant 0 : i32
    %c0_i32_1 = arith.constant 0 : i32
    return %c0_i32, %c0_i32_0 : i32, i32
  }
  func.func @transform_23(%arg0: i32) -> (i32, i32) {
    %c0_i32 = arith.constant 0 : i32
    %c0_i32_0 = arith.constant 0 : i32
    return %arg0, %c0_i32 : i32, i32
  }
}

</mosaic_0001>

<llo_original>
// kernel: tcsn_forward.1
$region0: #{tcsn_forward.1}
  #allocation0 [shape = 'u32[]', space=smem, size = 0x4, offset = 0x4, fixed_abs, tag = 'smem constant byte address 0x4 - core index']
  #allocation1 [shape = 'u32[144,128]{1,0:T(1,128)}', space=vmem, size = 0x12000, scoped, tag = 'internal scratch']
  %s0 = inlined_call_operand.vmem [shape: f32[3], index: 0, kind: input, shape index: {}]
  %s1 = inlined_call_operand.vmem [shape: f32[48,28], index: 1, kind: input, shape index: {}]
  %s2 = inlined_call_operand.vmem [shape: f32[28,512], index: 2, kind: input, shape index: {}]
  %s3 = inlined_call_operand.vmem [shape: f32[1,512], index: 3, kind: input, shape index: {}]
  %s4 = inlined_call_operand.vmem [shape: f32[1,512], index: 4, kind: input, shape index: {}]
  %s5 = inlined_call_operand.vmem [shape: f32[24,512], index: 5, kind: input, shape index: {}]
  %s6 = inlined_call_operand.vmem [shape: f32[24,128], index: 6, kind: input, shape index: {}]
  %s7 = inlined_call_operand.vmem [shape: bf16[2048,128], index: 7, kind: input, shape index: {}]
  %s8 = inlined_call_operand.vmem [shape: f32[1,128], index: 8, kind: input, shape index: {}]
  %s9 = inlined_call_operand.vmem [shape: f32[1,128], index: 9, kind: input, shape index: {}]
  %s10 = inlined_call_operand.vmem [shape: bf16[384,128], index: 10, kind: input, shape index: {}]
  %s11 = inlined_call_operand.vmem [shape: f32[1,128], index: 11, kind: input, shape index: {}]
  %s12 = inlined_call_operand.vmem [shape: f32[1,128], index: 12, kind: input, shape index: {}]
  %s13 = inlined_call_operand.vmem [shape: bf16[384,128], index: 13, kind: input, shape index: {}]
  %s14 = inlined_call_operand.vmem [shape: f32[1,128], index: 14, kind: input, shape index: {}]
  %s15 = inlined_call_operand.vmem [shape: f32[1,128], index: 15, kind: input, shape index: {}]
  %s16 = inlined_call_operand.vmem [shape: bf16[128,8], index: 16, kind: input, shape index: {}]
  %s17 = inlined_call_operand.vmem [shape: f32[1,8], index: 17, kind: input, shape index: {}]
  %s18 = inlined_call_operand.vmem [shape: bf16[8,128], index: 18, kind: input, shape index: {}]
  %s19 = inlined_call_operand.vmem [shape: f32[1,128], index: 19, kind: input, shape index: {}]
  %s20 = inlined_call_operand.vmem [shape: f32[7,128], index: 20, kind: input, shape index: {}]
  %s21 = inlined_call_operand.vmem [shape: bf16[128,128], index: 21, kind: input, shape index: {}]
  %s22 = inlined_call_operand.vmem [shape: f32[1,128], index: 22, kind: input, shape index: {}]
  %s23 = inlined_call_operand.hbm [shape: f32[2,128], index: 23, kind: output, shape index: {}]
  %s24 = sld [smem:[#allocation0]]
  $region106: #{tcsn_forward.1} parent=0
    _
  %s26 = ssub.s32 1, %s24
  %s27 = scalar_select 0, %s26, %s24
  $region1: #{tcsn_forward.1} parent=0
    #allocation2 [shape = 'u8[512]{0}', space=smem, size = 0x200, scoped, tag = 'input window, operand 0, single buffered']
    #allocation3 [shape = 's32[1]{0}', space=sflag, size = 0x4, scoped, tag = 'scoped memory for tcsn_forward.1']
    #allocation4 [shape = 's32[1]{0}', space=sflag, size = 0x4, scoped, tag = 'scoped memory for tcsn_forward.1']
    #allocation5 [shape = 'u8[1024]{0}', space=vmem, size = 0x400, scoped, tag = 'output window, operand 0, single buffered']
    %28 = vsyncpa [#allocation4], 0
    %29 = vsyncpa [#allocation3], 0
    // Predicated region
    $region2: #{tcsn_forward.1} parent=1 // pred_check
      _
    $region3: #{tcsn_forward.1} parent=1 // pred_check_branch
      %31 = sbr.rel (0) target = $region5
    $region4: #{tcsn_forward.1} parent=1 // pred_region
      %s33 = ssub.s32 16, 16
      %34 = vsyncadd [#allocation4], %s33
      %s36 = sshll.u32 %s0, 4
      %s37 = int_to_ptr.vmem [resolvable:$true] %s36
      %39 = dma.vmem_to_smem %s37, 16, [#allocation2], [#allocation4]
    $region5: #{tcsn_forward.1} parent=1 // pred_fallthru
      _
    // Predicated region
    $region6: #{tcsn_forward.1} parent=1 // pred_check
      _
    $region7: #{tcsn_forward.1} parent=1 // pred_check_branch
      %41 = sbr.rel (0) target = $region9
    $region8: #{tcsn_forward.1} parent=1 // pred_region
      _
    $region9: #{tcsn_forward.1} parent=1 // pred_fallthru
      _
    // Predicated region
    $region10: #{tcsn_forward.1} parent=1 // pred_check
      _
    $region11: #{tcsn_forward.1} parent=1 // pred_check_branch
      %43 = sbr.rel (0) target = $region13
    $region12: #{tcsn_forward.1} parent=1 // pred_region
      _
    $region13: #{tcsn_forward.1} parent=1 // pred_fallthru
      _
    // Predicated region
    $region14: #{tcsn_forward.1} parent=1 // pred_check
      _
    $region15: #{tcsn_forward.1} parent=1 // pred_check_branch
      %45 = sbr.rel (0) target = $region17
    $region16: #{tcsn_forward.1} parent=1 // pred_region
      _
    $region17: #{tcsn_forward.1} parent=1 // pred_fallthru
      _
    // Predicated region
    $region18: #{tcsn_forward.1} parent=1 // pred_check
      _
    $region19: #{tcsn_forward.1} parent=1 // pred_check_branch
      %47 = sbr.rel (0) target = $region21
    $region20: #{tcsn_forward.1} parent=1 // pred_region
      _
    $region21: #{tcsn_forward.1} parent=1 // pred_fallthru
      _
    // Predicated region
    $region22: #{tcsn_forward.1} parent=1 // pred_check
      _
    $region23: #{tcsn_forward.1} parent=1 // pred_check_branch
      %49 = sbr.rel (0) target = $region25
    $region24: #{tcsn_forward.1} parent=1 // pred_region
      _
    $region25: #{tcsn_forward.1} parent=1 // pred_fallthru
      _
    // Predicated region
    $region26: #{tcsn_forward.1} parent=1 // pred_check
      _
    $region27: #{tcsn_forward.1} parent=1 // pred_check_branch
      %51 = sbr.rel (0) target = $region29
    $region28: #{tcsn_forward.1} parent=1 // pred_region
      _
    $region29: #{tcsn_forward.1} parent=1 // pred_fallthru
      _
    // Predicated region
    $region30: #{tcsn_forward.1} parent=1 // pred_check
      _
    $region31: #{tcsn_forward.1} parent=1 // pred_check_branch
      %53 = sbr.rel (0) target = $region33
    $region32: #{tcsn_forward.1} parent=1 // pred_region
      _
    $region33: #{tcsn_forward.1} parent=1 // pred_fallthru
      _
    // Predicated region
    $region34: #{tcsn_forward.1} parent=1 // pred_check
      _
    $region35: #{tcsn_forward.1} parent=1 // pred_check_branch
      %55 = sbr.rel (0) target = $region37
    $region36: #{tcsn_forward.1} parent=1 // pred_region
      _
    $region37: #{tcsn_forward.1} parent=1 // pred_fallthru
      _
    // Predicated region
    $region38: #{tcsn_forward.1} parent=1 // pred_check
      _
    $region39: #{tcsn_forward.1} parent=1 // pred_check_branch
      %57 = sbr.rel (0) target = $region41
    $region40: #{tcsn_forward.1} parent=1 // pred_region
      _
    $region41: #{tcsn_forward.1} parent=1 // pred_fallthru
      _
    // Predicated region
    $region42: #{tcsn_forward.1} parent=1 // pred_check
      _
    $region43: #{tcsn_forward.1} parent=1 // pred_check_branch
      %59 = sbr.rel (0) target = $region45
    $region44: #{tcsn_forward.1} parent=1 // pred_region
      _
    $region45: #{tcsn_forward.1} parent=1 // pred_fallthru
      _
    // Predicated region
    $region46: #{tcsn_forward.1} parent=1 // pred_check
      _
    $region47: #{tcsn_forward.1} parent=1 // pred_check_branch
      %61 = sbr.rel (0) target = $region49
    $region48: #{tcsn_forward.1} parent=1 // pred_region
      _
    $region49: #{tcsn_forward.1} parent=1 // pred_fallthru
      _
    // Predicated region
    $region50: #{tcsn_forward.1} parent=1 // pred_check
      _
    $region51: #{tcsn_forward.1} parent=1 // pred_check_branch
      %63 = sbr.rel (0) target = $region53
    $region52: #{tcsn_forward.1} parent=1 // pred_region
      _
    $region53: #{tcsn_forward.1} parent=1 // pred_fallthru
      _
    // Predicated region
    $region54: #{tcsn_forward.1} parent=1 // pred_check
      _
    $region55: #{tcsn_forward.1} parent=1 // pred_check_branch
      %65 = sbr.rel (0) target = $region57
    $region56: #{tcsn_forward.1} parent=1 // pred_region
      _
    $region57: #{tcsn_forward.1} parent=1 // pred_fallthru
      _
    // Predicated region
    $region58: #{tcsn_forward.1} parent=1 // pred_check
      _
    $region59: #{tcsn_forward.1} parent=1 // pred_check_branch
      %67 = sbr.rel (0) target = $region61
    $region60: #{tcsn_forward.1} parent=1 // pred_region
      _
    $region61: #{tcsn_forward.1} parent=1 // pred_fallthru
      _
    // Predicated region
    $region62: #{tcsn_forward.1} parent=1 // pred_check
      _
    $region63: #{tcsn_forward.1} parent=1 // pred_check_branch
      %69 = sbr.rel (0) target = $region65
    $region64: #{tcsn_forward.1} parent=1 // pred_region
      _
    $region65: #{tcsn_forward.1} parent=1 // pred_fallthru
      _
    // Predicated region
    $region66: #{tcsn_forward.1} parent=1 // pred_check
      _
    $region67: #{tcsn_forward.1} parent=1 // pred_check_branch
      %71 = sbr.rel (0) target = $region69
    $region68: #{tcsn_forward.1} parent=1 // pred_region
      _
    $region69: #{tcsn_forward.1} parent=1 // pred_fallthru
      _
    // Predicated region
    $region70: #{tcsn_forward.1} parent=1 // pred_check
      _
    $region71: #{tcsn_forward.1} parent=1 // pred_check_branch
      %73 = sbr.rel (0) target = $region73
    $region72: #{tcsn_forward.1} parent=1 // pred_region
      _
    $region73: #{tcsn_forward.1} parent=1 // pred_fallthru
      _
    // Predicated region
    $region74: #{tcsn_forward.1} parent=1 // pred_check
      _
    $region75: #{tcsn_forward.1} parent=1 // pred_check_branch
      %75 = sbr.rel (0) target = $region77
    $region76: #{tcsn_forward.1} parent=1 // pred_region
      _
    $region77: #{tcsn_forward.1} parent=1 // pred_fallthru
      _
    // Predicated region
    $region78: #{tcsn_forward.1} parent=1 // pred_check
      _
    $region79: #{tcsn_forward.1} parent=1 // pred_check_branch
      %77 = sbr.rel (0) target = $region81
    $region80: #{tcsn_forward.1} parent=1 // pred_region
      _
    $region81: #{tcsn_forward.1} parent=1 // pred_fallthru
      _
    // Predicated region
    $region82: #{tcsn_forward.1} parent=1 // pred_check
      _
    $region83: #{tcsn_forward.1} parent=1 // pred_check_branch
      %79 = sbr.rel (0) target = $region85
    $region84: #{tcsn_forward.1} parent=1 // pred_region
      _
    $region85: #{tcsn_forward.1} parent=1 // pred_fallthru
      _
    // Predicated region
    $region86: #{tcsn_forward.1} parent=1 // pred_check
      _
    $region87: #{tcsn_forward.1} parent=1 // pred_check_branch
      %81 = sbr.rel (0) target = $region89
    $region88: #{tcsn_forward.1} parent=1 // pred_region
      _
    $region89: #{tcsn_forward.1} parent=1 // pred_fallthru
      _
    // Predicated region
    $region90: #{tcsn_forward.1} parent=1 // pred_check
      _
    $region91: #{tcsn_forward.1} parent=1 // pred_check_branch
      %83 = sbr.rel (0) target = $region93
    $region92: #{tcsn_forward.1} parent=1 // pred_region
      _
    $region93: #{tcsn_forward.1} parent=1 // pred_fallthru
      _
    // Predicated region
    $region94: #{tcsn_forward.1} parent=1 // pred_check
      _
    $region95: #{tcsn_forward.1} parent=1 // pred_check_branch
      %85 = sbr.rel (0) target = $region97
    $region96: #{tcsn_forward.1} parent=1 // pred_region
      %86 = dma.done [#allocation4], 16
    $region97: #{tcsn_forward.1} parent=1 // pred_fallthru
      _
    %87 = sfence
    %v89 = vld [vmem:[%s1] sm:$0xff]
    %v90 = vld [vmem:[%s1 + $0x8] sm:$0xff]
    %v91 = vld [vmem:[%s1 + $0x10] sm:$0xff]
    %v92 = vld [vmem:[%s1 + $0x18] sm:$0xff]
    %v93 = vld [vmem:[%s1 + $0x20] sm:$0xff]
    %v94 = vld [vmem:[%s1 + $0x28] sm:$0xff]
    %v95 = vld [vmem:[%s2] sm:$0xff]
    %v96 = vld [vmem:[%s2 + $0x8] sm:$0xff]
    %v97 = vld [vmem:[%s2 + $0x10] sm:$0xff]
    %v98 = vld [vmem:[%s2 + $0x18] sm:$0xff]
    %v99 = vld [vmem:[%s2 + $0x20] sm:$0xff]
    %v100 = vld [vmem:[%s2 + $0x28] sm:$0xff]
    %v101 = vld [vmem:[%s2 + $0x30] sm:$0xff]
    %v102 = vld [vmem:[%s2 + $0x38] sm:$0xff]
    %v103 = vld [vmem:[%s2 + $0x40] sm:$0xff]
    %v104 = vld [vmem:[%s2 + $0x48] sm:$0xff]
    %v105 = vld [vmem:[%s2 + $0x50] sm:$0xff]
    %v106 = vld [vmem:[%s2 + $0x58] sm:$0xff]
    %v107 = vld [vmem:[%s2 + $0x60] sm:$0xf]
    %v108 = vld [vmem:[%s2 + $0x68] sm:$0xf]
    %v109 = vld [vmem:[%s2 + $0x70] sm:$0xf]
    %v110 = vld [vmem:[%s2 + $0x78] sm:$0xf]
    %vm111 = vcmask 228352
    %v113 = vsel %vm111, %v89, 0
    %v116 = vsel %vm111, %v90, 0
    %v119 = vsel %vm111, %v91, 0
    %v122 = vsel %vm111, %v92, 0
    %v125 = vsel %vm111, %v93, 0
    %v128 = vsel %vm111, %v94, 0
    %vm130 = vcmask 1043456
    %v132 = vsel %vm130, %v107, 0
    %v135 = vsel %vm130, %v108, 0
    %v138 = vsel %vm130, %v109, 0
    %v141 = vsel %vm130, %v110, 0
    %143 = vmatprep.subr.mxu0 %v96
    %144 = vmatpush1.msra.mxu0 %v95
    %145 = vmatprep.subr.mxu0 %v100
    %146 = vmatpush1.msra.mxu0 %v99
    %147 = vmatprep.subr.mxu0 %v104
    %148 = vmatpush1.msra.mxu0 %v103
    %149 = vmatprep.subr.mxu0 %v135
    %150 = vmatpush1.msra.mxu0 %v132
    %151 = vmatprep.subr.mxu0 0.0
    %152 = vmatpush1.msra.mxu0 0.0
    %153 = vmatprep.subr.mxu0 0.0
    %154 = vmatpush1.msra.mxu0 0.0
    %155 = vmatprep.subr.mxu0 0.0
    %156 = vmatpush1.msra.mxu0 0.0
    %157 = vmatprep.subr.mxu0 0.0
    %158 = vmatpush1.msra.mxu0 0.0
    %159 = vmatprep.subr.mxu0 0.0
    %160 = vmatpush1.msra.mxu0 0.0
    %161 = vmatprep.subr.mxu0 0.0
    %162 = vmatpush1.msra.mxu0 0.0
    %163 = vmatprep.subr.mxu0 0.0
    %164 = vmatpush1.msra.mxu0 0.0
    %165 = vmatprep.subr.mxu0 0.0
    %166 = vmatpush1.msra.mxu0 0.0
    %167 = vmatprep.subr.mxu0 0.0
    %168 = vmatpush1.msra.mxu0 0.0
    %169 = vmatprep.subr.mxu0 0.0
    %170 = vmatpush1.msra.mxu0 0.0
    %171 = vmatprep.subr.mxu0 0.0
    %172 = vmatpush1.msra.mxu0 0.0
    %173 = vmatprep.subr.mxu0 0.0
    %174 = vmatpush1.msra.mxu0 0.0
    %175 = vmatprep.subr.mxu0 0.0
    %176 = vmatpush1.msra.mxu0 0.0
    %177 = vmatprep.subr.mxu0 0.0
    %178 = vmatpush1.msra.mxu0 0.0
    %179 = vmatprep.subr.mxu0 0.0
    %180 = vmatpush1.msra.mxu0 0.0
    %181 = vmatprep.subr.mxu0 0.0
    %182 = vmatpush1.msra.mxu0 0.0
    %183 = vmatprep.subr.mxu0 0.0
    %184 = vmatpush1.msra.mxu0 0.0
    %185 = vmatprep.subr.mxu0 0.0
    %186 = vmatpush1.msra.mxu0 0.0
    %187 = vmatprep.subr.mxu0 0.0
    %188 = vmatpush1.msra.mxu0 0.0
    %189 = vmatprep.subr.mxu0 0.0
    %190 = vmatpush1.msra.mxu0 0.0
    %191 = vmatprep.subr.mxu0 0.0
    %192 = vmatpush1.msra.mxu0 0.0
    %193 = vmatprep.subr.mxu0 0.0
    %194 = vmatpush1.msra.mxu0 0.0
    %195 = vmatprep.subr.mxu0 0.0
    %196 = vmatpush1.msra.mxu0 0.0
    %197 = vmatprep.subr.mxu0 0.0
    %198 = vmatpush1.msra.mxu0 0.0
    %199 = vmatprep.subr.mxu0 0.0
    %200 = vmatpush1.msra.mxu0 0.0
    %201 = vmatprep.subr.mxu0 0.0
    %202 = vmatpush1.msra.mxu0 0.0
    %203 = vmatprep.subr.mxu0 0.0
    %204 = vmatpush1.msra.mxu0 0.0
    %205 = vmatprep.subr.mxu0 0.0
    %206 = vmatpush1.msra.mxu0 0.0
    %207 = vmatprep.mubr.f32.mxu0 0.0
    %208 = vmatmul.mubr.f32.gmra.mrb[0].mxu0 %v113
    %v209 = vpop.f32.mrb[0].mxu0
    %v210 = vadd.f32 0.0, %v209
    %v211 = vpop.f32.mrb[0].mxu0
    %v212 = vadd.f32 0.0, %v211
    %213 = vmatprep.mubr.f32.mxu0 0.0
    %214 = vmatmul.mubr.f32.gmra.mrb[0].mxu0 %v116
    %v215 = vpop.f32.mrb[0].mxu0
    %v216 = vadd.f32 0.0, %v215
    %v217 = vpop.f32.mrb[0].mxu0
    %v218 = vadd.f32 0.0, %v217
    %219 = vmatprep.mubr.f32.mxu0 0.0
    %220 = vmatmul.mubr.f32.gmra.mrb[0].mxu0 %v119
    %v221 = vpop.f32.mrb[0].mxu0
    %v222 = vadd.f32 0.0, %v221
    %v223 = vpop.f32.mrb[0].mxu0
    %v224 = vadd.f32 0.0, %v223
    %225 = vmatprep.mubr.f32.mxu0 0.0
    %226 = vmatmul.mubr.f32.gmra.mrb[0].mxu0 %v122
    %v227 = vpop.f32.mrb[0].mxu0
    %v228 = vadd.f32 0.0, %v227
    %v229 = vpop.f32.mrb[0].mxu0
    %v230 = vadd.f32 0.0, %v229
    %231 = vmatprep.mubr.f32.mxu0 0.0
    %232 = vmatmul.mubr.f32.gmra.mrb[0].mxu0 %v125
    %v233 = vpop.f32.mrb[0].mxu0
    %v234 = vadd.f32 0.0, %v233
    %v235 = vpop.f32.mrb[0].mxu0
    %v236 = vadd.f32 0.0, %v235
    %237 = vmatprep.mubr.f32.mxu0 0.0
    %238 = vmatmul.mubr.f32.gmra.mrb[0].mxu0 %v128
    %v239 = vpop.f32.mrb[0].mxu0
    %v240 = vadd.f32 0.0, %v239
    %v241 = vpop.f32.mrb[0].mxu0
    %v242 = vadd.f32 0.0, %v241
    %243 = vdwg.mxu0
    %244 = vmatprep.subr.mxu0 %v98
    %245 = vmatpush1.msra.mxu0 %v97
    %246 = vmatprep.subr.mxu0 %v102
    %247 = vmatpush1.msra.mxu0 %v101
    %248 = vmatprep.subr.mxu0 %v106
    %249 = vmatpush1.msra.mxu0 %v105
    %250 = vmatprep.subr.mxu0 %v141
    %251 = vmatpush1.msra.mxu0 %v138
    %252 = vmatprep.subr.mxu0 0.0
    %253 = vmatpush1.msra.mxu0 0.0
    %254 = vmatprep.subr.mxu0 0.0
    %255 = vmatpush1.msra.mxu0 0.0
    %256 = vmatprep.subr.mxu0 0.0
    %257 = vmatpush1.msra.mxu0 0.0
    %258 = vmatprep.subr.mxu0 0.0
    %259 = vmatpush1.msra.mxu0 0.0
    %260 = vmatprep.subr.mxu0 0.0
    %261 = vmatpush1.msra.mxu0 0.0
    %262 = vmatprep.subr.mxu0 0.0
    %263 = vmatpush1.msra.mxu0 0.0
    %264 = vmatprep.subr.mxu0 0.0
    %265 = vmatpush1.msra.mxu0 0.0
    %266 = vmatprep.subr.mxu0 0.0
    %267 = vmatpush1.msra.mxu0 0.0
    %268 = vmatprep.subr.mxu0 0.0
    %269 = vmatpush1.msra.mxu0 0.0
    %270 = vmatprep.subr.mxu0 0.0
    %271 = vmatpush1.msra.mxu0 0.0
    %272 = vmatprep.subr.mxu0 0.0
    %273 = vmatpush1.msra.mxu0 0.0
    %274 = vmatprep.subr.mxu0 0.0
    %275 = vmatpush1.msra.mxu0 0.0
    %276 = vmatprep.subr.mxu0 0.0
    %277 = vmatpush1.msra.mxu0 0.0
    %278 = vmatprep.subr.mxu0 0.0
    %279 = vmatpush1.msra.mxu0 0.0
    %280 = vmatprep.subr.mxu0 0.0
    %281 = vmatpush1.msra.mxu0 0.0
    %282 = vmatprep.subr.mxu0 0.0
    %283 = vmatpush1.msra.mxu0 0.0
    %284 = vmatprep.subr.mxu0 0.0
    %285 = vmatpush1.msra.mxu0 0.0
    %286 = vmatprep.subr.mxu0 0.0
    %287 = vmatpush1.msra.mxu0 0.0
    %288 = vmatprep.subr.mxu0 0.0
    %289 = vmatpush1.msra.mxu0 0.0
    %290 = vmatprep.subr.mxu0 0.0
    %291 = vmatpush1.msra.mxu0 0.0
    %292 = vmatprep.subr.mxu0 0.0
    %293 = vmatpush1.msra.mxu0 0.0
    %294 = vmatprep.subr.mxu0 0.0
    %295 = vmatpush1.msra.mxu0 0.0
    %296 = vmatprep.subr.mxu0 0.0
    %297 = vmatpush1.msra.mxu0 0.0
    %298 = vmatprep.subr.mxu0 0.0
    %299 = vmatpush1.msra.mxu0 0.0
    %300 = vmatprep.subr.mxu0 0.0
    %301 = vmatpush1.msra.mxu0 0.0
    %302 = vmatprep.subr.mxu0 0.0
    %303 = vmatpush1.msra.mxu0 0.0
    %304 = vmatprep.subr.mxu0 0.0
    %305 = vmatpush1.msra.mxu0 0.0
    %306 = vmatprep.subr.mxu0 0.0
    %307 = vmatpush1.msra.mxu0 0.0
    %308 = vmatprep.mubr.f32.mxu0 0.0
    %309 = vmatmul.mubr.f32.gmra.mrb[0].mxu0 %v113
    %v310 = vpop.f32.mrb[0].mxu0
    %v311 = vadd.f32 0.0, %v310
    %v312 = vpop.f32.mrb[0].mxu0
    %v313 = vadd.f32 0.0, %v312
    %314 = vmatprep.mubr.f32.mxu0 0.0
    %315 = vmatmul.mubr.f32.gmra.mrb[0].mxu0 %v116
    %v316 = vpop.f32.mrb[0].mxu0
    %v317 = vadd.f32 0.0, %v316
    %v318 = vpop.f32.mrb[0].mxu0
    %v319 = vadd.f32 0.0, %v318
    %320 = vmatprep.mubr.f32.mxu0 0.0
    %321 = vmatmul.mubr.f32.gmra.mrb[0].mxu0 %v119
    %v322 = vpop.f32.mrb[0].mxu0
    %v323 = vadd.f32 0.0, %v322
    %v324 = vpop.f32.mrb[0].mxu0
    %v325 = vadd.f32 0.0, %v324
    %326 = vmatprep.mubr.f32.mxu0 0.0
    %327 = vmatmul.mubr.f32.gmra.mrb[0].mxu0 %v122
    %v328 = vpop.f32.mrb[0].mxu0
    %v329 = vadd.f32 0.0, %v328
    %v330 = vpop.f32.mrb[0].mxu0
    %v331 = vadd.f32 0.0, %v330
    %332 = vmatprep.mubr.f32.mxu0 0.0
    %333 = vmatmul.mubr.f32.gmra.mrb[0].mxu0 %v125
    %v334 = vpop.f32.mrb[0].mxu0
    %v335 = vadd.f32 0.0, %v334
    %v336 = vpop.f32.mrb[0].mxu0
    %v337 = vadd.f32 0.0, %v336
    %338 = vmatprep.mubr.f32.mxu0 0.0
    %339 = vmatmul.mubr.f32.gmra.mrb[0].mxu0 %v128
    %v340 = vpop.f32.mrb[0].mxu0
    %v341 = vadd.f32 0.0, %v340
    %v342 = vpop.f32.mrb[0].mxu0
    %v343 = vadd.f32 0.0, %v342
    %344 = vdwg.mxu0
    %v345 = vld [vmem:[%s3] sm:$0xf]
    %v347 = vlaneseq
    %v348 = vshrl.u32 %v347, 7
    %v349 = vsub.s32 0, %v348
    %v350 = vrot.slane %v345, %v349
    %v351 = vlaneseq
    %v352 = vshrl.u32 %v351, 7
    %v353 = vsub.s32 1, %v352
    %v354 = vrot.slane %v345, %v353
    %v355 = vlaneseq
    %v356 = vshrl.u32 %v355, 7
    %v357 = vsub.s32 2, %v356
    %v358 = vrot.slane %v345, %v357
    %v359 = vlaneseq
    %v360 = vshrl.u32 %v359, 7
    %v361 = vsub.s32 3, %v360
    %v362 = vrot.slane %v345, %v361
    %v367 = vmul.f32 %v210, %v350
    %v368 = vmul.f32 %v212, %v354
    %v369 = vmul.f32 %v311, %v358
    %v370 = vmul.f32 %v313, %v362
    %v371 = vmul.f32 %v216, %v350
    %v372 = vmul.f32 %v218, %v354
    %v373 = vmul.f32 %v317, %v358
    %v374 = vmul.f32 %v319, %v362
    %v375 = vmul.f32 %v222, %v350
    %v376 = vmul.f32 %v224, %v354
    %v377 = vmul.f32 %v323, %v358
    %v378 = vmul.f32 %v325, %v362
    %v379 = vmul.f32 %v228, %v350
    %v380 = vmul.f32 %v230, %v354
    %v381 = vmul.f32 %v329, %v358
    %v382 = vmul.f32 %v331, %v362
    %v383 = vmul.f32 %v234, %v350
    %v384 = vmul.f32 %v236, %v354
    %v385 = vmul.f32 %v335, %v358
    %v386 = vmul.f32 %v337, %v362
    %v387 = vmul.f32 %v240, %v350
    %v388 = vmul.f32 %v242, %v354
    %v389 = vmul.f32 %v341, %v358
    %v390 = vmul.f32 %v343, %v362
    %v391 = vld [vmem:[%s4] sm:$0xf]
    %v393 = vlaneseq
    %v394 = vshrl.u32 %v393, 7
    %v395 = vsub.s32 0, %v394
    %v396 = vrot.slane %v391, %v395
    %v397 = vlaneseq
    %v398 = vshrl.u32 %v397, 7
    %v399 = vsub.s32 1, %v398
    %v400 = vrot.slane %v391, %v399
    %v401 = vlaneseq
    %v402 = vshrl.u32 %v401, 7
    %v403 = vsub.s32 2, %v402
    %v404 = vrot.slane %v391, %v403
    %v405 = vlaneseq
    %v406 = vshrl.u32 %v405, 7
    %v407 = vsub.s32 3, %v406
    %v408 = vrot.slane %v391, %v407
    %v413 = vadd.f32 %v367, %v396
    %v414 = vadd.f32 %v368, %v400
    %v415 = vadd.f32 %v369, %v404
    %v416 = vadd.f32 %v370, %v408
    %v417 = vadd.f32 %v371, %v396
    %v418 = vadd.f32 %v372, %v400
    %v419 = vadd.f32 %v373, %v404
    %v420 = vadd.f32 %v374, %v408
    %v421 = vadd.f32 %v375, %v396
    %v422 = vadd.f32 %v376, %v400
    %v423 = vadd.f32 %v377, %v404
    %v424 = vadd.f32 %v378, %v408
    %v425 = vadd.f32 %v379, %v396
    %v426 = vadd.f32 %v380, %v400
    %v427 = vadd.f32 %v381, %v404
    %v428 = vadd.f32 %v382, %v408
    %v429 = vadd.f32 %v383, %v396
    %v430 = vadd.f32 %v384, %v400
    %v431 = vadd.f32 %v385, %v404
    %v432 = vadd.f32 %v386, %v408
    %v433 = vadd.f32 %v387, %v396
    %v434 = vadd.f32 %v388, %v400
    %v435 = vadd.f32 %v389, %v404
    %v436 = vadd.f32 %v390, %v408
    %v437 = vmax.f32 %v413, 0.0
    %v438 = vmax.f32 %v414, 0.0
    %v439 = vmax.f32 %v415, 0.0
    %v440 = vmax.f32 %v416, 0.0
    %v441 = vmax.f32 %v417, 0.0
    %v442 = vmax.f32 %v418, 0.0
    %v443 = vmax.f32 %v419, 0.0
    %v444 = vmax.f32 %v420, 0.0
    %v445 = vmax.f32 %v421, 0.0
    %v446 = vmax.f32 %v422, 0.0
    %v447 = vmax.f32 %v423, 0.0
    %v448 = vmax.f32 %v424, 0.0
    %v449 = vmax.f32 %v425, 0.0
    %v450 = vmax.f32 %v426, 0.0
    %v451 = vmax.f32 %v427, 0.0
    %v452 = vmax.f32 %v428, 0.0
    %v453 = vmax.f32 %v429, 0.0
    %v454 = vmax.f32 %v430, 0.0
    %v455 = vmax.f32 %v431, 0.0
    %v456 = vmax.f32 %v432, 0.0
    %v457 = vmax.f32 %v433, 0.0
    %v458 = vmax.f32 %v434, 0.0
    %v459 = vmax.f32 %v435, 0.0
    %v460 = vmax.f32 %v436, 0.0
    %v461 = vld [vmem:[%s5] sm:$0xff]
    %v462 = vld [vmem:[%s5 + $0x8] sm:$0xff]
    %v463 = vld [vmem:[%s5 + $0x10] sm:$0xff]
    %v464 = vld [vmem:[%s5 + $0x18] sm:$0xff]
    %v465 = vld [vmem:[%s5 + $0x20] sm:$0xff]
    %v466 = vld [vmem:[%s5 + $0x28] sm:$0xff]
    %v467 = vld [vmem:[%s5 + $0x30] sm:$0xff]
    %v468 = vld [vmem:[%s5 + $0x38] sm:$0xff]
    %v469 = vld [vmem:[%s5 + $0x40] sm:$0xff]
    %v470 = vld [vmem:[%s5 + $0x48] sm:$0xff]
    %v471 = vld [vmem:[%s5 + $0x50] sm:$0xff]
    %v472 = vld [vmem:[%s5 + $0x58] sm:$0xff]
    %v473 = vmul.f32 %v437, %v461
    %v474 = vmul.f32 %v438, %v462
    %v475 = vmul.f32 %v439, %v463
    %v476 = vmul.f32 %v440, %v464
    %v477 = vmul.f32 %v441, %v465
    %v478 = vmul.f32 %v442, %v466
    %v479 = vmul.f32 %v443, %v467
    %v480 = vmul.f32 %v444, %v468
    %v481 = vmul.f32 %v445, %v469
    %v482 = vmul.f32 %v446, %v470
    %v483 = vmul.f32 %v447, %v471
    %v484 = vmul.f32 %v448, %v472
    %v485 = vmul.f32 %v449, %v461
    %v486 = vmul.f32 %v450, %v462
    %v487 = vmul.f32 %v451, %v463
    %v488 = vmul.f32 %v452, %v464
    %v489 = vmul.f32 %v453, %v465
    %v490 = vmul.f32 %v454, %v466
    %v491 = vmul.f32 %v455, %v467
    %v492 = vmul.f32 %v456, %v468
    %v493 = vmul.f32 %v457, %v469
    %v494 = vmul.f32 %v458, %v470
    %v495 = vmul.f32 %v459, %v471
    %v496 = vmul.f32 %v460, %v472
    %v497 = vpack.c.bf16 %v477, %v473
    %v498 = vpack.c.bf16 %v478, %v474
    %v499 = vpack.c.bf16 %v479, %v475
    %v500 = vpack.c.bf16 %v480, %v476
    %v501 = vpack.c.bf16 %v485, %v481
    %v502 = vpack.c.bf16 %v486, %v482
    %v503 = vpack.c.bf16 %v487, %v483
    %v504 = vpack.c.bf16 %v488, %v484
    %v505 = vpack.c.bf16 %v493, %v489
    %v506 = vpack.c.bf16 %v494, %v490
    %v507 = vpack.c.bf16 %v495, %v491
    %v508 = vpack.c.bf16 %v496, %v492
    %v509 = vld [vmem:[%s7] sm:$0xf]
    %v510 = vld [vmem:[%s7 + $0x4] sm:$0xf]
    %v511 = vld [vmem:[%s7 + $0x8] sm:$0xf]
    %v512 = vld [vmem:[%s7 + $0xc] sm:$0xf]
    %v513 = vld [vmem:[%s7 + $0x10] sm:$0xf]
    %v514 = vld [vmem:[%s7 + $0x14] sm:$0xf]
    %v515 = vld [vmem:[%s7 + $0x18] sm:$0xf]
    %v516 = vld [vmem:[%s7 + $0x1c] sm:$0xf]
    %v517 = vld [vmem:[%s7 + $0x20] sm:$0xf]
    %v518 = vld [vmem:[%s7 + $0x24] sm:$0xf]
    %v519 = vld [vmem:[%s7 + $0x28] sm:$0xf]
    %v520 = vld [vmem:[%s7 + $0x2c] sm:$0xf]
    %v521 = vld [vmem:[%s7 + $0x30] sm:$0xf]
    %v522 = vld [vmem:[%s7 + $0x34] sm:$0xf]
    %v523 = vld [vmem:[%s7 + $0x38] sm:$0xf]
    %v524 = vld [vmem:[%s7 + $0x3c] sm:$0xf]
    %v525 = vld [vmem:[%s7 + $0x40] sm:$0xf]
    %v526 = vld [vmem:[%s7 + $0x44] sm:$0xf]
    %v527 = vld [vmem:[%s7 + $0x48] sm:$0xf]
    %v528 = vld [vmem:[%s7 + $0x4c] sm:$0xf]
    %v529 = vld [vmem:[%s7 + $0x50] sm:$0xf]
    %v530 = vld [vmem:[%s7 + $0x54] sm:$0xf]
    %v531 = vld [vmem:[%s7 + $0x58] sm:$0xf]
    %v532 = vld [vmem:[%s7 + $0x5c] sm:$0xf]
    %v533 = vld [vmem:[%s7 + $0x60] sm:$0xf]
    %v534 = vld [vmem:[%s7 + $0x64] sm:$0xf]
    %v535 = vld [vmem:[%s7 + $0x68] sm:$0xf]
    %v536 = vld [vmem:[%s7 + $0x6c] sm:$0xf]
    %v537 = vld [vmem:[%s7 + $0x70] sm:$0xf]
    %v538 = vld [vmem:[%s7 + $0x74] sm:$0xf]
    %v539 = vld [vmem:[%s7 + $0x78] sm:$0xf]
    %v540 = vld [vmem:[%s7 + $0x7c] sm:$0xf]
    %v541 = vld [vmem:[%s7 + $0x80] sm:$0xf]
    %v542 = vld [vmem:[%s7 + $0x84] sm:$0xf]
    %v543 = vld [vmem:[%s7 + $0x88] sm:$0xf]
    %v544 = vld [vmem:[%s7 + $0x8c] sm:$0xf]
    %v545 = vld [vmem:[%s7 + $0x90] sm:$0xf]
    %v546 = vld [vmem:[%s7 + $0x94] sm:$0xf]
    %v547 = vld [vmem:[%s7 + $0x98] sm:$0xf]
    %v548 = vld [vmem:[%s7 + $0x9c] sm:$0xf]
    %v549 = vld [vmem:[%s7 + $0xa0] sm:$0xf]
    %v550 = vld [vmem:[%s7 + $0xa4] sm:$0xf]
    %v551 = vld [vmem:[%s7 + $0xa8] sm:$0xf]
    %v552 = vld [vmem:[%s7 + $0xac] sm:$0xf]
    %v553 = vld [vmem:[%s7 + $0xb0] sm:$0xf]
    %v554 = vld [vmem:[%s7 + $0xb4] sm:$0xf]
    %v555 = vld [vmem:[%s7 + $0xb8] sm:$0xf]
    %v556 = vld [vmem:[%s7 + $0xbc] sm:$0xf]
    %v557 = vld [vmem:[%s7 + $0xc0] sm:$0xf]
    %v558 = vld [vmem:[%s7 + $0xc4] sm:$0xf]
    %v559 = vld [vmem:[%s7 + $0xc8] sm:$0xf]
    %v560 = vld [vmem:[%s7 + $0xcc] sm:$0xf]
    %v561 = vld [vmem:[%s7 + $0xd0] sm:$0xf]
    %v562 = vld [vmem:[%s7 + $0xd4] sm:$0xf]
    %v563 = vld [vmem:[%s7 + $0xd8] sm:$0xf]
    %v564 = vld [vmem:[%s7 + $0xdc] sm:$0xf]
    %v565 = vld [vmem:[%s7 + $0xe0] sm:$0xf]
    %v566 = vld [vmem:[%s7 + $0xe4] sm:$0xf]
    %v567 = vld [vmem:[%s7 + $0xe8] sm:$0xf]
    %v568 = vld [vmem:[%s7 + $0xec] sm:$0xf]
    %v569 = vld [vmem:[%s7 + $0xf0] sm:$0xf]
    %v570 = vld [vmem:[%s7 + $0xf4] sm:$0xf]
    %v571 = vld [vmem:[%s7 + $0xf8] sm:$0xf]
    %v572 = vld [vmem:[%s7 + $0xfc] sm:$0xf]
    %vm597 = vcmask 1046528
    %v598 = vrot.slane %v473, 1
    %v599 = vrot.slane %v477, 1
    %v600 = vsel %vm597, %v598, %v599
    %v601 = vrot.slane %v474, 1
    %v602 = vrot.slane %v478, 1
    %v603 = vsel %vm597, %v601, %v602
    %v604 = vrot.slane %v475, 1
    %v605 = vrot.slane %v479, 1
    %v606 = vsel %vm597, %v604, %v605
    %v607 = vrot.slane %v476, 1
    %v608 = vrot.slane %v480, 1
    %v609 = vsel %vm597, %v607, %v608
    %v610 = vrot.slane %v481, 1
    %v611 = vsel %vm597, %v599, %v610
    %v612 = vrot.slane %v482, 1
    %v613 = vsel %vm597, %v602, %v612
    %v614 = vrot.slane %v483, 1
    %v615 = vsel %vm597, %v605, %v614
    %v616 = vrot.slane %v484, 1
    %v617 = vsel %vm597, %v608, %v616
    %v618 = vrot.slane %v485, 1
    %v619 = vrot.slane %v489, 1
    %v620 = vsel %vm597, %v618, %v619
    %v621 = vrot.slane %v486, 1
    %v622 = vrot.slane %v490, 1
    %v623 = vsel %vm597, %v621, %v622
    %v624 = vrot.slane %v487, 1
    %v625 = vrot.slane %v491, 1
    %v626 = vsel %vm597, %v624, %v625
    %v627 = vrot.slane %v488, 1
    %v628 = vrot.slane %v492, 1
    %v629 = vsel %vm597, %v627, %v628
    %v630 = vrot.slane %v493, 1
    %v631 = vsel %vm597, %v619, %v630
    %v632 = vrot.slane %v494, 1
    %v633 = vsel %vm597, %v622, %v632
    %v634 = vrot.slane %v495, 1
    %v635 = vsel %vm597, %v625, %v634
    %v636 = vrot.slane %v496, 1
    %v637 = vsel %vm597, %v628, %v636
    %v662 = vsel %vm597, %v610, 0.0
    %v663 = vsel %vm597, %v612, 0.0
    %v664 = vsel %vm597, %v614, 0.0
    %v665 = vsel %vm597, %v616, 0.0
    %v666 = vsel %vm597, %v630, 0.0
    %v667 = vsel %vm597, %v632, 0.0
    %v668 = vsel %vm597, %v634, 0.0
    %v669 = vsel %vm597, %v636, 0.0
    %v670 = vpack.c.bf16 %v611, %v600
    %v671 = vpack.c.bf16 %v613, %v603
    %v672 = vpack.c.bf16 %v615, %v606
    %v673 = vpack.c.bf16 %v617, %v609
    %v674 = vpack.c.bf16 %v620, %v662
    %v675 = vpack.c.bf16 %v623, %v663
    %v676 = vpack.c.bf16 %v626, %v664
    %v677 = vpack.c.bf16 %v629, %v665
    %v678 = vpack.c.bf16 %v666, %v631
    %v679 = vpack.c.bf16 %v667, %v633
    %v680 = vpack.c.bf16 %v668, %v635
    %v681 = vpack.c.bf16 %v669, %v637
    %v682 = vld [vmem:[%s7 + $0x100] sm:$0xf]
    %v683 = vld [vmem:[%s7 + $0x104] sm:$0xf]
    %v684 = vld [vmem:[%s7 + $0x108] sm:$0xf]
    %v685 = vld [vmem:[%s7 + $0x10c] sm:$0xf]
    %v686 = vld [vmem:[%s7 + $0x110] sm:$0xf]
    %v687 = vld [vmem:[%s7 + $0x114] sm:$0xf]
    %v688 = vld [vmem:[%s7 + $0x118] sm:$0xf]
    %v689 = vld [vmem:[%s7 + $0x11c] sm:$0xf]
    %v690 = vld [vmem:[%s7 + $0x120] sm:$0xf]
    %v691 = vld [vmem:[%s7 + $0x124] sm:$0xf]
    %v692 = vld [vmem:[%s7 + $0x128] sm:$0xf]
    %v693 = vld [vmem:[%s7 + $0x12c] sm:$0xf]
    %v694 = vld [vmem:[%s7 + $0x130] sm:$0xf]
    %v695 = vld [vmem:[%s7 + $0x134] sm:$0xf]
    %v696 = vld [vmem:[%s7 + $0x138] sm:$0xf]
    %v697 = vld [vmem:[%s7 + $0x13c] sm:$0xf]
    %v698 = vld [vmem:[%s7 + $0x140] sm:$0xf]
    %v699 = vld [vmem:[%s7 + $0x144] sm:$0xf]
    %v700 = vld [vmem:[%s7 + $0x148] sm:$0xf]
    %v701 = vld [vmem:[%s7 + $0x14c] sm:$0xf]
    %v702 = vld [vmem:[%s7 + $0x150] sm:$0xf]
    %v703 = vld [vmem:[%s7 + $0x154] sm:$0xf]
    %v704 = vld [vmem:[%s7 + $0x158] sm:$0xf]
    %v705 = vld [vmem:[%s7 + $0x15c] sm:$0xf]
    %v706 = vld [vmem:[%s7 + $0x160] sm:$0xf]
    %v707 = vld [vmem:[%s7 + $0x164] sm:$0xf]
    %v708 = vld [vmem:[%s7 + $0x168] sm:$0xf]
    %v709 = vld [vmem:[%s7 + $0x16c] sm:$0xf]
    %v710 = vld [vmem:[%s7 + $0x170] sm:$0xf]
    %v711 = vld [vmem:[%s7 + $0x174] sm:$0xf]
    %v712 = vld [vmem:[%s7 + $0x178] sm:$0xf]
    %v713 = vld [vmem:[%s7 + $0x17c] sm:$0xf]
    %v714 = vld [vmem:[%s7 + $0x180] sm:$0xf]
    %v715 = vld [vmem:[%s7 + $0x184] sm:$0xf]
    %v716 = vld [vmem:[%s7 + $0x188] sm:$0xf]
    %v717 = vld [vmem:[%s7 + $0x18c] sm:$0xf]
    %v718 = vld [vmem:[%s7 + $0x190] sm:$0xf]
    %v719 = vld [vmem:[%s7 + $0x194] sm:$0xf]
    %v720 = vld [vmem:[%s7 + $0x198] sm:$0xf]
    %v721 = vld [vmem:[%s7 + $0x19c] sm:$0xf]
    %v722 = vld [vmem:[%s7 + $0x1a0] sm:$0xf]
    %v723 = vld [vmem:[%s7 + $0x1a4] sm:$0xf]
    %v724 = vld [vmem:[%s7 + $0x1a8] sm:$0xf]
    %v725 = vld [vmem:[%s7 + $0x1ac] sm:$0xf]
    %v726 = vld [vmem:[%s7 + $0x1b0] sm:$0xf]
    %v727 = vld [vmem:[%s7 + $0x1b4] sm:$0xf]
    %v728 = vld [vmem:[%s7 + $0x1b8] sm:$0xf]
    %v729 = vld [vmem:[%s7 + $0x1bc] sm:$0xf]
    %v730 = vld [vmem:[%s7 + $0x1c0] sm:$0xf]
    %v731 = vld [vmem:[%s7 + $0x1c4] sm:$0xf]
    %v732 = vld [vmem:[%s7 + $0x1c8] sm:$0xf]
    %v733 = vld [vmem:[%s7 + $0x1cc] sm:$0xf]
    %v734 = vld [vmem:[%s7 + $0x1d0] sm:$0xf]
    %v735 = vld [vmem:[%s7 + $0x1d4] sm:$0xf]
    %v736 = vld [vmem:[%s7 + $0x1d8] sm:$0xf]
    %v737 = vld [vmem:[%s7 + $0x1dc] sm:$0xf]
    %v738 = vld [vmem:[%s7 + $0x1e0] sm:$0xf]
    %v739 = vld [vmem:[%s7 + $0x1e4] sm:$0xf]
    %v740 = vld [vmem:[%s7 + $0x1e8] sm:$0xf]
    %v741 = vld [vmem:[%s7 + $0x1ec] sm:$0xf]
    %v742 = vld [vmem:[%s7 + $0x1f0] sm:$0xf]
    %v743 = vld [vmem:[%s7 + $0x1f4] sm:$0xf]
    %v744 = vld [vmem:[%s7 + $0x1f8] sm:$0xf]
    %v745 = vld [vmem:[%s7 + $0x1fc] sm:$0xf]
    %v810 = vunpack.c.l.b16 %v682
    %v811 = vunpack.c.l.b16 %v683
    %v812 = vunpack.c.l.b16 %v684
    %v813 = vunpack.c.l.b16 %v685
    %v814 = vunpack.c.l.b16 %v686
    %v815 = vunpack.c.l.b16 %v687
    %v816 = vunpack.c.l.b16 %v688
    %v817 = vunpack.c.l.b16 %v689
    %v818 = vunpack.c.l.b16 %v690
    %v819 = vunpack.c.l.b16 %v691
    %v820 = vunpack.c.l.b16 %v692
    %v821 = vunpack.c.l.b16 %v693
    %v822 = vunpack.c.l.b16 %v694
    %v823 = vunpack.c.l.b16 %v695
    %v824 = vunpack.c.l.b16 %v696
    %v825 = vunpack.c.l.b16 %v697
    %v826 = vunpack.c.l.b16 %v698
    %v827 = vunpack.c.l.b16 %v699
    %v828 = vunpack.c.l.b16 %v700
    %v829 = vunpack.c.l.b16 %v701
    %v830 = vunpack.c.l.b16 %v702
    %v831 = vunpack.c.l.b16 %v703
    %v832 = vunpack.c.l.b16 %v704
    %v833 = vunpack.c.l.b16 %v705
    %v834 = vunpack.c.l.b16 %v706
    %v835 = vunpack.c.l.b16 %v707
    %v836 = vunpack.c.l.b16 %v708
    %v837 = vunpack.c.l.b16 %v709
    %v838 = vunpack.c.l.b16 %v710
    %v839 = vunpack.c.l.b16 %v711
    %v840 = vunpack.c.l.b16 %v712
    %v841 = vunpack.c.l.b16 %v713
    %v842 = vunpack.c.l.b16 %v714
    %v843 = vunpack.c.l.b16 %v715
    %v844 = vunpack.c.l.b16 %v716
    %v845 = vunpack.c.l.b16 %v717
    %v846 = vunpack.c.l.b16 %v718
    %v847 = vunpack.c.l.b16 %v719
    %v848 = vunpack.c.l.b16 %v720
    %v849 = vunpack.c.l.b16 %v721
    %v850 = vunpack.c.l.b16 %v722
    %v851 = vunpack.c.l.b16 %v723
    %v852 = vunpack.c.l.b16 %v724
    %v853 = vunpack.c.l.b16 %v725
    %v854 = vunpack.c.l.b16 %v726
    %v855 = vunpack.c.l.b16 %v727
    %v856 = vunpack.c.l.b16 %v728
    %v857 = vunpack.c.l.b16 %v729
    %v858 = vunpack.c.l.b16 %v730
    %v859 = vunpack.c.l.b16 %v731
    %v860 = vunpack.c.l.b16 %v732
    %v861 = vunpack.c.l.b16 %v733
    %v862 = vunpack.c.l.b16 %v734
    %v863 = vunpack.c.l.b16 %v735
    %v864 = vunpack.c.l.b16 %v736
    %v865 = vunpack.c.l.b16 %v737
    %v866 = vunpack.c.l.b16 %v738
    %v867 = vunpack.c.l.b16 %v739
    %v868 = vunpack.c.l.b16 %v740
    %v869 = vunpack.c.l.b16 %v741
    %v870 = vunpack.c.l.b16 %v742
    %v871 = vunpack.c.l.b16 %v743
    %v872 = vunpack.c.l.b16 %v744
    %v873 = vunpack.c.l.b16 %v745
    %v874 = vpack.c.b16 %v811, %v810
    %v875 = vpack.c.b16 %v813, %v812
    %v876 = vpack.c.b16 %v815, %v814
    %v877 = vpack.c.b16 %v817, %v816
    %v878 = vpack.c.b16 %v819, %v818
    %v879 = vpack.c.b16 %v821, %v820
    %v880 = vpack.c.b16 %v823, %v822
    %v881 = vpack.c.b16 %v825, %v824
    %v882 = vpack.c.b16 %v827, %v826
    %v883 = vpack.c.b16 %v829, %v828
    %v884 = vpack.c.b16 %v831, %v830
    %v885 = vpack.c.b16 %v833, %v832
    %v886 = vpack.c.b16 %v835, %v834
    %v887 = vpack.c.b16 %v837, %v836
    %v888 = vpack.c.b16 %v839, %v838
    %v889 = vpack.c.b16 %v841, %v840
    %v890 = vpack.c.b16 %v843, %v842
    %v891 = vpack.c.b16 %v845, %v844
    %v892 = vpack.c.b16 %v847, %v846
    %v893 = vpack.c.b16 %v849, %v848
    %v894 = vpack.c.b16 %v851, %v850
    %v895 = vpack.c.b16 %v853, %v852
    %v896 = vpack.c.b16 %v855, %v854
    %v897 = vpack.c.b16 %v857, %v856
    %v898 = vpack.c.b16 %v859, %v858
    %v899 = vpack.c.b16 %v861, %v860
    %v900 = vpack.c.b16 %v863, %v862
    %v901 = vpack.c.b16 %v865, %v864
    %v902 = vpack.c.b16 %v867, %v866
    %v903 = vpack.c.b16 %v869, %v868
    %v904 = vpack.c.b16 %v871, %v870
    %v905 = vpack.c.b16 %v873, %v872
    %938 = vmatprep.subr.bf16.mxu0 0
    %939 = vmatpush1.bf16.msra.mxu0 %v874
    %940 = vmatprep.subr.bf16.mxu0 0
    %941 = vmatpush1.bf16.msra.mxu0 %v875
    %942 = vmatprep.subr.bf16.mxu0 0
    %943 = vmatpush1.bf16.msra.mxu0 %v876
    %944 = vmatprep.subr.bf16.mxu0 0
    %945 = vmatpush1.bf16.msra.mxu0 %v877
    %946 = vmatprep.subr.bf16.mxu0 0
    %947 = vmatpush1.bf16.msra.mxu0 %v878
    %948 = vmatprep.subr.bf16.mxu0 0
    %949 = vmatpush1.bf16.msra.mxu0 %v879
    %950 = vmatprep.subr.bf16.mxu0 0
    %951 = vmatpush1.bf16.msra.mxu0 %v880
    %952 = vmatprep.subr.bf16.mxu0 0
    %953 = vmatpush1.bf16.msra.mxu0 %v881
    %954 = vmatprep.subr.bf16.mxu0 0
    %955 = vmatpush1.bf16.msra.mxu0 %v882
    %956 = vmatprep.subr.bf16.mxu0 0
    %957 = vmatpush1.bf16.msra.mxu0 %v883
    %958 = vmatprep.subr.bf16.mxu0 0
    %959 = vmatpush1.bf16.msra.mxu0 %v884
    %960 = vmatprep.subr.bf16.mxu0 0
    %961 = vmatpush1.bf16.msra.mxu0 %v885
    %962 = vmatprep.subr.bf16.mxu0 0
    %963 = vmatpush1.bf16.msra.mxu0 %v886
    %964 = vmatprep.subr.bf16.mxu0 0
    %965 = vmatpush1.bf16.msra.mxu0 %v887
    %966 = vmatprep.subr.bf16.mxu0 0
    %967 = vmatpush1.bf16.msra.mxu0 %v888
    %968 = vmatprep.subr.bf16.mxu0 0
    %969 = vmatpush1.bf16.msra.mxu0 %v889
    %970 = vmatprep.mubr.bf16.mxu0 %v671
    %971 = vmatmul.mubr.bf16.gmra.mrb[0].mxu0 %v670
    %v972 = vpop.f32.mrb[0].mxu0
    %v973 = vadd.f32 0.0, %v972
    %v974 = vpop.f32.mrb[0].mxu0
    %v975 = vpop.f32.mrb[0].mxu0
    %v976 = vadd.f32 0.0, %v975
    %v977 = vpop.f32.mrb[0].mxu0
    %978 = vmatprep.mubr.bf16.mxu0 %v675
    %979 = vmatmul.mubr.bf16.gmra.mrb[0].mxu0 %v674
    %v980 = vpop.f32.mrb[0].mxu0
    %v981 = vadd.f32 0.0, %v980
    %v982 = vpop.f32.mrb[0].mxu0
    %v983 = vpop.f32.mrb[0].mxu0
    %v984 = vadd.f32 0.0, %v983
    %v985 = vpop.f32.mrb[0].mxu0
    %986 = vmatprep.mubr.bf16.mxu0 %v679
    %987 = vmatmul.mubr.bf16.gmra.mrb[0].mxu0 %v678
    %v988 = vpop.f32.mrb[0].mxu0
    %v989 = vadd.f32 0.0, %v988
    %v990 = vpop.f32.mrb[0].mxu0
    %v991 = vpop.f32.mrb[0].mxu0
    %v992 = vadd.f32 0.0, %v991
    %v993 = vpop.f32.mrb[0].mxu0
    %994 = vdwg.mxu0
    %995 = vmatprep.subr.bf16.mxu0 0
    %996 = vmatpush1.bf16.msra.mxu0 %v890
    %997 = vmatprep.subr.bf16.mxu0 0
    %998 = vmatpush1.bf16.msra.mxu0 %v891
    %999 = vmatprep.subr.bf16.mxu0 0
    %1000 = vmatpush1.bf16.msra.mxu0 %v892
    %1001 = vmatprep.subr.bf16.mxu0 0
    %1002 = vmatpush1.bf16.msra.mxu0 %v893
    %1003 = vmatprep.subr.bf16.mxu0 0
    %1004 = vmatpush1.bf16.msra.mxu0 %v894
    %1005 = vmatprep.subr.bf16.mxu0 0
    %1006 = vmatpush1.bf16.msra.mxu0 %v895
    %1007 = vmatprep.subr.bf16.mxu0 0
    %1008 = vmatpush1.bf16.msra.mxu0 %v896
    %1009 = vmatprep.subr.bf16.mxu0 0
    %1010 = vmatpush1.bf16.msra.mxu0 %v897
    %1011 = vmatprep.subr.bf16.mxu0 0
    %1012 = vmatpush1.bf16.msra.mxu0 %v898
    %1013 = vmatprep.subr.bf16.mxu0 0
    %1014 = vmatpush1.bf16.msra.mxu0 %v899
    %1015 = vmatprep.subr.bf16.mxu0 0
    %1016 = vmatpush1.bf16.msra.mxu0 %v900
    %1017 = vmatprep.subr.bf16.mxu0 0
    %1018 = vmatpush1.bf16.msra.mxu0 %v901
    %1019 = vmatprep.subr.bf16.mxu0 0
    %1020 = vmatpush1.bf16.msra.mxu0 %v902
    %1021 = vmatprep.subr.bf16.mxu0 0
    %1022 = vmatpush1.bf16.msra.mxu0 %v903
    %1023 = vmatprep.subr.bf16.mxu0 0
    %1024 = vmatpush1.bf16.msra.mxu0 %v904
    %1025 = vmatprep.subr.bf16.mxu0 0
    %1026 = vmatpush1.bf16.msra.mxu0 %v905
    %1027 = vmatprep.mubr.bf16.mxu0 %v673
    %1028 = vmatmul.mubr.bf16.gmra.mrb[0].mxu0 %v672
    %v1029 = vpop.f32.mrb[0].mxu0
    %v1030 = vadd.f32 %v973, %v1029
    %v1031 = vpop.f32.mrb[0].mxu0
    %v1032 = vpop.f32.mrb[0].mxu0
    %v1033 = vadd.f32 %v976, %v1032
    %v1034 = vpop.f32.mrb[0].mxu0
    %1035 = vmatprep.mubr.bf16.mxu0 %v677
    %1036 = vmatmul.mubr.bf16.gmra.mrb[0].mxu0 %v676
    %v1037 = vpop.f32.mrb[0].mxu0
    %v1038 = vadd.f32 %v981, %v1037
    %v1039 = vpop.f32.mrb[0].mxu0
    %v1040 = vpop.f32.mrb[0].mxu0
    %v1041 = vadd.f32 %v984, %v1040
    %v1042 = vpop.f32.mrb[0].mxu0
    %1043 = vmatprep.mubr.bf16.mxu0 %v681
    %1044 = vmatmul.mubr.bf16.gmra.mrb[0].mxu0 %v680
    %v1045 = vpop.f32.mrb[0].mxu0
    %v1046 = vadd.f32 %v989, %v1045
    %v1047 = vpop.f32.mrb[0].mxu0
    %v1048 = vpop.f32.mrb[0].mxu0
    %v1049 = vadd.f32 %v992, %v1048
    %v1050 = vpop.f32.mrb[0].mxu0
    %1051 = vdwg.mxu0
    %v1116 = vunpack.c.l.b16 %v509
    %v1117 = vunpack.c.l.b16 %v510
    %v1118 = vunpack.c.l.b16 %v511
    %v1119 = vunpack.c.l.b16 %v512
    %v1120 = vunpack.c.l.b16 %v513
    %v1121 = vunpack.c.l.b16 %v514
    %v1122 = vunpack.c.l.b16 %v515
    %v1123 = vunpack.c.l.b16 %v516
    %v1124 = vunpack.c.l.b16 %v517
    %v1125 = vunpack.c.l.b16 %v518
    %v1126 = vunpack.c.l.b16 %v519
    %v1127 = vunpack.c.l.b16 %v520
    %v1128 = vunpack.c.l.b16 %v521
    %v1129 = vunpack.c.l.b16 %v522
    %v1130 = vunpack.c.l.b16 %v523
    %v1131 = vunpack.c.l.b16 %v524
    %v1132 = vunpack.c.l.b16 %v525
    %v1133 = vunpack.c.l.b16 %v526
    %v1134 = vunpack.c.l.b16 %v527
    %v1135 = vunpack.c.l.b16 %v528
    %v1136 = vunpack.c.l.b16 %v529
    %v1137 = vunpack.c.l.b16 %v530
    %v1138 = vunpack.c.l.b16 %v531
    %v1139 = vunpack.c.l.b16 %v532
    %v1140 = vunpack.c.l.b16 %v533
    %v1141 = vunpack.c.l.b16 %v534
    %v1142 = vunpack.c.l.b16 %v535
    %v1143 = vunpack.c.l.b16 %v536
    %v1144 = vunpack.c.l.b16 %v537
    %v1145 = vunpack.c.l.b16 %v538
    %v1146 = vunpack.c.l.b16 %v539
    %v1147 = vunpack.c.l.b16 %v540
    %v1148 = vunpack.c.l.b16 %v541
    %v1149 = vunpack.c.l.b16 %v542
    %v1150 = vunpack.c.l.b16 %v543
    %v1151 = vunpack.c.l.b16 %v544
    %v1152 = vunpack.c.l.b16 %v545
    %v1153 = vunpack.c.l.b16 %v546
    %v1154 = vunpack.c.l.b16 %v547
    %v1155 = vunpack.c.l.b16 %v548
    %v1156 = vunpack.c.l.b16 %v549
    %v1157 = vunpack.c.l.b16 %v550
    %v1158 = vunpack.c.l.b16 %v551
    %v1159 = vunpack.c.l.b16 %v552
    %v1160 = vunpack.c.l.b16 %v553
    %v1161 = vunpack.c.l.b16 %v554
    %v1162 = vunpack.c.l.b16 %v555
    %v1163 = vunpack.c.l.b16 %v556
    %v1164 = vunpack.c.l.b16 %v557
    %v1165 = vunpack.c.l.b16 %v558
    %v1166 = vunpack.c.l.b16 %v559
    %v1167 = vunpack.c.l.b16 %v560
    %v1168 = vunpack.c.l.b16 %v561
    %v1169 = vunpack.c.l.b16 %v562
    %v1170 = vunpack.c.l.b16 %v563
    %v1171 = vunpack.c.l.b16 %v564
    %v1172 = vunpack.c.l.b16 %v565
    %v1173 = vunpack.c.l.b16 %v566
    %v1174 = vunpack.c.l.b16 %v567
    %v1175 = vunpack.c.l.b16 %v568
    %v1176 = vunpack.c.l.b16 %v569
    %v1177 = vunpack.c.l.b16 %v570
    %v1178 = vunpack.c.l.b16 %v571
    %v1179 = vunpack.c.l.b16 %v572
    %v1180 = vpack.c.b16 %v1117, %v1116
    %v1181 = vpack.c.b16 %v1119, %v1118
    %v1182 = vpack.c.b16 %v1121, %v1120
    %v1183 = vpack.c.b16 %v1123, %v1122
    %v1184 = vpack.c.b16 %v1125, %v1124
    %v1185 = vpack.c.b16 %v1127, %v1126
    %v1186 = vpack.c.b16 %v1129, %v1128
    %v1187 = vpack.c.b16 %v1131, %v1130
    %v1188 = vpack.c.b16 %v1133, %v1132
    %v1189 = vpack.c.b16 %v1135, %v1134
    %v1190 = vpack.c.b16 %v1137, %v1136
    %v1191 = vpack.c.b16 %v1139, %v1138
    %v1192 = vpack.c.b16 %v1141, %v1140
    %v1193 = vpack.c.b16 %v1143, %v1142
    %v1194 = vpack.c.b16 %v1145, %v1144
    %v1195 = vpack.c.b16 %v1147, %v1146
    %v1196 = vpack.c.b16 %v1149, %v1148
    %v1197 = vpack.c.b16 %v1151, %v1150
    %v1198 = vpack.c.b16 %v1153, %v1152
    %v1199 = vpack.c.b16 %v1155, %v1154
    %v1200 = vpack.c.b16 %v1157, %v1156
    %v1201 = vpack.c.b16 %v1159, %v1158
    %v1202 = vpack.c.b16 %v1161, %v1160
    %v1203 = vpack.c.b16 %v1163, %v1162
    %v1204 = vpack.c.b16 %v1165, %v1164
    %v1205 = vpack.c.b16 %v1167, %v1166
    %v1206 = vpack.c.b16 %v1169, %v1168
    %v1207 = vpack.c.b16 %v1171, %v1170
    %v1208 = vpack.c.b16 %v1173, %v1172
    %v1209 = vpack.c.b16 %v1175, %v1174
    %v1210 = vpack.c.b16 %v1177, %v1176
    %v1211 = vpack.c.b16 %v1179, %v1178
    %1244 = vmatprep.subr.bf16.mxu0 0
    %1245 = vmatpush1.bf16.msra.mxu0 %v1180
    %1246 = vmatprep.subr.bf16.mxu0 0
    %1247 = vmatpush1.bf16.msra.mxu0 %v1181
    %1248 = vmatprep.subr.bf16.mxu0 0
    %1249 = vmatpush1.bf16.msra.mxu0 %v1182
    %1250 = vmatprep.subr.bf16.mxu0 0
    %1251 = vmatpush1.bf16.msra.mxu0 %v1183
    %1252 = vmatprep.subr.bf16.mxu0 0
    %1253 = vmatpush1.bf16.msra.mxu0 %v1184
    %1254 = vmatprep.subr.bf16.mxu0 0
    %1255 = vmatpush1.bf16.msra.mxu0 %v1185
    %1256 = vmatprep.subr.bf16.mxu0 0
    %1257 = vmatpush1.bf16.msra.mxu0 %v1186
    %1258 = vmatprep.subr.bf16.mxu0 0
    %1259 = vmatpush1.bf16.msra.mxu0 %v1187
    %1260 = vmatprep.subr.bf16.mxu0 0
    %1261 = vmatpush1.bf16.msra.mxu0 %v1188
    %1262 = vmatprep.subr.bf16.mxu0 0
    %1263 = vmatpush1.bf16.msra.mxu0 %v1189
    %1264 = vmatprep.subr.bf16.mxu0 0
    %1265 = vmatpush1.bf16.msra.mxu0 %v1190
    %1266 = vmatprep.subr.bf16.mxu0 0
    %1267 = vmatpush1.bf16.msra.mxu0 %v1191
    %1268 = vmatprep.subr.bf16.mxu0 0
    %1269 = vmatpush1.bf16.msra.mxu0 %v1192
    %1270 = vmatprep.subr.bf16.mxu0 0
    %1271 = vmatpush1.bf16.msra.mxu0 %v1193
    %1272 = vmatprep.subr.bf16.mxu0 0
    %1273 = vmatpush1.bf16.msra.mxu0 %v1194
    %1274 = vmatprep.subr.bf16.mxu0 0
    %1275 = vmatpush1.bf16.msra.mxu0 %v1195
    %1276 = vmatprep.mubr.bf16.mxu0 %v498
    %1277 = vmatmul.mubr.bf16.gmra.mrb[0].mxu0 %v497
    %v1278 = vpop.f32.mrb[0].mxu0
    %v1279 = vadd.f32 %v1030, %v1278
    %v1280 = vpop.f32.mrb[0].mxu0
    %v1281 = vpop.f32.mrb[0].mxu0
    %v1282 = vadd.f32 %v1033, %v1281
    %v1283 = vpop.f32.mrb[0].mxu0
    %1284 = vmatprep.mubr.bf16.mxu0 %v502
    %1285 = vmatmul.mubr.bf16.gmra.mrb[0].mxu0 %v501
    %v1286 = vpop.f32.mrb[0].mxu0
    %v1287 = vadd.f32 %v1038, %v1286
    %v1288 = vpop.f32.mrb[0].mxu0
    %v1289 = vpop.f32.mrb[0].mxu0
    %v1290 = vadd.f32 %v1041, %v1289
    %v1291 = vpop.f32.mrb[0].mxu0
    %1292 = vmatprep.mubr.bf16.mxu0 %v506
    %1293 = vmatmul.mubr.bf16.gmra.mrb[0].mxu0 %v505
    %v1294 = vpop.f32.mrb[0].mxu0
    %v1295 = vadd.f32 %v1046, %v1294
    %v1296 = vpop.f32.mrb[0].mxu0
    %v1297 = vpop.f32.mrb[0].mxu0
    %v1298 = vadd.f32 %v1049, %v1297
    %v1299 = vpop.f32.mrb[0].mxu0
    %1300 = vdwg.mxu0
    %1301 = vmatprep.subr.bf16.mxu0 0
    %1302 = vmatpush1.bf16.msra.mxu0 %v1196
    %1303 = vmatprep.subr.bf16.mxu0 0
    %1304 = vmatpush1.bf16.msra.mxu0 %v1197
    %1305 = vmatprep.subr.bf16.mxu0 0
    %1306 = vmatpush1.bf16.msra.mxu0 %v1198
    %1307 = vmatprep.subr.bf16.mxu0 0
    %1308 = vmatpush1.bf16.msra.mxu0 %v1199
    %1309 = vmatprep.subr.bf16.mxu0 0
    %1310 = vmatpush1.bf16.msra.mxu0 %v1200
    %1311 = vmatprep.subr.bf16.mxu0 0
    %1312 = vmatpush1.bf16.msra.mxu0 %v1201
    %1313 = vmatprep.subr.bf16.mxu0 0
    %1314 = vmatpush1.bf16.msra.mxu0 %v1202
    %1315 = vmatprep.subr.bf16.mxu0 0
    %1316 = vmatpush1.bf16.msra.mxu0 %v1203
    %1317 = vmatprep.subr.bf16.mxu0 0
    %1318 = vmatpush1.bf16.msra.mxu0 %v1204
    %1319 = vmatprep.subr.bf16.mxu0 0
    %1320 = vmatpush1.bf16.msra.mxu0 %v1205
    %1321 = vmatprep.subr.bf16.mxu0 0
    %1322 = vmatpush1.bf16.msra.mxu0 %v1206
    %1323 = vmatprep.subr.bf16.mxu0 0
    %1324 = vmatpush1.bf16.msra.mxu0 %v1207
    %1325 = vmatprep.subr.bf16.mxu0 0
    %1326 = vmatpush1.bf16.msra.mxu0 %v1208
    %1327 = vmatprep.subr.bf16.mxu0 0
    %1328 = vmatpush1.bf16.msra.mxu0 %v1209
    %1329 = vmatprep.subr.bf16.mxu0 0
    %1330 = vmatpush1.bf16.msra.mxu0 %v1210
    %1331 = vmatprep.subr.bf16.mxu0 0
    %1332 = vmatpush1.bf16.msra.mxu0 %v1211
    %1333 = vmatprep.mubr.bf16.mxu0 %v500
    %1334 = vmatmul.mubr.bf16.gmra.mrb[0].mxu0 %v499
    %v1335 = vpop.f32.mrb[0].mxu0
    %v1336 = vadd.f32 %v1279, %v1335
    %v1337 = vpop.f32.mrb[0].mxu0
    %v1338 = vpop.f32.mrb[0].mxu0
    %v1339 = vadd.f32 %v1282, %v1338
    %v1340 = vpop.f32.mrb[0].mxu0
    %1341 = vmatprep.mubr.bf16.mxu0 %v504
    %1342 = vmatmul.mubr.bf16.gmra.mrb[0].mxu0 %v503
    %v1343 = vpop.f32.mrb[0].mxu0
    %v1344 = vadd.f32 %v1287, %v1343
    %v1345 = vpop.f32.mrb[0].mxu0
    %v1346 = vpop.f32.mrb[0].mxu0
    %v1347 = vadd.f32 %v1290, %v1346
    %v1348 = vpop.f32.mrb[0].mxu0
    %1349 = vmatprep.mubr.bf16.mxu0 %v508
    %1350 = vmatmul.mubr.bf16.gmra.mrb[0].mxu0 %v507
    %v1351 = vpop.f32.mrb[0].mxu0
    %v1352 = vadd.f32 %v1295, %v1351
    %v1353 = vpop.f32.mrb[0].mxu0
    %v1354 = vpop.f32.mrb[0].mxu0
    %v1355 = vadd.f32 %v1298, %v1354
    %v1356 = vpop.f32.mrb[0].mxu0
    %1357 = vdwg.mxu0
    %vm1358 = vcmask 1045504
    %v1359 = vrot.slane %v473, 2
    %v1360 = vrot.slane %v477, 2
    %v1361 = vsel %vm1358, %v1359, %v1360
    %v1362 = vrot.slane %v474, 2
    %v1363 = vrot.slane %v478, 2
    %v1364 = vsel %vm1358, %v1362, %v1363
    %v1365 = vrot.slane %v475, 2
    %v1366 = vrot.slane %v479, 2
    %v1367 = vsel %vm1358, %v1365, %v1366
    %v1368 = vrot.slane %v476, 2
    %v1369 = vrot.slane %v480, 2
    %v1370 = vsel %vm1358, %v1368, %v1369
    %v1371 = vrot.slane %v481, 2
    %v1372 = vsel %vm1358, %v1360, %v1371
    %v1373 = vrot.slane %v482, 2
    %v1374 = vsel %vm1358, %v1363, %v1373
    %v1375 = vrot.slane %v483, 2
    %v1376 = vsel %vm1358, %v1366, %v1375
    %v1377 = vrot.slane %v484, 2
    %v1378 = vsel %vm1358, %v1369, %v1377
    %v1379 = vrot.slane %v485, 2
    %v1380 = vrot.slane %v489, 2
    %v1381 = vsel %vm1358, %v1379, %v1380
    %v1382 = vrot.slane %v486, 2
    %v1383 = vrot.slane %v490, 2
    %v1384 = vsel %vm1358, %v1382, %v1383
    %v1385 = vrot.slane %v487, 2
    %v1386 = vrot.slane %v491, 2
    %v1387 = vsel %vm1358, %v1385, %v1386
    %v1388 = vrot.slane %v488, 2
    %v1389 = vrot.slane %v492, 2
    %v1390 = vsel %vm1358, %v1388, %v1389
    %v1391 = vrot.slane %v493, 2
    %v1392 = vsel %vm1358, %v1380, %v1391
    %v1393 = vrot.slane %v494, 2
    %v1394 = vsel %vm1358, %v1383, %v1393
    %v1395 = vrot.slane %v495, 2
    %v1396 = vsel %vm1358, %v1386, %v1395
    %v1397 = vrot.slane %v496, 2
    %v1398 = vsel %vm1358, %v1389, %v1397
    %v1423 = vsel %vm1358, %v1371, 0.0
    %v1424 = vsel %vm1358, %v1373, 0.0
    %v1425 = vsel %vm1358, %v1375, 0.0
    %v1426 = vsel %vm1358, %v1377, 0.0
    %v1427 = vsel %vm1358, %v1391, 0.0
    %v1428 = vsel %vm1358, %v1393, 0.0
    %v1429 = vsel %vm1358, %v1395, 0.0
    %v1430 = vsel %vm1358, %v1397, 0.0
    %v1431 = vpack.c.bf16 %v1372, %v1361
    %v1432 = vpack.c.bf16 %v1374, %v1364
    %v1433 = vpack.c.bf16 %v1376, %v1367
    %v1434 = vpack.c.bf16 %v1378, %v1370
    %v1435 = vpack.c.bf16 %v1381, %v1423
    %v1436 = vpack.c.bf16 %v1384, %v1424
    %v1437 = vpack.c.bf16 %v1387, %v1425
    %v1438 = vpack.c.bf16 %v1390, %v1426
    %v1439 = vpack.c.bf16 %v1427, %v1392
    %v1440 = vpack.c.bf16 %v1428, %v1394
    %v1441 = vpack.c.bf16 %v1429, %v1396
    %v1442 = vpack.c.bf16 %v1430, %v1398
    %v1443 = vld [vmem:[%s7 + $0x200] sm:$0xf]
    %v1444 = vld [vmem:[%s7 + $0x204] sm:$0xf]
    %v1445 = vld [vmem:[%s7 + $0x208] sm:$0xf]
    %v1446 = vld [vmem:[%s7 + $0x20c] sm:$0xf]
    %v1447 = vld [vmem:[%s7 + $0x210] sm:$0xf]
    %v1448 = vld [vmem:[%s7 + $0x214] sm:$0xf]
    %v1449 = vld [vmem:[%s7 + $0x218] sm:$0xf]
    %v1450 = vld [vmem:[%s7 + $0x21c] sm:$0xf]
    %v1451 = vld [vmem:[%s7 + $0x220] sm:$0xf]
    %v1452 = vld [vmem:[%s7 + $0x224] sm:$0xf]
    %v1453 = vld [vmem:[%s7 + $0x228] sm:$0xf]
    %v1454 = vld [vmem:[%s7 + $0x22c] sm:$0xf]
    %v1455 = vld [vmem:[%s7 + $0x230] sm:$0xf]
    %v1456 = vld [vmem:[%s7 + $0x234] sm:$0xf]
    %v1457 = vld [vmem:[%s7 + $0x238] sm:$0xf]
    %v1458 = vld [vmem:[%s7 + $0x23c] sm:$0xf]
    %v1459 = vld [vmem:[%s7 + $0x240] sm:$0xf]
    %v1460 = vld [vmem:[%s7 + $0x244] sm:$0xf]
    %v1461 = vld [vmem:[%s7 + $0x248] sm:$0xf]
    %v1462 = vld [vmem:[%s7 + $0x24c] sm:$0xf]
    %v1463 = vld [vmem:[%s7 + $0x250] sm:$0xf]
    %v1464 = vld [vmem:[%s7 + $0x254] sm:$0xf]
    %v1465 = vld [vmem:[%s7 + $0x258] sm:$0xf]
    %v1466 = vld [vmem:[%s7 + $0x25c] sm:$0xf]
    %v1467 = vld [vmem:[%s7 + $0x260] sm:$0xf]
    %v1468 = vld [vmem:[%s7 + $0x264] sm:$0xf]
    %v1469 = vld [vmem:[%s7 + $0x268] sm:$0xf]
    %v1470 = vld [vmem:[%s7 + $0x26c] sm:$0xf]
    %v1471 = vld [vmem:[%s7 + $0x270] sm:$0xf]
    %v1472 = vld [vmem:[%s7 + $0x274] sm:$0xf]
    %v1473 = vld [vmem:[%s7 + $0x278] sm:$0xf]
    %v1474 = vld [vmem:[%s7 + $0x27c] sm:$0xf]
    %v1475 = vld [vmem:[%s7 + $0x280] sm:$0xf]
    %v1476 = vld [vmem:[%s7 + $0x284] sm:$0xf]
    %v1477 = vld [vmem:[%s7 + $0x288] sm:$0xf]
    %v1478 = vld [vmem:[%s7 + $0x28c] sm:$0xf]
    %v1479 = vld [vmem:[%s7 + $0x290] sm:$0xf]
    %v1480 = vld [vmem:[%s7 + $0x294] sm:$0xf]
    %v1481 = vld [vmem:[%s7 + $0x298] sm:$0xf]
    %v1482 = vld [vmem:[%s7 + $0x29c] sm:$0xf]
    %v1483 = vld [vmem:[%s7 + $0x2a0] sm:$0xf]
    %v1484 = vld [vmem:[%s7 + $0x2a4] sm:$0xf]
    %v1485 = vld [vmem:[%s7 + $0x2a8] sm:$0xf]
    %v1486 = vld [vmem:[%s7 + $0x2ac] sm:$0xf]
    %v1487 = vld [vmem:[%s7 + $0x2b0] sm:$0xf]
    %v1488 = vld [vmem:[%s7 + $0x2b4] sm:$0xf]
    %v1489 = vld [vmem:[%s7 + $0x2b8] sm:$0xf]
    %v1490 = vld [vmem:[%s7 + $0x2bc] sm:$0xf]
    %v1491 = vld [vmem:[%s7 + $0x2c0] sm:$0xf]
    %v1492 = vld [vmem:[%s7 + $0x2c4] sm:$0xf]
    %v1493 = vld [vmem:[%s7 + $0x2c8] sm:$0xf]
    %v1494 = vld [vmem:[%s7 + $0x2cc] sm:$0xf]
    %v1495 = vld [vmem:[%s7 + $0x2d0] sm:$0xf]
    %v1496 = vld [vmem:[%s7 + $0x2d4] sm:$0xf]
    %v1497 = vld [vmem:[%s7 + $0x2d8] sm:$0xf]
    %v1498 = vld [vmem:[%s7 + $0x2dc] sm:$0xf]
    %v1499 = vld [vmem:[%s7 + $0x2e0] sm:$0xf]
    %v1500 = vld [vmem:[%s7 + $0x2e4] sm:$0xf]
    %v1501 = vld [vmem:[%s7 + $0x2e8] sm:$0xf]
    %v1502 = vld [vmem:[%s7 + $0x2ec] sm:$0xf]
    %v1503 = vld [vmem:[%s7 + $0x2f0] sm:$0xf]
    %v1504 = vld [vmem:[%s7 + $0x2f4] sm:$0xf]
    %v1505 = vld [vmem:[%s7 + $0x2f8] sm:$0xf]
    %v1506 = vld [vmem:[%s7 + $0x2fc] sm:$0xf]
    %v1571 = vunpack.c.l.b16 %v1443
    %v1572 = vunpack.c.l.b16 %v1444
    %v1573 = vunpack.c.l.b16 %v1445
    %v1574 = vunpack.c.l.b16 %v1446
    %v1575 = vunpack.c.l.b16 %v1447
    %v1576 = vunpack.c.l.b16 %v1448
    %v1577 = vunpack.c.l.b16 %v1449
    %v1578 = vunpack.c.l.b16 %v1450
    %v1579 = vunpack.c.l.b16 %v1451
    %v1580 = vunpack.c.l.b16 %v1452
    %v1581 = vunpack.c.l.b16 %v1453
    %v1582 = vunpack.c.l.b16 %v1454
    %v1583 = vunpack.c.l.b16 %v1455
    %v1584 = vunpack.c.l.b16 %v1456
    %v1585 = vunpack.c.l.b16 %v1457
    %v1586 = vunpack.c.l.b16 %v1458
    %v1587 = vunpack.c.l.b16 %v1459
    %v1588 = vunpack.c.l.b16 %v1460
    %v1589 = vunpack.c.l.b16 %v1461
    %v1590 = vunpack.c.l.b16 %v1462
    %v1591 = vunpack.c.l.b16 %v1463
    %v1592 = vunpack.c.l.b16 %v1464
    %v1593 = vunpack.c.l.b16 %v1465
    %v1594 = vunpack.c.l.b16 %v1466
    %v1595 = vunpack.c.l.b16 %v1467
    %v1596 = vunpack.c.l.b16 %v1468
    %v1597 = vunpack.c.l.b16 %v1469
    %v1598 = vunpack.c.l.b16 %v1470
    %v1599 = vunpack.c.l.b16 %v1471
    %v1600 = vunpack.c.l.b16 %v1472
    %v1601 = vunpack.c.l.b16 %v1473
    %v1602 = vunpack.c.l.b16 %v1474
    %v1603 = vunpack.c.l.b16 %v1475
    %v1604 = vunpack.c.l.b16 %v1476
    %v1605 = vunpack.c.l.b16 %v1477
    %v1606 = vunpack.c.l.b16 %v1478
    %v1607 = vunpack.c.l.b16 %v1479
    %v1608 = vunpack.c.l.b16 %v1480
    %v1609 = vunpack.c.l.b16 %v1481
    %v1610 = vunpack.c.l.b16 %v1482
    %v1611 = vunpack.c.l.b16 %v1483
    %v1612 = vunpack.c.l.b16 %v1484
    %v1613 = vunpack.c.l.b16 %v1485
    %v1614 = vunpack.c.l.b16 %v1486
    %v1615 = vunpack.c.l.b16 %v1487
    %v1616 = vunpack.c.l.b16 %v1488
    %v1617 = vunpack.c.l.b16 %v1489
    %v1618 = vunpack.c.l.b16 %v1490
    %v1619 = vunpack.c.l.b16 %v1491
    %v1620 = vunpack.c.l.b16 %v1492
    %v1621 = vunpack.c.l.b16 %v1493
    %v1622 = vunpack.c.l.b16 %v1494
    %v1623 = vunpack.c.l.b16 %v1495
    %v1624 = vunpack.c.l.b16 %v1496
    %v1625 = vunpack.c.l.b16 %v1497
    %v1626 = vunpack.c.l.b16 %v1498
    %v1627 = vunpack.c.l.b16 %v1499
    %v1628 = vunpack.c.l.b16 %v1500
    %v1629 = vunpack.c.l.b16 %v1501
    %v1630 = vunpack.c.l.b16 %v1502
    %v1631 = vunpack.c.l.b16 %v1503
    %v1632 = vunpack.c.l.b16 %v1504
    %v1633 = vunpack.c.l.b16 %v1505
    %v1634 = vunpack.c.l.b16 %v1506
    %v1635 = vpack.c.b16 %v1572, %v1571
    %v1636 = vpack.c.b16 %v1574, %v1573
    %v1637 = vpack.c.b16 %v1576, %v1575
    %v1638 = vpack.c.b16 %v1578, %v1577
    %v1639 = vpack.c.b16 %v1580, %v1579
    %v1640 = vpack.c.b16 %v1582, %v1581
    %v1641 = vpack.c.b16 %v1584, %v1583
    %v1642 = vpack.c.b16 %v1586, %v1585
    %v1643 = vpack.c.b16 %v1588, %v1587
    %v1644 = vpack.c.b16 %v1590, %v1589
    %v1645 = vpack.c.b16 %v1592, %v1591
    %v1646 = vpack.c.b16 %v1594, %v1593
    %v1647 = vpack.c.b16 %v1596, %v1595
    %v1648 = vpack.c.b16 %v1598, %v1597
    %v1649 = vpack.c.b16 %v1600, %v1599
    %v1650 = vpack.c.b16 %v1602, %v1601
    %v1651 = vpack.c.b16 %v1604, %v1603
    %v1652 = vpack.c.b16 %v1606, %v1605
    %v1653 = vpack.c.b16 %v1608, %v1607
    %v1654 = vpack.c.b16 %v1610, %v1609
    %v1655 = vpack.c.b16 %v1612, %v1611
    %v1656 = vpack.c.b16 %v1614, %v1613
    %v1657 = vpack.c.b16 %v1616, %v1615
    %v1658 = vpack.c.b16 %v1618, %v1617
    %v1659 = vpack.c.b16 %v1620, %v1619
    %v1660 = vpack.c.b16 %v1622, %v1621
    %v1661 = vpack.c.b16 %v1624, %v1623
    %v1662 = vpack.c.b16 %v1626, %v1625
    %v1663 = vpack.c.b16 %v1628, %v1627
    %v1664 = vpack.c.b16 %v1630, %v1629
    %v1665 = vpack.c.b16 %v1632, %v1631
    %v1666 = vpack.c.b16 %v1634, %v1633
    %1699 = vmatprep.subr.bf16.mxu0 0
    %1700 = vmatpush1.bf16.msra.mxu0 %v1635
    %1701 = vmatprep.subr.bf16.mxu0 0
    %1702 = vmatpush1.bf16.msra.mxu0 %v1636
    %1703 = vmatprep.subr.bf16.mxu0 0
    %1704 = vmatpush1.bf16.msra.mxu0 %v1637
    %1705 = vmatprep.subr.bf16.mxu0 0
    %1706 = vmatpush1.bf16.msra.mxu0 %v1638
    %1707 = vmatprep.subr.bf16.mxu0 0
    %1708 = vmatpush1.bf16.msra.mxu0 %v1639
    %1709 = vmatprep.subr.bf16.mxu0 0
    %1710 = vmatpush1.bf16.msra.mxu0 %v1640
    %1711 = vmatprep.subr.bf16.mxu0 0
    %1712 = vmatpush1.bf16.msra.mxu0 %v1641
    %1713 = vmatprep.subr.bf16.mxu0 0
    %1714 = vmatpush1.bf16.msra.mxu0 %v1642
    %1715 = vmatprep.subr.bf16.mxu0 0
    %1716 = vmatpush1.bf16.msra.mxu0 %v1643
    %1717 = vmatprep.subr.bf16.mxu0 0
    %1718 = vmatpush1.bf16.msra.mxu0 %v1644
    %1719 = vmatprep.subr.bf16.mxu0 0
    %1720 = vmatpush1.bf16.msra.mxu0 %v1645
    %1721 = vmatprep.subr.bf16.mxu0 0
    %1722 = vmatpush1.bf16.msra.mxu0 %v1646
    %1723 = vmatprep.subr.bf16.mxu0 0
    %1724 = vmatpush1.bf16.msra.mxu0 %v1647
    %1725 = vmatprep.subr.bf16.mxu0 0
    %1726 = vmatpush1.bf16.msra.mxu0 %v1648
    %1727 = vmatprep.subr.bf16.mxu0 0
    %1728 = vmatpush1.bf16.msra.mxu0 %v1649
    %1729 = vmatprep.subr.bf16.mxu0 0
    %1730 = vmatpush1.bf16.msra.mxu0 %v1650
    %1731 = vmatprep.mubr.bf16.mxu0 %v1432
    %1732 = vmatmul.mubr.bf16.gmra.mrb[0].mxu0 %v1431
    %v1733 = vpop.f32.mrb[0].mxu0
    %v1734 = vadd.f32 0.0, %v1733
    %v1735 = vpop.f32.mrb[0].mxu0
    %v1736 = vpop.f32.mrb[0].mxu0
    %v1737 = vadd.f32 0.0, %v1736
    %v1738 = vpop.f32.mrb[0].mxu0
    %1739 = vmatprep.mubr.bf16.mxu0 %v1436
    %1740 = vmatmul.mubr.bf16.gmra.mrb[0].mxu0 %v1435
    %v1741 = vpop.f32.mrb[0].mxu0
    %v1742 = vadd.f32 0.0, %v1741
    %v1743 = vpop.f32.mrb[0].mxu0
    %v1744 = vpop.f32.mrb[0].mxu0
    %v1745 = vadd.f32 0.0, %v1744
    %v1746 = vpop.f32.mrb[0].mxu0
    %1747 = vmatprep.mubr.bf16.mxu0 %v1440
    %1748 = vmatmul.mubr.bf16.gmra.mrb[0].mxu0 %v1439
    %v1749 = vpop.f32.mrb[0].mxu0
    %v1750 = vadd.f32 0.0, %v1749
    %v1751 = vpop.f32.mrb[0].mxu0
    %v1752 = vpop.f32.mrb[0].mxu0
    %v1753 = vadd.f32 0.0, %v1752
    %v1754 = vpop.f32.mrb[0].mxu0
    %1755 = vdwg.mxu0
    %1756 = vmatprep.subr.bf16.mxu0 0
    %1757 = vmatpush1.bf16.msra.mxu0 %v1651
    %1758 = vmatprep.subr.bf16.mxu0 0
    %1759 = vmatpush1.bf16.msra.mxu0 %v1652
    %1760 = vmatprep.subr.bf16.mxu0 0
    %1761 = vmatpush1.bf16.msra.mxu0 %v1653
    %1762 = vmatprep.subr.bf16.mxu0 0
    %1763 = vmatpush1.bf16.msra.mxu0 %v1654
    %1764 = vmatprep.subr.bf16.mxu0 0
    %1765 = vmatpush1.bf16.msra.mxu0 %v1655
    %1766 = vmatprep.subr.bf16.mxu0 0
    %1767 = vmatpush1.bf16.msra.mxu0 %v1656
    %1768 = vmatprep.subr.bf16.mxu0 0
    %1769 = vmatpush1.bf16.msra.mxu0 %v1657
    %1770 = vmatprep.subr.bf16.mxu0 0
    %1771 = vmatpush1.bf16.msra.mxu0 %v1658
    %1772 = vmatprep.subr.bf16.mxu0 0
    %1773 = vmatpush1.bf16.msra.mxu0 %v1659
    %1774 = vmatprep.subr.bf16.mxu0 0
    %1775 = vmatpush1.bf16.msra.mxu0 %v1660
    %1776 = vmatprep.subr.bf16.mxu0 0
    %1777 = vmatpush1.bf16.msra.mxu0 %v1661
    %1778 = vmatprep.subr.bf16.mxu0 0
    %1779 = vmatpush1.bf16.msra.mxu0 %v1662
    %1780 = vmatprep.subr.bf16.mxu0 0
    %1781 = vmatpush1.bf16.msra.mxu0 %v1663
    %1782 = vmatprep.subr.bf16.mxu0 0
    %1783 = vmatpush1.bf16.msra.mxu0 %v1664
    %1784 = vmatprep.subr.bf16.mxu0 0
    %1785 = vmatpush1.bf16.msra.mxu0 %v1665
    %1786 = vmatprep.subr.bf16.mxu0 0
    %1787 = vmatpush1.bf16.msra.mxu0 %v1666
    %1788 = vmatprep.mubr.bf16.mxu0 %v1434
    %1789 = vmatmul.mubr.bf16.gmra.mrb[0].mxu0 %v1433
    %v1790 = vpop.f32.mrb[0].mxu0
    %v1791 = vadd.f32 %v1734, %v1790
    %v1792 = vpop.f32.mrb[0].mxu0
    %v1793 = vpop.f32.mrb[0].mxu0
    %v1794 = vadd.f32 %v1737, %v1793
    %v1795 = vpop.f32.mrb[0].mxu0
    %1796 = vmatprep.mubr.bf16.mxu0 %v1438
    %1797 = vmatmul.mubr.bf16.gmra.mrb[0].mxu0 %v1437
    %v1798 = vpop.f32.mrb[0].mxu0
    %v1799 = vadd.f32 %v1742, %v1798
    %v1800 = vpop.f32.mrb[0].mxu0
    %v1801 = vpop.f32.mrb[0].mxu0
    %v1802 = vadd.f32 %v1745, %v1801
    %v1803 = vpop.f32.mrb[0].mxu0
    %1804 = vmatprep.mubr.bf16.mxu0 %v1442
    %1805 = vmatmul.mubr.bf16.gmra.mrb[0].mxu0 %v1441
    %v1806 = vpop.f32.mrb[0].mxu0
    %v1807 = vadd.f32 %v1750, %v1806
    %v1808 = vpop.f32.mrb[0].mxu0
    %v1809 = vpop.f32.mrb[0].mxu0
    %v1810 = vadd.f32 %v1753, %v1809
    %v1811 = vpop.f32.mrb[0].mxu0
    %1812 = vdwg.mxu0
    %v1813 = vadd.f32 %v1336, %v1791
    %v1814 = vadd.f32 %v1339, %v1794
    %v1815 = vadd.f32 %v1344, %v1799
    %v1816 = vadd.f32 %v1347, %v1802
    %v1817 = vadd.f32 %v1352, %v1807
    %v1818 = vadd.f32 %v1355, %v1810
    %vm1819 = vcmask 1044480
    %v1820 = vrot.slane %v473, 3
    %v1821 = vrot.slane %v477, 3
    %v1822 = vsel %vm1819, %v1820, %v1821
    %v1823 = vrot.slane %v474, 3
    %v1824 = vrot.slane %v478, 3
    %v1825 = vsel %vm1819, %v1823, %v1824
    %v1826 = vrot.slane %v475, 3
    %v1827 = vrot.slane %v479, 3
    %v1828 = vsel %vm1819, %v1826, %v1827
    %v1829 = vrot.slane %v476, 3
    %v1830 = vrot.slane %v480, 3
    %v1831 = vsel %vm1819, %v1829, %v1830
    %v1832 = vrot.slane %v481, 3
    %v1833 = vsel %vm1819, %v1821, %v1832
    %v1834 = vrot.slane %v482, 3
    %v1835 = vsel %vm1819, %v1824, %v1834
    %v1836 = vrot.slane %v483, 3
    %v1837 = vsel %vm1819, %v1827, %v1836
    %v1838 = vrot.slane %v484, 3
    %v1839 = vsel %vm1819, %v1830, %v1838
    %v1840 = vrot.slane %v485, 3
    %v1841 = vrot.slane %v489, 3
    %v1842 = vsel %vm1819, %v1840, %v1841
    %v1843 = vrot.slane %v486, 3
    %v1844 = vrot.slane %v490, 3
    %v1845 = vsel %vm1819, %v1843, %v1844
    %v1846 = vrot.slane %v487, 3
    %v1847 = vrot.slane %v491, 3
    %v1848 = vsel %vm1819, %v1846, %v1847
    %v1849 = vrot.slane %v488, 3
    %v1850 = vrot.slane %v492, 3
    %v1851 = vsel %vm1819, %v1849, %v1850
    %v1852 = vrot.slane %v493, 3
    %v1853 = vsel %vm1819, %v1841, %v1852
    %v1854 = vrot.slane %v494, 3
    %v1855 = vsel %vm1819, %v1844, %v1854
    %v1856 = vrot.slane %v495, 3
    %v1857 = vsel %vm1819, %v1847, %v1856
    %v1858 = vrot.slane %v496, 3
    %v1859 = vsel %vm1819, %v1850, %v1858
    %v1884 = vsel %vm1819, %v1832, 0.0
    %v1885 = vsel %vm1819, %v1834, 0.0
    %v1886 = vsel %vm1819, %v1836, 0.0
    %v1887 = vsel %vm1819, %v1838, 0.0
    %v1888 = vsel %vm1819, %v1852, 0.0
    %v1889 = vsel %vm1819, %v1854, 0.0
    %v1890 = vsel %vm1819, %v1856, 0.0
    %v1891 = vsel %vm1819, %v1858, 0.0
    %v1892 = vpack.c.bf16 %v1833, %v1822
    %v1893 = vpack.c.bf16 %v1835, %v1825
    %v1894 = vpack.c.bf16 %v1837, %v1828
    %v1895 = vpack.c.bf16 %v1839, %v1831
    %v1896 = vpack.c.bf16 %v1842, %v1884
    %v1897 = vpack.c.bf16 %v1845, %v1885
    %v1898 = vpack.c.bf16 %v1848, %v1886
    %v1899 = vpack.c.bf16 %v1851, %v1887
    %v1900 = vpack.c.bf16 %v1888, %v1853
    %v1901 = vpack.c.bf16 %v1889, %v1855
    %v1902 = vpack.c.bf16 %v1890, %v1857
    %v1903 = vpack.c.bf16 %v1891, %v1859
    %v1904 = vld [vmem:[%s7 + $0x300] sm:$0xf]
    %v1905 = vld [vmem:[%s7 + $0x304] sm:$0xf]
    %v1906 = vld [vmem:[%s7 + $0x308] sm:$0xf]
    %v1907 = vld [vmem:[%s7 + $0x30c] sm:$0xf]
    %v1908 = vld [vmem:[%s7 + $0x310] sm:$0xf]
    %v1909 = vld [vmem:[%s7 + $0x314] sm:$0xf]
    %v1910 = vld [vmem:[%s7 + $0x318] sm:$0xf]
    %v1911 = vld [vmem:[%s7 + $0x31c] sm:$0xf]
    %v1912 = vld [vmem:[%s7 + $0x320] sm:$0xf]
    %v1913 = vld [vmem:[%s7 + $0x324] sm:$0xf]
    %v1914 = vld [vmem:[%s7 + $0x328] sm:$0xf]
    %v1915 = vld [vmem:[%s7 + $0x32c] sm:$0xf]
    %v1916 = vld [vmem:[%s7 + $0x330] sm:$0xf]
    %v1917 = vld [vmem:[%s7 + $0x334] sm:$0xf]
    %v1918 = vld [vmem:[%s7 + $0x338] sm:$0xf]
    %v1919 = vld [vmem:[%s7 + $0x33c] sm:$0xf]
    %v1920 = vld [vmem:[%s7 + $0x340] sm:$0xf]
    %v1921 = vld [vmem:[%s7 + $0x344] sm:$0xf]
    %v1922 = vld [vmem:[%s7 + $0x348] sm:$0xf]
    %v1923 = vld [vmem:[%s7 + $0x34c] sm:$0xf]
    %v1924 = vld [vmem:[%s7 + $0x350] sm:$0xf]
    %v1925 = vld [vmem:[%s7 + $0x354] sm:$0xf]
    %v1926 = vld [vmem:[%s7 + $0x358] sm:$0xf]
    %v1927 = vld [vmem:[%s7 + $0x35c] sm:$0xf]
    %v1928 = vld [vmem:[%s7 + $0x360] sm:$0xf]
    %v1929 = vld [vmem:[%s7 + $0x364] sm:$0xf]
    %v1930 = vld [vmem:[%s7 + $0x368] sm:$0xf]
    %v1931 = vld [vmem:[%s7 + $0x36c] sm:$0xf]
    %v1932 = vld [vmem:[%s7 + $0x370] sm:$0xf]
    %v1933 = vld [vmem:[%s7 + $0x374] sm:$0xf]
    %v1934 = vld [vmem:[%s7 + $0x378] sm:$0xf]
    %v1935 = vld [vmem:[%s7 + $0x37c] sm:$0xf]
    %v1936 = vld [vmem:[%s7 + $0x380] sm:$0xf]
    %v1937 = vld [vmem:[%s7 + $0x384] sm:$0xf]
    %v1938 = vld [vmem:[%s7 + $0x388] sm:$0xf]
    %v1939 = vld [vmem:[%s7 + $0x38c] sm:$0xf]
    %v1940 = vld [vmem:[%s7 + $0x390] sm:$0xf]
    %v1941 = vld [vmem:[%s7 + $0x394] sm:$0xf]
    %v1942 = vld [vmem:[%s7 + $0x398] sm:$0xf]
    %v1943 = vld [vmem:[%s7 + $0x39c] sm:$0xf]
    %v1944 = vld [vmem:[%s7 + $0x3a0] sm:$0xf]
    %v1945 = vld [vmem:[%s7 + $0x3a4] sm:$0xf]
    %v1946 = vld [vmem:[%s7 + $0x3a8] sm:$0xf]
    %v1947 = vld [vmem:[%s7 + $0x3ac] sm:$0xf]
    %v1948 = vld [vmem:[%s7 + $0x3b0] sm:$0xf]
    %v1949 = vld [vmem:[%s7 + $0x3b4] sm:$0xf]
    %v1950 = vld [vmem:[%s7 + $0x3b8] sm:$0xf]
    %v1951 = vld [vmem:[%s7 + $0x3bc] sm:$0xf]
    %v1952 = vld [vmem:[%s7 + $0x3c0] sm:$0xf]
    %v1953 = vld [vmem:[%s7 + $0x3c4] sm:$0xf]
    %v1954 = vld [vmem:[%s7 + $0x3c8] sm:$0xf]
    %v1955 = vld [vmem:[%s7 + $0x3cc] sm:$0xf]
    %v1956 = vld [vmem:[%s7 + $0x3d0] sm:$0xf]
    %v1957 = vld [vmem:[%s7 + $0x3d4] sm:$0xf]
    %v1958 = vld [vmem:[%s7 + $0x3d8] sm:$0xf]
    %v1959 = vld [vmem:[%s7 + $0x3dc] sm:$0xf]
    %v1960 = vld [vmem:[%s7 + $0x3e0] sm:$0xf]
    %v1961 = vld [vmem:[%s7 + $0x3e4] sm:$0xf]
    %v1962 = vld [vmem:[%s7 + $0x3e8] sm:$0xf]
    %v1963 = vld [vmem:[%s7 + $0x3ec] sm:$0xf]
    %v1964 = vld [vmem:[%s7 + $0x3f0] sm:$0xf]
    %v1965 = vld [vmem:[%s7 + $0x3f4] sm:$0xf]
    %v1966 = vld [vmem:[%s7 + $0x3f8] sm:$0xf]
    %v1967 = vld [vmem:[%s7 + $0x3fc] sm:$0xf]
    %v2032 = vunpack.c.l.b16 %v1904
    %v2033 = vunpack.c.l.b16 %v1905
    %v2034 = vunpack.c.l.b16 %v1906
    %v2035 = vunpack.c.l.b16 %v1907
    %v2036 = vunpack.c.l.b16 %v1908
    %v2037 = vunpack.c.l.b16 %v1909
    %v2038 = vunpack.c.l.b16 %v1910
    %v2039 = vunpack.c.l.b16 %v1911
    %v2040 = vunpack.c.l.b16 %v1912
    %v2041 = vunpack.c.l.b16 %v1913
    %v2042 = vunpack.c.l.b16 %v1914
    %v2043 = vunpack.c.l.b16 %v1915
    %v2044 = vunpack.c.l.b16 %v1916
    %v2045 = vunpack.c.l.b16 %v1917
    %v2046 = vunpack.c.l.b16 %v1918
    %v2047 = vunpack.c.l.b16 %v1919
    %v2048 = vunpack.c.l.b16 %v1920
    %v2049 = vunpack.c.l.b16 %v1921
    %v2050 = vunpack.c.l.b16 %v1922
    %v2051 = vunpack.c.l.b16 %v1923
    %v2052 = vunpack.c.l.b16 %v1924
    %v2053 = vunpack.c.l.b16 %v1925
    %v2054 = vunpack.c.l.b16 %v1926
    %v2055 = vunpack.c.l.b16 %v1927
    %v2056 = vunpack.c.l.b16 %v1928
    %v2057 = vunpack.c.l.b16 %v1929
    %v2058 = vunpack.c.l.b16 %v1930
    %v2059 = vunpack.c.l.b16 %v1931
    %v2060 = vunpack.c.l.b16 %v1932
    %v2061 = vunpack.c.l.b16 %v1933
    %v2062 = vunpack.c.l.b16 %v1934
    %v2063 = vunpack.c.l.b16 %v1935
    %v2064 = vunpack.c.l.b16 %v1936
    %v2065 = vunpack.c.l.b16 %v1937
    %v2066 = vunpack.c.l.b16 %v1938
    %v2067 = vunpack.c.l.b16 %v1939
    %v2068 = vunpack.c.l.b16 %v1940
    %v2069 = vunpack.c.l.b16 %v1941
    %v2070 = vunpack.c.l.b16 %v1942
    %v2071 = vunpack.c.l.b16 %v1943
    %v2072 = vunpack.c.l.b16 %v1944
    %v2073 = vunpack.c.l.b16 %v1945
    %v2074 = vunpack.c.l.b16 %v1946
    %v2075 = vunpack.c.l.b16 %v1947
    %v2076 = vunpack.c.l.b16 %v1948
    %v2077 = vunpack.c.l.b16 %v1949
    %v2078 = vunpack.c.l.b16 %v1950
    %v2079 = vunpack.c.l.b16 %v1951
    %v2080 = vunpack.c.l.b16 %v1952
    %v2081 = vunpack.c.l.b16 %v1953
    %v2082 = vunpack.c.l.b16 %v1954
    %v2083 = vunpack.c.l.b16 %v1955
    %v2084 = vunpack.c.l.b16 %v1956
    %v2085 = vunpack.c.l.b16 %v1957
    %v2086 = vunpack.c.l.b16 %v1958
    %v2087 = vunpack.c.l.b16 %v1959
    %v2088 = vunpack.c.l.b16 %v1960
    %v2089 = vunpack.c.l.b16 %v1961
    %v2090 = vunpack.c.l.b16 %v1962
    %v2091 = vunpack.c.l.b16 %v1963
    %v2092 = vunpack.c.l.b16 %v1964
    %v2093 = vunpack.c.l.b16 %v1965
    %v2094 = vunpack.c.l.b16 %v1966
    %v2095 = vunpack.c.l.b16 %v1967
    %v2096 = vpack.c.b16 %v2033, %v2032
    %v2097 = vpack.c.b16 %v2035, %v2034
    %v2098 = vpack.c.b16 %v2037, %v2036
    %v2099 = vpack.c.b16 %v2039, %v2038
    %v2100 = vpack.c.b16 %v2041, %v2040
    %v2101 = vpack.c.b16 %v2043, %v2042
    %v2102 = vpack.c.b16 %v2045, %v2044
    %v2103 = vpack.c.b16 %v2047, %v2046
    %v2104 = vpack.c.b16 %v2049, %v2048
    %v2105 = vpack.c.b16 %v2051, %v2050
    %v2106 = vpack.c.b16 %v2053, %v2052
    %v2107 = vpack.c.b16 %v2055, %v2054
    %v2108 = vpack.c.b16 %v2057, %v2056
    %v2109 = vpack.c.b16 %v2059, %v2058
    %v2110 = vpack.c.b16 %v2061, %v2060
    %v2111 = vpack.c.b16 %v2063, %v2062
    %v2112 = vpack.c.b16 %v2065, %v2064
    %v2113 = vpack.c.b16 %v2067, %v2066
    %v2114 = vpack.c.b16 %v2069, %v2068
    %v2115 = vpack.c.b16 %v2071, %v2070
    %v2116 = vpack.c.b16 %v2073, %v2072
    %v2117 = vpack.c.b16 %v2075, %v2074
    %v2118 = vpack.c.b16 %v2077, %v2076
    %v2119 = vpack.c.b16 %v2079, %v2078
    %v2120 = vpack.c.b16 %v2081, %v2080
    %v2121 = vpack.c.b16 %v2083, %v2082
    %v2122 = vpack.c.b16 %v2085, %v2084
    %v2123 = vpack.c.b16 %v2087, %v2086
    %v2124 = vpack.c.b16 %v2089, %v2088
    %v2125 = vpack.c.b16 %v2091, %v2090
    %v2126 = vpack.c.b16 %v2093, %v2092
    %v2127 = vpack.c.b16 %v2095, %v2094
    %2160 = vmatprep.subr.bf16.mxu0 0
    %2161 = vmatpush1.bf16.msra.mxu0 %v2096
    %2162 = vmatprep.subr.bf16.mxu0 0
    %2163 = vmatpush1.bf16.msra.mxu0 %v2097
    %2164 = vmatprep.subr.bf16.mxu0 0
    %2165 = vmatpush1.bf16.msra.mxu0 %v2098
    %2166 = vmatprep.subr.bf16.mxu0 0
    %2167 = vmatpush1.bf16.msra.mxu0 %v2099
    %2168 = vmatprep.subr.bf16.mxu0 0
    %2169 = vmatpush1.bf16.msra.mxu0 %v2100
    %2170 = vmatprep.subr.bf16.mxu0 0
    %2171 = vmatpush1.bf16.msra.mxu0 %v2101
    %2172 = vmatprep.subr.bf16.mxu0 0
    %2173 = vmatpush1.bf16.msra.mxu0 %v2102
    %2174 = vmatprep.subr.bf16.mxu0 0
    %2175 = vmatpush1.bf16.msra.mxu0 %v2103
    %2176 = vmatprep.subr.bf16.mxu0 0
    %2177 = vmatpush1.bf16.msra.mxu0 %v2104
    %2178 = vmatprep.subr.bf16.mxu0 0
    %2179 = vmatpush1.bf16.msra.mxu0 %v2105
    %2180 = vmatprep.subr.bf16.mxu0 0
    %2181 = vmatpush1.bf16.msra.mxu0 %v2106
    %2182 = vmatprep.subr.bf16.mxu0 0
    %2183 = vmatpush1.bf16.msra.mxu0 %v2107
    %2184 = vmatprep.subr.bf16.mxu0 0
    %2185 = vmatpush1.bf16.msra.mxu0 %v2108
    %2186 = vmatprep.subr.bf16.mxu0 0
    %2187 = vmatpush1.bf16.msra.mxu0 %v2109
    %2188 = vmatprep.subr.bf16.mxu0 0
    %2189 = vmatpush1.bf16.msra.mxu0 %v2110
    %2190 = vmatprep.subr.bf16.mxu0 0
    %2191 = vmatpush1.bf16.msra.mxu0 %v2111
    %2192 = vmatprep.mubr.bf16.mxu0 %v1893
    %2193 = vmatmul.mubr.bf16.gmra.mrb[0].mxu0 %v1892
    %v2194 = vpop.f32.mrb[0].mxu0
    %v2195 = vadd.f32 0.0, %v2194
    %v2196 = vpop.f32.mrb[0].mxu0
    %v2197 = vpop.f32.mrb[0].mxu0
    %v2198 = vadd.f32 0.0, %v2197
    %v2199 = vpop.f32.mrb[0].mxu0
    %2200 = vmatprep.mubr.bf16.mxu0 %v1897
    %2201 = vmatmul.mubr.bf16.gmra.mrb[0].mxu0 %v1896
    %v2202 = vpop.f32.mrb[0].mxu0
    %v2203 = vadd.f32 0.0, %v2202
    %v2204 = vpop.f32.mrb[0].mxu0
    %v2205 = vpop.f32.mrb[0].mxu0
    %v2206 = vadd.f32 0.0, %v2205
    %v2207 = vpop.f32.mrb[0].mxu0
    %2208 = vmatprep.mubr.bf16.mxu0 %v1901
    %2209 = vmatmul.mubr.bf16.gmra.mrb[0].mxu0 %v1900
    %v2210 = vpop.f32.mrb[0].mxu0
    %v2211 = vadd.f32 0.0, %v2210
    %v2212 = vpop.f32.mrb[0].mxu0
    %v2213 = vpop.f32.mrb[0].mxu0
    %v2214 = vadd.f32 0.0, %v2213
    %v2215 = vpop.f32.mrb[0].mxu0
    %2216 = vdwg.mxu0
    %2217 = vmatprep.subr.bf16.mxu0 0
    %2218 = vmatpush1.bf16.msra.mxu0 %v2112
    %2219 = vmatprep.subr.bf16.mxu0 0
    %2220 = vmatpush1.bf16.msra.mxu0 %v2113
    %2221 = vmatprep.subr.bf16.mxu0 0
    %2222 = vmatpush1.bf16.msra.mxu0 %v2114
    %2223 = vmatprep.subr.bf16.mxu0 0
    %2224 = vmatpush1.bf16.msra.mxu0 %v2115
    %2225 = vmatprep.subr.bf16.mxu0 0
    %2226 = vmatpush1.bf16.msra.mxu0 %v2116
    %2227 = vmatprep.subr.bf16.mxu0 0
    %2228 = vmatpush1.bf16.msra.mxu0 %v2117
    %2229 = vmatprep.subr.bf16.mxu0 0
    %2230 = vmatpush1.bf16.msra.mxu0 %v2118
    %2231 = vmatprep.subr.bf16.mxu0 0
    %2232 = vmatpush1.bf16.msra.mxu0 %v2119
    %2233 = vmatprep.subr.bf16.mxu0 0
    %2234 = vmatpush1.bf16.msra.mxu0 %v2120
    %2235 = vmatprep.subr.bf16.mxu0 0
    %2236 = vmatpush1.bf16.msra.mxu0 %v2121
    %2237 = vmatprep.subr.bf16.mxu0 0
    %2238 = vmatpush1.bf16.msra.mxu0 %v2122
    %2239 = vmatprep.subr.bf16.mxu0 0
    %2240 = vmatpush1.bf16.msra.mxu0 %v2123
    %2241 = vmatprep.subr.bf16.mxu0 0
    %2242 = vmatpush1.bf16.msra.mxu0 %v2124
    %2243 = vmatprep.subr.bf16.mxu0 0
    %2244 = vmatpush1.bf16.msra.mxu0 %v2125
    %2245 = vmatprep.subr.bf16.mxu0 0
    %2246 = vmatpush1.bf16.msra.mxu0 %v2126
    %2247 = vmatprep.subr.bf16.mxu0 0
    %2248 = vmatpush1.bf16.msra.mxu0 %v2127
    %2249 = vmatprep.mubr.bf16.mxu0 %v1895
    %2250 = vmatmul.mubr.bf16.gmra.mrb[0].mxu0 %v1894
    %v2251 = vpop.f32.mrb[0].mxu0
    %v2252 = vadd.f32 %v2195, %v2251
    %v2253 = vpop.f32.mrb[0].mxu0
    %v2254 = vpop.f32.mrb[0].mxu0
    %v2255 = vadd.f32 %v2198, %v2254
    %v2256 = vpop.f32.mrb[0].mxu0
    %2257 = vmatprep.mubr.bf16.mxu0 %v1899
    %2258 = vmatmul.mubr.bf16.gmra.mrb[0].mxu0 %v1898
    %v2259 = vpop.f32.mrb[0].mxu0
    %v2260 = vadd.f32 %v2203, %v2259
    %v2261 = vpop.f32.mrb[0].mxu0
    %v2262 = vpop.f32.mrb[0].mxu0
    %v2263 = vadd.f32 %v2206, %v2262
    %v2264 = vpop.f32.mrb[0].mxu0
    %2265 = vmatprep.mubr.bf16.mxu0 %v1903
    %2266 = vmatmul.mubr.bf16.gmra.mrb[0].mxu0 %v1902
    %v2267 = vpop.f32.mrb[0].mxu0
    %v2268 = vadd.f32 %v2211, %v2267
    %v2269 = vpop.f32.mrb[0].mxu0
    %v2270 = vpop.f32.mrb[0].mxu0
    %v2271 = vadd.f32 %v2214, %v2270
    %v2272 = vpop.f32.mrb[0].mxu0
    %2273 = vdwg.mxu0
    %v2274 = vadd.f32 %v1813, %v2252
    %v2275 = vadd.f32 %v1814, %v2255
    %v2276 = vadd.f32 %v1815, %v2260
    %v2277 = vadd.f32 %v1816, %v2263
    %v2278 = vadd.f32 %v1817, %v2268
    %v2279 = vadd.f32 %v1818, %v2271
    %v2280 = vld [vmem:[%s8] sm:$0x1]
    %v2282 = vlaneseq
    %v2283 = vshrl.u32 %v2282, 7
    %v2284 = vsub.s32 0, %v2283
    %v2285 = vrot.slane %v2280, %v2284
    %v2287 = vmul.f32 %v2274, %v2285
    %v2288 = vmul.f32 %v2275, %v2285
    %v2289 = vmul.f32 %v2276, %v2285
    %v2290 = vmul.f32 %v2277, %v2285
    %v2291 = vmul.f32 %v2278, %v2285
    %v2292 = vmul.f32 %v2279, %v2285
    %v2293 = vld [vmem:[%s9] sm:$0x1]
    %v2295 = vlaneseq
    %v2296 = vshrl.u32 %v2295, 7
    %v2297 = vsub.s32 0, %v2296
    %v2298 = vrot.slane %v2293, %v2297
    %v2300 = vadd.f32 %v2287, %v2298
    %v2301 = vadd.f32 %v2288, %v2298
    %v2302 = vadd.f32 %v2289, %v2298
    %v2303 = vadd.f32 %v2290, %v2298
    %v2304 = vadd.f32 %v2291, %v2298
    %v2305 = vadd.f32 %v2292, %v2298
    %v2306 = vmax.f32 %v2300, 0.0
    %v2307 = vmax.f32 %v2301, 0.0
    %v2308 = vmax.f32 %v2302, 0.0
    %v2309 = vmax.f32 %v2303, 0.0
    %v2310 = vmax.f32 %v2304, 0.0
    %v2311 = vmax.f32 %v2305, 0.0
    %v2312 = vld [vmem:[%s6] sm:$0xff]
    %v2313 = vld [vmem:[%s6 + $0x8] sm:$0xff]
    %v2314 = vld [vmem:[%s6 + $0x10] sm:$0xff]
    %v2315 = vmul.f32 %v2306, %v2312
    %v2316 = vmul.f32 %v2307, %v2313
    %v2317 = vmul.f32 %v2308, %v2314
    %v2318 = vmul.f32 %v2309, %v2312
    %v2319 = vmul.f32 %v2310, %v2313
    %v2320 = vmul.f32 %v2311, %v2314
    %v2321 = vadd.f32 %v2315, %v2316
    %v2322 = vadd.f32 %v2321, %v2317
    %v2323 = vrot.slane %v2322, 4
    %v2324 = vadd.f32 %v2322, %v2323
    %v2325 = vrot.slane %v2324, 2
    %v2326 = vadd.f32 %v2324, %v2325
    %v2327 = vrot.slane %v2326, 1
    %v2328 = vadd.f32 %v2326, %v2327
    %v2329 = vadd.f32 %v2318, %v2319
    %v2330 = vadd.f32 %v2329, %v2320
    %v2331 = vrot.slane %v2330, 4
    %v2332 = vadd.f32 %v2330, %v2331
    %v2333 = vrot.slane %v2332, 2
    %v2334 = vadd.f32 %v2332, %v2333
    %v2335 = vrot.slane %v2334, 1
    %v2336 = vadd.f32 %v2334, %v2335
    %vm2343 = vcmask 1040384
    %v2344 = vrot.slane %v2315, 7
    %v2345 = vrot.slane %v2316, 7
    %v2346 = vsel %vm2343, %v2344, %v2345
    %v2347 = vrot.slane %v2317, 7
    %v2348 = vsel %vm2343, %v2345, %v2347
    %v2349 = vrot.slane %v2318, 7
    %v2350 = vrot.slane %v2319, 7
    %v2351 = vsel %vm2343, %v2349, %v2350
    %v2352 = vrot.slane %v2320, 7
    %v2353 = vsel %vm2343, %v2350, %v2352
    %v2360 = vsel %vm2343, 0.0, %v2344
    %v2361 = vsel %vm2343, 0.0, %v2349
    %v2362 = vrot.slane %v2315, 1
    %v2363 = vrot.slane %v2316, 1
    %v2364 = vsel %vm597, %v2362, %v2363
    %v2365 = vrot.slane %v2317, 1
    %v2366 = vsel %vm597, %v2363, %v2365
    %v2367 = vrot.slane %v2318, 1
    %v2368 = vrot.slane %v2319, 1
    %v2369 = vsel %vm597, %v2367, %v2368
    %v2370 = vrot.slane %v2320, 1
    %v2371 = vsel %vm597, %v2368, %v2370
    %v2378 = vsel %vm597, %v2365, 0.0
    %v2379 = vsel %vm597, %v2370, 0.0
    %v2380 = vpack.c.bf16 %v2346, %v2360
    %v2381 = vpack.c.bf16 %v2361, %v2348
    %v2382 = vpack.c.bf16 %v2353, %v2351
    %v2383 = vld [vmem:[%s10] sm:$0xf]
    %v2384 = vld [vmem:[%s10 + $0x4] sm:$0xf]
    %v2385 = vld [vmem:[%s10 + $0x8] sm:$0xf]
    %v2386 = vld [vmem:[%s10 + $0xc] sm:$0xf]
    %v2387 = vld [vmem:[%s10 + $0x10] sm:$0xf]
    %v2388 = vld [vmem:[%s10 + $0x14] sm:$0xf]
    %v2389 = vld [vmem:[%s10 + $0x18] sm:$0xf]
    %v2390 = vld [vmem:[%s10 + $0x1c] sm:$0xf]
    %v2391 = vld [vmem:[%s10 + $0x20] sm:$0xf]
    %v2392 = vld [vmem:[%s10 + $0x24] sm:$0xf]
    %v2393 = vld [vmem:[%s10 + $0x28] sm:$0xf]
    %v2394 = vld [vmem:[%s10 + $0x2c] sm:$0xf]
    %v2395 = vld [vmem:[%s10 + $0x30] sm:$0xf]
    %v2396 = vld [vmem:[%s10 + $0x34] sm:$0xf]
    %v2397 = vld [vmem:[%s10 + $0x38] sm:$0xf]
    %v2398 = vld [vmem:[%s10 + $0x3c] sm:$0xf]
    %v2399 = vpack.c.bf16 %v2316, %v2315
    %v2400 = vpack.c.bf16 %v2318, %v2317
    %v2401 = vpack.c.bf16 %v2320, %v2319
    %v2402 = vld [vmem:[%s10 + $0x40] sm:$0xf]
    %v2403 = vld [vmem:[%s10 + $0x44] sm:$0xf]
    %v2404 = vld [vmem:[%s10 + $0x48] sm:$0xf]
    %v2405 = vld [vmem:[%s10 + $0x4c] sm:$0xf]
    %v2406 = vld [vmem:[%s10 + $0x50] sm:$0xf]
    %v2407 = vld [vmem:[%s10 + $0x54] sm:$0xf]
    %v2408 = vld [vmem:[%s10 + $0x58] sm:$0xf]
    %v2409 = vld [vmem:[%s10 + $0x5c] sm:$0xf]
    %v2410 = vld [vmem:[%s10 + $0x60] sm:$0xf]
    %v2411 = vld [vmem:[%s10 + $0x64] sm:$0xf]
    %v2412 = vld [vmem:[%s10 + $0x68] sm:$0xf]
    %v2413 = vld [vmem:[%s10 + $0x6c] sm:$0xf]
    %v2414 = vld [vmem:[%s10 + $0x70] sm:$0xf]
    %v2415 = vld [vmem:[%s10 + $0x74] sm:$0xf]
    %v2416 = vld [vmem:[%s10 + $0x78] sm:$0xf]
    %v2417 = vld [vmem:[%s10 + $0x7c] sm:$0xf]
    %v2434 = vunpack.c.l.b16 %v2402
    %v2435 = vunpack.c.l.b16 %v2403
    %v2436 = vunpack.c.l.b16 %v2404
    %v2437 = vunpack.c.l.b16 %v2405
    %v2438 = vunpack.c.l.b16 %v2406
    %v2439 = vunpack.c.l.b16 %v2407
    %v2440 = vunpack.c.l.b16 %v2408
    %v2441 = vunpack.c.l.b16 %v2409
    %v2442 = vunpack.c.l.b16 %v2410
    %v2443 = vunpack.c.l.b16 %v2411
    %v2444 = vunpack.c.l.b16 %v2412
    %v2445 = vunpack.c.l.b16 %v2413
    %v2446 = vunpack.c.l.b16 %v2414
    %v2447 = vunpack.c.l.b16 %v2415
    %v2448 = vunpack.c.l.b16 %v2416
    %v2449 = vunpack.c.l.b16 %v2417
    %v2450 = vpack.c.b16 %v2435, %v2434
    %v2451 = vpack.c.b16 %v2437, %v2436
    %v2452 = vpack.c.b16 %v2439, %v2438
    %v2453 = vpack.c.b16 %v2441, %v2440
    %v2454 = vpack.c.b16 %v2443, %v2442
    %v2455 = vpack.c.b16 %v2445, %v2444
    %v2456 = vpack.c.b16 %v2447, %v2446
    %v2457 = vpack.c.b16 %v2449, %v2448
    %2466 = vmatprep.subr.bf16.mxu0 0
    %2467 = vmatpush1.bf16.msra.mxu0 %v2450
    %2468 = vmatprep.subr.bf16.mxu0 0
    %2469 = vmatpush1.bf16.msra.mxu0 %v2451
    %2470 = vmatprep.subr.bf16.mxu0 0
    %2471 = vmatpush1.bf16.msra.mxu0 %v2452
    %2472 = vmatprep.subr.bf16.mxu0 0
    %2473 = vmatpush1.bf16.msra.mxu0 %v2453
    %2474 = vmatprep.subr.bf16.mxu0 0
    %2475 = vmatpush1.bf16.msra.mxu0 %v2454
    %2476 = vmatprep.subr.bf16.mxu0 0
    %2477 = vmatpush1.bf16.msra.mxu0 %v2455
    %2478 = vmatprep.subr.bf16.mxu0 0
    %2479 = vmatpush1.bf16.msra.mxu0 %v2456
    %2480 = vmatprep.subr.bf16.mxu0 0
    %2481 = vmatpush1.bf16.msra.mxu0 %v2457
    %2482 = vmatprep.subr.bf16.mxu0 0
    %2483 = vmatpush1.bf16.msra.mxu0 0
    %2484 = vmatprep.subr.bf16.mxu0 0
    %2485 = vmatpush1.bf16.msra.mxu0 0
    %2486 = vmatprep.subr.bf16.mxu0 0
    %2487 = vmatpush1.bf16.msra.mxu0 0
    %2488 = vmatprep.subr.bf16.mxu0 0
    %2489 = vmatpush1.bf16.msra.mxu0 0
    %2490 = vmatprep.subr.bf16.mxu0 0
    %2491 = vmatpush1.bf16.msra.mxu0 0
    %2492 = vmatprep.subr.bf16.mxu0 0
    %2493 = vmatpush1.bf16.msra.mxu0 0
    %2494 = vmatprep.subr.bf16.mxu0 0
    %2495 = vmatpush1.bf16.msra.mxu0 0
    %2496 = vmatprep.subr.bf16.mxu0 0
    %2497 = vmatpush1.bf16.msra.mxu0 0
    %2498 = vmatprep.mubr.bf16.mxu0 0
    %2499 = vmatmul.mubr.bf16.gmra.mrb[0].mxu0 %v2399
    %v2500 = vpop.f32.mrb[0].mxu0
    %v2501 = vadd.f32 0.0, %v2500
    %v2502 = vpop.f32.mrb[0].mxu0
    %v2503 = vpop.f32.mrb[0].mxu0
    %v2504 = vadd.f32 0.0, %v2503
    %v2505 = vpop.f32.mrb[0].mxu0
    %2506 = vmatprep.mubr.bf16.mxu0 0
    %2507 = vmatmul.mubr.bf16.gmra.mrb[0].mxu0 %v2400
    %v2508 = vpop.f32.mrb[0].mxu0
    %v2509 = vadd.f32 0.0, %v2508
    %v2510 = vpop.f32.mrb[0].mxu0
    %v2511 = vpop.f32.mrb[0].mxu0
    %v2512 = vadd.f32 0.0, %v2511
    %v2513 = vpop.f32.mrb[0].mxu0
    %2514 = vmatprep.mubr.bf16.mxu0 0
    %2515 = vmatmul.mubr.bf16.gmra.mrb[0].mxu0 %v2401
    %v2516 = vpop.f32.mrb[0].mxu0
    %v2517 = vadd.f32 0.0, %v2516
    %v2518 = vpop.f32.mrb[0].mxu0
    %v2519 = vpop.f32.mrb[0].mxu0
    %v2520 = vadd.f32 0.0, %v2519
    %v2521 = vpop.f32.mrb[0].mxu0
    %2522 = vdwg.mxu0
    %v2539 = vunpack.c.l.b16 %v2383
    %v2540 = vunpack.c.l.b16 %v2384
    %v2541 = vunpack.c.l.b16 %v2385
    %v2542 = vunpack.c.l.b16 %v2386
    %v2543 = vunpack.c.l.b16 %v2387
    %v2544 = vunpack.c.l.b16 %v2388
    %v2545 = vunpack.c.l.b16 %v2389
    %v2546 = vunpack.c.l.b16 %v2390
    %v2547 = vunpack.c.l.b16 %v2391
    %v2548 = vunpack.c.l.b16 %v2392
    %v2549 = vunpack.c.l.b16 %v2393
    %v2550 = vunpack.c.l.b16 %v2394
    %v2551 = vunpack.c.l.b16 %v2395
    %v2552 = vunpack.c.l.b16 %v2396
    %v2553 = vunpack.c.l.b16 %v2397
    %v2554 = vunpack.c.l.b16 %v2398
    %v2555 = vpack.c.b16 %v2540, %v2539
    %v2556 = vpack.c.b16 %v2542, %v2541
    %v2557 = vpack.c.b16 %v2544, %v2543
    %v2558 = vpack.c.b16 %v2546, %v2545
    %v2559 = vpack.c.b16 %v2548, %v2547
    %v2560 = vpack.c.b16 %v2550, %v2549
    %v2561 = vpack.c.b16 %v2552, %v2551
    %v2562 = vpack.c.b16 %v2554, %v2553
    %2571 = vmatprep.subr.bf16.mxu0 0
    %2572 = vmatpush1.bf16.msra.mxu0 %v2555
    %2573 = vmatprep.subr.bf16.mxu0 0
    %2574 = vmatpush1.bf16.msra.mxu0 %v2556
    %2575 = vmatprep.subr.bf16.mxu0 0
    %2576 = vmatpush1.bf16.msra.mxu0 %v2557
    %2577 = vmatprep.subr.bf16.mxu0 0
    %2578 = vmatpush1.bf16.msra.mxu0 %v2558
    %2579 = vmatprep.subr.bf16.mxu0 0
    %2580 = vmatpush1.bf16.msra.mxu0 %v2559
    %2581 = vmatprep.subr.bf16.mxu0 0
    %2582 = vmatpush1.bf16.msra.mxu0 %v2560
    %2583 = vmatprep.subr.bf16.mxu0 0
    %2584 = vmatpush1.bf16.msra.mxu0 %v2561
    %2585 = vmatprep.subr.bf16.mxu0 0
    %2586 = vmatpush1.bf16.msra.mxu0 %v2562
    %2587 = vmatprep.subr.bf16.mxu0 0
    %2588 = vmatpush1.bf16.msra.mxu0 0
    %2589 = vmatprep.subr.bf16.mxu0 0
    %2590 = vmatpush1.bf16.msra.mxu0 0
    %2591 = vmatprep.subr.bf16.mxu0 0
    %2592 = vmatpush1.bf16.msra.mxu0 0
    %2593 = vmatprep.subr.bf16.mxu0 0
    %2594 = vmatpush1.bf16.msra.mxu0 0
    %2595 = vmatprep.subr.bf16.mxu0 0
    %2596 = vmatpush1.bf16.msra.mxu0 0
    %2597 = vmatprep.subr.bf16.mxu0 0
    %2598 = vmatpush1.bf16.msra.mxu0 0
    %2599 = vmatprep.subr.bf16.mxu0 0
    %2600 = vmatpush1.bf16.msra.mxu0 0
    %2601 = vmatprep.subr.bf16.mxu0 0
    %2602 = vmatpush1.bf16.msra.mxu0 0
    %2603 = vmatprep.mubr.bf16.mxu0 0
    %2604 = vmatmul.mubr.bf16.gmra.mrb[0].mxu0 %v2380
    %v2605 = vpop.f32.mrb[0].mxu0
    %v2606 = vadd.f32 %v2501, %v2605
    %v2607 = vpop.f32.mrb[0].mxu0
    %v2608 = vpop.f32.mrb[0].mxu0
    %v2609 = vadd.f32 %v2504, %v2608
    %v2610 = vpop.f32.mrb[0].mxu0
    %2611 = vmatprep.mubr.bf16.mxu0 0
    %2612 = vmatmul.mubr.bf16.gmra.mrb[0].mxu0 %v2381
    %v2613 = vpop.f32.mrb[0].mxu0
    %v2614 = vadd.f32 %v2509, %v2613
    %v2615 = vpop.f32.mrb[0].mxu0
    %v2616 = vpop.f32.mrb[0].mxu0
    %v2617 = vadd.f32 %v2512, %v2616
    %v2618 = vpop.f32.mrb[0].mxu0
    %2619 = vmatprep.mubr.bf16.mxu0 0
    %2620 = vmatmul.mubr.bf16.gmra.mrb[0].mxu0 %v2382
    %v2621 = vpop.f32.mrb[0].mxu0
    %v2622 = vadd.f32 %v2517, %v2621
    %v2623 = vpop.f32.mrb[0].mxu0
    %v2624 = vpop.f32.mrb[0].mxu0
    %v2625 = vadd.f32 %v2520, %v2624
    %v2626 = vpop.f32.mrb[0].mxu0
    %2627 = vdwg.mxu0
    %v2628 = vpack.c.bf16 %v2366, %v2364
    %v2629 = vpack.c.bf16 %v2369, %v2378
    %v2630 = vpack.c.bf16 %v2379, %v2371
    %v2631 = vld [vmem:[%s10 + $0x80] sm:$0xf]
    %v2632 = vld [vmem:[%s10 + $0x84] sm:$0xf]
    %v2633 = vld [vmem:[%s10 + $0x88] sm:$0xf]
    %v2634 = vld [vmem:[%s10 + $0x8c] sm:$0xf]
    %v2635 = vld [vmem:[%s10 + $0x90] sm:$0xf]
    %v2636 = vld [vmem:[%s10 + $0x94] sm:$0xf]
    %v2637 = vld [vmem:[%s10 + $0x98] sm:$0xf]
    %v2638 = vld [vmem:[%s10 + $0x9c] sm:$0xf]
    %v2639 = vld [vmem:[%s10 + $0xa0] sm:$0xf]
    %v2640 = vld [vmem:[%s10 + $0xa4] sm:$0xf]
    %v2641 = vld [vmem:[%s10 + $0xa8] sm:$0xf]
    %v2642 = vld [vmem:[%s10 + $0xac] sm:$0xf]
    %v2643 = vld [vmem:[%s10 + $0xb0] sm:$0xf]
    %v2644 = vld [vmem:[%s10 + $0xb4] sm:$0xf]
    %v2645 = vld [vmem:[%s10 + $0xb8] sm:$0xf]
    %v2646 = vld [vmem:[%s10 + $0xbc] sm:$0xf]
    %v2663 = vunpack.c.l.b16 %v2631
    %v2664 = vunpack.c.l.b16 %v2632
    %v2665 = vunpack.c.l.b16 %v2633
    %v2666 = vunpack.c.l.b16 %v2634
    %v2667 = vunpack.c.l.b16 %v2635
    %v2668 = vunpack.c.l.b16 %v2636
    %v2669 = vunpack.c.l.b16 %v2637
    %v2670 = vunpack.c.l.b16 %v2638
    %v2671 = vunpack.c.l.b16 %v2639
    %v2672 = vunpack.c.l.b16 %v2640
    %v2673 = vunpack.c.l.b16 %v2641
    %v2674 = vunpack.c.l.b16 %v2642
    %v2675 = vunpack.c.l.b16 %v2643
    %v2676 = vunpack.c.l.b16 %v2644
    %v2677 = vunpack.c.l.b16 %v2645
    %v2678 = vunpack.c.l.b16 %v2646
    %v2679 = vpack.c.b16 %v2664, %v2663
    %v2680 = vpack.c.b16 %v2666, %v2665
    %v2681 = vpack.c.b16 %v2668, %v2667
    %v2682 = vpack.c.b16 %v2670, %v2669
    %v2683 = vpack.c.b16 %v2672, %v2671
    %v2684 = vpack.c.b16 %v2674, %v2673
    %v2685 = vpack.c.b16 %v2676, %v2675
    %v2686 = vpack.c.b16 %v2678, %v2677
    %2695 = vmatprep.subr.bf16.mxu0 0
    %2696 = vmatpush1.bf16.msra.mxu0 %v2679
    %2697 = vmatprep.subr.bf16.mxu0 0
    %2698 = vmatpush1.bf16.msra.mxu0 %v2680
    %2699 = vmatprep.subr.bf16.mxu0 0
    %2700 = vmatpush1.bf16.msra.mxu0 %v2681
    %2701 = vmatprep.subr.bf16.mxu0 0
    %2702 = vmatpush1.bf16.msra.mxu0 %v2682
    %2703 = vmatprep.subr.bf16.mxu0 0
    %2704 = vmatpush1.bf16.msra.mxu0 %v2683
    %2705 = vmatprep.subr.bf16.mxu0 0
    %2706 = vmatpush1.bf16.msra.mxu0 %v2684
    %2707 = vmatprep.subr.bf16.mxu0 0
    %2708 = vmatpush1.bf16.msra.mxu0 %v2685
    %2709 = vmatprep.subr.bf16.mxu0 0
    %2710 = vmatpush1.bf16.msra.mxu0 %v2686
    %2711 = vmatprep.subr.bf16.mxu0 0
    %2712 = vmatpush1.bf16.msra.mxu0 0
    %2713 = vmatprep.subr.bf16.mxu0 0
    %2714 = vmatpush1.bf16.msra.mxu0 0
    %2715 = vmatprep.subr.bf16.mxu0 0
    %2716 = vmatpush1.bf16.msra.mxu0 0
    %2717 = vmatprep.subr.bf16.mxu0 0
    %2718 = vmatpush1.bf16.msra.mxu0 0
    %2719 = vmatprep.subr.bf16.mxu0 0
    %2720 = vmatpush1.bf16.msra.mxu0 0
    %2721 = vmatprep.subr.bf16.mxu0 0
    %2722 = vmatpush1.bf16.msra.mxu0 0
    %2723 = vmatprep.subr.bf16.mxu0 0
    %2724 = vmatpush1.bf16.msra.mxu0 0
    %2725 = vmatprep.subr.bf16.mxu0 0
    %2726 = vmatpush1.bf16.msra.mxu0 0
    %2727 = vmatprep.mubr.bf16.mxu0 0
    %2728 = vmatmul.mubr.bf16.gmra.mrb[0].mxu0 %v2628
    %v2729 = vpop.f32.mrb[0].mxu0
    %v2730 = vadd.f32 0.0, %v2729
    %v2731 = vpop.f32.mrb[0].mxu0
    %v2732 = vpop.f32.mrb[0].mxu0
    %v2733 = vadd.f32 0.0, %v2732
    %v2734 = vpop.f32.mrb[0].mxu0
    %2735 = vmatprep.mubr.bf16.mxu0 0
    %2736 = vmatmul.mubr.bf16.gmra.mrb[0].mxu0 %v2629
    %v2737 = vpop.f32.mrb[0].mxu0
    %v2738 = vadd.f32 0.0, %v2737
    %v2739 = vpop.f32.mrb[0].mxu0
    %v2740 = vpop.f32.mrb[0].mxu0
    %v2741 = vadd.f32 0.0, %v2740
    %v2742 = vpop.f32.mrb[0].mxu0
    %2743 = vmatprep.mubr.bf16.mxu0 0
    %2744 = vmatmul.mubr.bf16.gmra.mrb[0].mxu0 %v2630
    %v2745 = vpop.f32.mrb[0].mxu0
    %v2746 = vadd.f32 0.0, %v2745
    %v2747 = vpop.f32.mrb[0].mxu0
    %v2748 = vpop.f32.mrb[0].mxu0
    %v2749 = vadd.f32 0.0, %v2748
    %v2750 = vpop.f32.mrb[0].mxu0
    %2751 = vdwg.mxu0
    %v2752 = vadd.f32 %v2606, %v2730
    %v2753 = vadd.f32 %v2609, %v2733
    %v2754 = vadd.f32 %v2614, %v2738
    %v2755 = vadd.f32 %v2617, %v2741
    %v2756 = vadd.f32 %v2622, %v2746
    %v2757 = vadd.f32 %v2625, %v2749
    %v2758 = vld [vmem:[%s11] sm:$0x1]
    %v2760 = vlaneseq
    %v2761 = vshrl.u32 %v2760, 7
    %v2762 = vsub.s32 0, %v2761
    %v2763 = vrot.slane %v2758, %v2762
    %v2765 = vmul.f32 %v2752, %v2763
    %v2766 = vmul.f32 %v2753, %v2763
    %v2767 = vmul.f32 %v2754, %v2763
    %v2768 = vmul.f32 %v2755, %v2763
    %v2769 = vmul.f32 %v2756, %v2763
    %v2770 = vmul.f32 %v2757, %v2763
    %v2771 = vld [vmem:[%s12] sm:$0x1]
    %v2773 = vlaneseq
    %v2774 = vshrl.u32 %v2773, 7
    %v2775 = vsub.s32 0, %v2774
    %v2776 = vrot.slane %v2771, %v2775
    %v2778 = vadd.f32 %v2765, %v2776
    %v2779 = vadd.f32 %v2766, %v2776
    %v2780 = vadd.f32 %v2767, %v2776
    %v2781 = vadd.f32 %v2768, %v2776
    %v2782 = vadd.f32 %v2769, %v2776
    %v2783 = vadd.f32 %v2770, %v2776
    %v2784 = vadd.f32 %v2778, 0.44932896
    %v2785 = vadd.f32 %v2779, 0.44932896
    %v2786 = vadd.f32 %v2780, 0.44932896
    %v2787 = vadd.f32 %v2781, 0.44932896
    %v2788 = vadd.f32 %v2782, 0.44932896
    %v2789 = vadd.f32 %v2783, 0.44932896
    %vm2790 = vcmp.ge.f32.partialorder %v2784, 1.0
    %vm2791 = vcmp.ge.f32.partialorder %v2785, 1.0
    %vm2792 = vcmp.ge.f32.partialorder %v2786, 1.0
    %vm2793 = vcmp.ge.f32.partialorder %v2787, 1.0
    %vm2794 = vcmp.ge.f32.partialorder %v2788, 1.0
    %vm2795 = vcmp.ge.f32.partialorder %v2789, 1.0
    %v2796 = vsel %vm2790, 1, 0
    %v2797 = vsel %vm2791, 1, 0
    %v2798 = vsel %vm2792, 1, 0
    %v2799 = vsel %vm2793, 1, 0
    %v2800 = vsel %vm2794, 1, 0
    %v2801 = vsel %vm2795, 1, 0
    %v2802 = vcvt.s32.f32 %v2796
    %v2803 = vcvt.s32.f32 %v2797
    %v2804 = vcvt.s32.f32 %v2798
    %v2805 = vcvt.s32.f32 %v2799
    %v2806 = vcvt.s32.f32 %v2800
    %v2807 = vcvt.s32.f32 %v2801
    %v2808 = vmul.f32 %v2802, %v2312
    %v2809 = vmul.f32 %v2803, %v2313
    %v2810 = vmul.f32 %v2804, %v2314
    %v2811 = vmul.f32 %v2805, %v2312
    %v2812 = vmul.f32 %v2806, %v2313
    %v2813 = vmul.f32 %v2807, %v2314
    %v2820 = vrot.slane %v2808, 7
    %v2821 = vrot.slane %v2809, 7
    %v2822 = vsel %vm2343, %v2820, %v2821
    %v2823 = vrot.slane %v2810, 7
    %v2824 = vsel %vm2343, %v2821, %v2823
    %v2825 = vrot.slane %v2811, 7
    %v2826 = vrot.slane %v2812, 7
    %v2827 = vsel %vm2343, %v2825, %v2826
    %v2828 = vrot.slane %v2813, 7
    %v2829 = vsel %vm2343, %v2826, %v2828
    %v2836 = vsel %vm2343, 0.0, %v2820
    %v2837 = vsel %vm2343, 0.0, %v2825
    %v2838 = vrot.slane %v2808, 1
    %v2839 = vrot.slane %v2809, 1
    %v2840 = vsel %vm597, %v2838, %v2839
    %v2841 = vrot.slane %v2810, 1
    %v2842 = vsel %vm597, %v2839, %v2841
    %v2843 = vrot.slane %v2811, 1
    %v2844 = vrot.slane %v2812, 1
    %v2845 = vsel %vm597, %v2843, %v2844
    %v2846 = vrot.slane %v2813, 1
    %v2847 = vsel %vm597, %v2844, %v2846
    %v2854 = vsel %vm597, %v2841, 0.0
    %v2855 = vsel %vm597, %v2846, 0.0
    %v2856 = vpack.c.bf16 %v2822, %v2836
    %v2857 = vpack.c.bf16 %v2837, %v2824
    %v2858 = vpack.c.bf16 %v2829, %v2827
    %v2859 = vld [vmem:[%s13] sm:$0xf]
    %v2860 = vld [vmem:[%s13 + $0x4] sm:$0xf]
    %v2861 = vld [vmem:[%s13 + $0x8] sm:$0xf]
    %v2862 = vld [vmem:[%s13 + $0xc] sm:$0xf]
    %v2863 = vld [vmem:[%s13 + $0x10] sm:$0xf]
    %v2864 = vld [vmem:[%s13 + $0x14] sm:$0xf]
    %v2865 = vld [vmem:[%s13 + $0x18] sm:$0xf]
    %v2866 = vld [vmem:[%s13 + $0x1c] sm:$0xf]
    %v2867 = vld [vmem:[%s13 + $0x20] sm:$0xf]
    %v2868 = vld [vmem:[%s13 + $0x24] sm:$0xf]
    %v2869 = vld [vmem:[%s13 + $0x28] sm:$0xf]
    %v2870 = vld [vmem:[%s13 + $0x2c] sm:$0xf]
    %v2871 = vld [vmem:[%s13 + $0x30] sm:$0xf]
    %v2872 = vld [vmem:[%s13 + $0x34] sm:$0xf]
    %v2873 = vld [vmem:[%s13 + $0x38] sm:$0xf]
    %v2874 = vld [vmem:[%s13 + $0x3c] sm:$0xf]
    %v2875 = vpack.c.bf16 %v2809, %v2808
    %v2876 = vpack.c.bf16 %v2811, %v2810
    %v2877 = vpack.c.bf16 %v2813, %v2812
    %v2878 = vld [vmem:[%s13 + $0x40] sm:$0xf]
    %v2879 = vld [vmem:[%s13 + $0x44] sm:$0xf]
    %v2880 = vld [vmem:[%s13 + $0x48] sm:$0xf]
    %v2881 = vld [vmem:[%s13 + $0x4c] sm:$0xf]
    %v2882 = vld [vmem:[%s13 + $0x50] sm:$0xf]
    %v2883 = vld [vmem:[%s13 + $0x54] sm:$0xf]
    %v2884 = vld [vmem:[%s13 + $0x58] sm:$0xf]
    %v2885 = vld [vmem:[%s13 + $0x5c] sm:$0xf]
    %v2886 = vld [vmem:[%s13 + $0x60] sm:$0xf]
    %v2887 = vld [vmem:[%s13 + $0x64] sm:$0xf]
    %v2888 = vld [vmem:[%s13 + $0x68] sm:$0xf]
    %v2889 = vld [vmem:[%s13 + $0x6c] sm:$0xf]
    %v2890 = vld [vmem:[%s13 + $0x70] sm:$0xf]
    %v2891 = vld [vmem:[%s13 + $0x74] sm:$0xf]
    %v2892 = vld [vmem:[%s13 + $0x78] sm:$0xf]
    %v2893 = vld [vmem:[%s13 + $0x7c] sm:$0xf]
    %v2910 = vunpack.c.l.b16 %v2878
    %v2911 = vunpack.c.l.b16 %v2879
    %v2912 = vunpack.c.l.b16 %v2880
    %v2913 = vunpack.c.l.b16 %v2881
    %v2914 = vunpack.c.l.b16 %v2882
    %v2915 = vunpack.c.l.b16 %v2883
    %v2916 = vunpack.c.l.b16 %v2884
    %v2917 = vunpack.c.l.b16 %v2885
    %v2918 = vunpack.c.l.b16 %v2886
    %v2919 = vunpack.c.l.b16 %v2887
    %v2920 = vunpack.c.l.b16 %v2888
    %v2921 = vunpack.c.l.b16 %v2889
    %v2922 = vunpack.c.l.b16 %v2890
    %v2923 = vunpack.c.l.b16 %v2891
    %v2924 = vunpack.c.l.b16 %v2892
    %v2925 = vunpack.c.l.b16 %v2893
    %v2926 = vpack.c.b16 %v2911, %v2910
    %v2927 = vpack.c.b16 %v2913, %v2912
    %v2928 = vpack.c.b16 %v2915, %v2914
    %v2929 = vpack.c.b16 %v2917, %v2916
    %v2930 = vpack.c.b16 %v2919, %v2918
    %v2931 = vpack.c.b16 %v2921, %v2920
    %v2932 = vpack.c.b16 %v2923, %v2922
    %v2933 = vpack.c.b16 %v2925, %v2924
    %2942 = vmatprep.subr.bf16.mxu0 0
    %2943 = vmatpush1.bf16.msra.mxu0 %v2926
    %2944 = vmatprep.subr.bf16.mxu0 0
    %2945 = vmatpush1.bf16.msra.mxu0 %v2927
    %2946 = vmatprep.subr.bf16.mxu0 0
    %2947 = vmatpush1.bf16.msra.mxu0 %v2928
    %2948 = vmatprep.subr.bf16.mxu0 0
    %2949 = vmatpush1.bf16.msra.mxu0 %v2929
    %2950 = vmatprep.subr.bf16.mxu0 0
    %2951 = vmatpush1.bf16.msra.mxu0 %v2930
    %2952 = vmatprep.subr.bf16.mxu0 0
    %2953 = vmatpush1.bf16.msra.mxu0 %v2931
    %2954 = vmatprep.subr.bf16.mxu0 0
    %2955 = vmatpush1.bf16.msra.mxu0 %v2932
    %2956 = vmatprep.subr.bf16.mxu0 0
    %2957 = vmatpush1.bf16.msra.mxu0 %v2933
    %2958 = vmatprep.subr.bf16.mxu0 0
    %2959 = vmatpush1.bf16.msra.mxu0 0
    %2960 = vmatprep.subr.bf16.mxu0 0
    %2961 = vmatpush1.bf16.msra.mxu0 0
    %2962 = vmatprep.subr.bf16.mxu0 0
    %2963 = vmatpush1.bf16.msra.mxu0 0
    %2964 = vmatprep.subr.bf16.mxu0 0
    %2965 = vmatpush1.bf16.msra.mxu0 0
    %2966 = vmatprep.subr.bf16.mxu0 0
    %2967 = vmatpush1.bf16.msra.mxu0 0
    %2968 = vmatprep.subr.bf16.mxu0 0
    %2969 = vmatpush1.bf16.msra.mxu0 0
    %2970 = vmatprep.subr.bf16.mxu0 0
    %2971 = vmatpush1.bf16.msra.mxu0 0
    %2972 = vmatprep.subr.bf16.mxu0 0
    %2973 = vmatpush1.bf16.msra.mxu0 0
    %2974 = vmatprep.mubr.bf16.mxu0 0
    %2975 = vmatmul.mubr.bf16.gmra.mrb[0].mxu0 %v2875
    %v2976 = vpop.f32.mrb[0].mxu0
    %v2977 = vadd.f32 0.0, %v2976
    %v2978 = vpop.f32.mrb[0].mxu0
    %v2979 = vpop.f32.mrb[0].mxu0
    %v2980 = vadd.f32 0.0, %v2979
    %v2981 = vpop.f32.mrb[0].mxu0
    %2982 = vmatprep.mubr.bf16.mxu0 0
    %2983 = vmatmul.mubr.bf16.gmra.mrb[0].mxu0 %v2876
    %v2984 = vpop.f32.mrb[0].mxu0
    %v2985 = vadd.f32 0.0, %v2984
    %v2986 = vpop.f32.mrb[0].mxu0
    %v2987 = vpop.f32.mrb[0].mxu0
    %v2988 = vadd.f32 0.0, %v2987
    %v2989 = vpop.f32.mrb[0].mxu0
    %2990 = vmatprep.mubr.bf16.mxu0 0
    %2991 = vmatmul.mubr.bf16.gmra.mrb[0].mxu0 %v2877
    %v2992 = vpop.f32.mrb[0].mxu0
    %v2993 = vadd.f32 0.0, %v2992
    %v2994 = vpop.f32.mrb[0].mxu0
    %v2995 = vpop.f32.mrb[0].mxu0
    %v2996 = vadd.f32 0.0, %v2995
    %v2997 = vpop.f32.mrb[0].mxu0
    %2998 = vdwg.mxu0
    %v3015 = vunpack.c.l.b16 %v2859
    %v3016 = vunpack.c.l.b16 %v2860
    %v3017 = vunpack.c.l.b16 %v2861
    %v3018 = vunpack.c.l.b16 %v2862
    %v3019 = vunpack.c.l.b16 %v2863
    %v3020 = vunpack.c.l.b16 %v2864
    %v3021 = vunpack.c.l.b16 %v2865
    %v3022 = vunpack.c.l.b16 %v2866
    %v3023 = vunpack.c.l.b16 %v2867
    %v3024 = vunpack.c.l.b16 %v2868
    %v3025 = vunpack.c.l.b16 %v2869
    %v3026 = vunpack.c.l.b16 %v2870
    %v3027 = vunpack.c.l.b16 %v2871
    %v3028 = vunpack.c.l.b16 %v2872
    %v3029 = vunpack.c.l.b16 %v2873
    %v3030 = vunpack.c.l.b16 %v2874
    %v3031 = vpack.c.b16 %v3016, %v3015
    %v3032 = vpack.c.b16 %v3018, %v3017
    %v3033 = vpack.c.b16 %v3020, %v3019
    %v3034 = vpack.c.b16 %v3022, %v3021
    %v3035 = vpack.c.b16 %v3024, %v3023
    %v3036 = vpack.c.b16 %v3026, %v3025
    %v3037 = vpack.c.b16 %v3028, %v3027
    %v3038 = vpack.c.b16 %v3030, %v3029
    %3047 = vmatprep.subr.bf16.mxu0 0
    %3048 = vmatpush1.bf16.msra.mxu0 %v3031
    %3049 = vmatprep.subr.bf16.mxu0 0
    %3050 = vmatpush1.bf16.msra.mxu0 %v3032
    %3051 = vmatprep.subr.bf16.mxu0 0
    %3052 = vmatpush1.bf16.msra.mxu0 %v3033
    %3053 = vmatprep.subr.bf16.mxu0 0
    %3054 = vmatpush1.bf16.msra.mxu0 %v3034
    %3055 = vmatprep.subr.bf16.mxu0 0
    %3056 = vmatpush1.bf16.msra.mxu0 %v3035
    %3057 = vmatprep.subr.bf16.mxu0 0
    %3058 = vmatpush1.bf16.msra.mxu0 %v3036
    %3059 = vmatprep.subr.bf16.mxu0 0
    %3060 = vmatpush1.bf16.msra.mxu0 %v3037
    %3061 = vmatprep.subr.bf16.mxu0 0
    %3062 = vmatpush1.bf16.msra.mxu0 %v3038
    %3063 = vmatprep.subr.bf16.mxu0 0
    %3064 = vmatpush1.bf16.msra.mxu0 0
    %3065 = vmatprep.subr.bf16.mxu0 0
    %3066 = vmatpush1.bf16.msra.mxu0 0
    %3067 = vmatprep.subr.bf16.mxu0 0
    %3068 = vmatpush1.bf16.msra.mxu0 0
    %3069 = vmatprep.subr.bf16.mxu0 0
    %3070 = vmatpush1.bf16.msra.mxu0 0
    %3071 = vmatprep.subr.bf16.mxu0 0
    %3072 = vmatpush1.bf16.msra.mxu0 0
    %3073 = vmatprep.subr.bf16.mxu0 0
    %3074 = vmatpush1.bf16.msra.mxu0 0
    %3075 = vmatprep.subr.bf16.mxu0 0
    %3076 = vmatpush1.bf16.msra.mxu0 0
    %3077 = vmatprep.subr.bf16.mxu0 0
    %3078 = vmatpush1.bf16.msra.mxu0 0
    %3079 = vmatprep.mubr.bf16.mxu0 0
    %3080 = vmatmul.mubr.bf16.gmra.mrb[0].mxu0 %v2856
    %v3081 = vpop.f32.mrb[0].mxu0
    %v3082 = vadd.f32 %v2977, %v3081
    %v3083 = vpop.f32.mrb[0].mxu0
    %v3084 = vpop.f32.mrb[0].mxu0
    %v3085 = vadd.f32 %v2980, %v3084
    %v3086 = vpop.f32.mrb[0].mxu0
    %3087 = vmatprep.mubr.bf16.mxu0 0
    %3088 = vmatmul.mubr.bf16.gmra.mrb[0].mxu0 %v2857
    %v3089 = vpop.f32.mrb[0].mxu0
    %v3090 = vadd.f32 %v2985, %v3089
    %v3091 = vpop.f32.mrb[0].mxu0
    %v3092 = vpop.f32.mrb[0].mxu0
    %v3093 = vadd.f32 %v2988, %v3092
    %v3094 = vpop.f32.mrb[0].mxu0
    %3095 = vmatprep.mubr.bf16.mxu0 0
    %3096 = vmatmul.mubr.bf16.gmra.mrb[0].mxu0 %v2858
    %v3097 = vpop.f32.mrb[0].mxu0
    %v3098 = vadd.f32 %v2993, %v3097
    %v3099 = vpop.f32.mrb[0].mxu0
    %v3100 = vpop.f32.mrb[0].mxu0
    %v3101 = vadd.f32 %v2996, %v3100
    %v3102 = vpop.f32.mrb[0].mxu0
    %3103 = vdwg.mxu0
    %v3104 = vpack.c.bf16 %v2842, %v2840
    %v3105 = vpack.c.bf16 %v2845, %v2854
    %v3106 = vpack.c.bf16 %v2855, %v2847
    %v3107 = vld [vmem:[%s13 + $0x80] sm:$0xf]
    %v3108 = vld [vmem:[%s13 + $0x84] sm:$0xf]
    %v3109 = vld [vmem:[%s13 + $0x88] sm:$0xf]
    %v3110 = vld [vmem:[%s13 + $0x8c] sm:$0xf]
    %v3111 = vld [vmem:[%s13 + $0x90] sm:$0xf]
    %v3112 = vld [vmem:[%s13 + $0x94] sm:$0xf]
    %v3113 = vld [vmem:[%s13 + $0x98] sm:$0xf]
    %v3114 = vld [vmem:[%s13 + $0x9c] sm:$0xf]
    %v3115 = vld [vmem:[%s13 + $0xa0] sm:$0xf]
    %v3116 = vld [vmem:[%s13 + $0xa4] sm:$0xf]
    %v3117 = vld [vmem:[%s13 + $0xa8] sm:$0xf]
    %v3118 = vld [vmem:[%s13 + $0xac] sm:$0xf]
    %v3119 = vld [vmem:[%s13 + $0xb0] sm:$0xf]
    %v3120 = vld [vmem:[%s13 + $0xb4] sm:$0xf]
    %v3121 = vld [vmem:[%s13 + $0xb8] sm:$0xf]
    %v3122 = vld [vmem:[%s13 + $0xbc] sm:$0xf]
    %v3139 = vunpack.c.l.b16 %v3107
    %v3140 = vunpack.c.l.b16 %v3108
    %v3141 = vunpack.c.l.b16 %v3109
    %v3142 = vunpack.c.l.b16 %v3110
    %v3143 = vunpack.c.l.b16 %v3111
    %v3144 = vunpack.c.l.b16 %v3112
    %v3145 = vunpack.c.l.b16 %v3113
    %v3146 = vunpack.c.l.b16 %v3114
    %v3147 = vunpack.c.l.b16 %v3115
    %v3148 = vunpack.c.l.b16 %v3116
    %v3149 = vunpack.c.l.b16 %v3117
    %v3150 = vunpack.c.l.b16 %v3118
    %v3151 = vunpack.c.l.b16 %v3119
    %v3152 = vunpack.c.l.b16 %v3120
    %v3153 = vunpack.c.l.b16 %v3121
    %v3154 = vunpack.c.l.b16 %v3122
    %v3155 = vpack.c.b16 %v3140, %v3139
    %v3156 = vpack.c.b16 %v3142, %v3141
    %v3157 = vpack.c.b16 %v3144, %v3143
    %v3158 = vpack.c.b16 %v3146, %v3145
    %v3159 = vpack.c.b16 %v3148, %v3147
    %v3160 = vpack.c.b16 %v3150, %v3149
    %v3161 = vpack.c.b16 %v3152, %v3151
    %v3162 = vpack.c.b16 %v3154, %v3153
    %3171 = vmatprep.subr.bf16.mxu0 0
    %3172 = vmatpush1.bf16.msra.mxu0 %v3155
    %3173 = vmatprep.subr.bf16.mxu0 0
    %3174 = vmatpush1.bf16.msra.mxu0 %v3156
    %3175 = vmatprep.subr.bf16.mxu0 0
    %3176 = vmatpush1.bf16.msra.mxu0 %v3157
    %3177 = vmatprep.subr.bf16.mxu0 0
    %3178 = vmatpush1.bf16.msra.mxu0 %v3158
    %3179 = vmatprep.subr.bf16.mxu0 0
    %3180 = vmatpush1.bf16.msra.mxu0 %v3159
    %3181 = vmatprep.subr.bf16.mxu0 0
    %3182 = vmatpush1.bf16.msra.mxu0 %v3160
    %3183 = vmatprep.subr.bf16.mxu0 0
    %3184 = vmatpush1.bf16.msra.mxu0 %v3161
    %3185 = vmatprep.subr.bf16.mxu0 0
    %3186 = vmatpush1.bf16.msra.mxu0 %v3162
    %3187 = vmatprep.subr.bf16.mxu0 0
    %3188 = vmatpush1.bf16.msra.mxu0 0
    %3189 = vmatprep.subr.bf16.mxu0 0
    %3190 = vmatpush1.bf16.msra.mxu0 0
    %3191 = vmatprep.subr.bf16.mxu0 0
    %3192 = vmatpush1.bf16.msra.mxu0 0
    %3193 = vmatprep.subr.bf16.mxu0 0
    %3194 = vmatpush1.bf16.msra.mxu0 0
    %3195 = vmatprep.subr.bf16.mxu0 0
    %3196 = vmatpush1.bf16.msra.mxu0 0
    %3197 = vmatprep.subr.bf16.mxu0 0
    %3198 = vmatpush1.bf16.msra.mxu0 0
    %3199 = vmatprep.subr.bf16.mxu0 0
    %3200 = vmatpush1.bf16.msra.mxu0 0
    %3201 = vmatprep.subr.bf16.mxu0 0
    %3202 = vmatpush1.bf16.msra.mxu0 0
    %3203 = vmatprep.mubr.bf16.mxu0 0
    %3204 = vmatmul.mubr.bf16.gmra.mrb[0].mxu0 %v3104
    %v3205 = vpop.f32.mrb[0].mxu0
    %v3206 = vadd.f32 0.0, %v3205
    %v3207 = vpop.f32.mrb[0].mxu0
    %v3208 = vpop.f32.mrb[0].mxu0
    %v3209 = vadd.f32 0.0, %v3208
    %v3210 = vpop.f32.mrb[0].mxu0
    %3211 = vmatprep.mubr.bf16.mxu0 0
    %3212 = vmatmul.mubr.bf16.gmra.mrb[0].mxu0 %v3105
    %v3213 = vpop.f32.mrb[0].mxu0
    %v3214 = vadd.f32 0.0, %v3213
    %v3215 = vpop.f32.mrb[0].mxu0
    %v3216 = vpop.f32.mrb[0].mxu0
    %v3217 = vadd.f32 0.0, %v3216
    %v3218 = vpop.f32.mrb[0].mxu0
    %3219 = vmatprep.mubr.bf16.mxu0 0
    %3220 = vmatmul.mubr.bf16.gmra.mrb[0].mxu0 %v3106
    %v3221 = vpop.f32.mrb[0].mxu0
    %v3222 = vadd.f32 0.0, %v3221
    %v3223 = vpop.f32.mrb[0].mxu0
    %v3224 = vpop.f32.mrb[0].mxu0
    %v3225 = vadd.f32 0.0, %v3224
    %v3226 = vpop.f32.mrb[0].mxu0
    %3227 = vdwg.mxu0
    %v3228 = vadd.f32 %v3082, %v3206
    %v3229 = vadd.f32 %v3085, %v3209
    %v3230 = vadd.f32 %v3090, %v3214
    %v3231 = vadd.f32 %v3093, %v3217
    %v3232 = vadd.f32 %v3098, %v3222
    %v3233 = vadd.f32 %v3101, %v3225
    %v3234 = vld [vmem:[%s14] sm:$0x1]
    %v3236 = vlaneseq
    %v3237 = vshrl.u32 %v3236, 7
    %v3238 = vsub.s32 0, %v3237
    %v3239 = vrot.slane %v3234, %v3238
    %v3241 = vmul.f32 %v3228, %v3239
    %v3242 = vmul.f32 %v3229, %v3239
    %v3243 = vmul.f32 %v3230, %v3239
    %v3244 = vmul.f32 %v3231, %v3239
    %v3245 = vmul.f32 %v3232, %v3239
    %v3246 = vmul.f32 %v3233, %v3239
    %v3247 = vld [vmem:[%s15] sm:$0x1]
    %v3249 = vlaneseq
    %v3250 = vshrl.u32 %v3249, 7
    %v3251 = vsub.s32 0, %v3250
    %v3252 = vrot.slane %v3247, %v3251
    %v3254 = vadd.f32 %v3241, %v3252
    %v3255 = vadd.f32 %v3242, %v3252
    %v3256 = vadd.f32 %v3243, %v3252
    %v3257 = vadd.f32 %v3244, %v3252
    %v3258 = vadd.f32 %v3245, %v3252
    %v3259 = vadd.f32 %v3246, %v3252
    %v3260 = vadd.f32 %v3254, 0.44932896
    %v3261 = vadd.f32 %v3255, 0.44932896
    %v3262 = vadd.f32 %v3256, 0.44932896
    %v3263 = vadd.f32 %v3257, 0.44932896
    %v3264 = vadd.f32 %v3258, 0.44932896
    %v3265 = vadd.f32 %v3259, 0.44932896
    %vm3266 = vcmp.ge.f32.partialorder %v3260, 1.0
    %vm3267 = vcmp.ge.f32.partialorder %v3261, 1.0
    %vm3268 = vcmp.ge.f32.partialorder %v3262, 1.0
    %vm3269 = vcmp.ge.f32.partialorder %v3263, 1.0
    %vm3270 = vcmp.ge.f32.partialorder %v3264, 1.0
    %vm3271 = vcmp.ge.f32.partialorder %v3265, 1.0
    %v3272 = vsel %vm3266, 1, 0
    %v3273 = vsel %vm3267, 1, 0
    %v3274 = vsel %vm3268, 1, 0
    %v3275 = vsel %vm3269, 1, 0
    %v3276 = vsel %vm3270, 1, 0
    %v3277 = vsel %vm3271, 1, 0
    %v3278 = vcvt.s32.f32 %v3272
    %v3279 = vcvt.s32.f32 %v3273
    %v3280 = vcvt.s32.f32 %v3274
    %v3281 = vcvt.s32.f32 %v3275
    %v3282 = vcvt.s32.f32 %v3276
    %v3283 = vcvt.s32.f32 %v3277
    %v3284 = vmul.f32 %v3278, %v2312
    %v3285 = vmul.f32 %v3279, %v2313
    %v3286 = vmul.f32 %v3280, %v2314
    %v3287 = vmul.f32 %v3281, %v2312
    %v3288 = vmul.f32 %v3282, %v2313
    %v3289 = vmul.f32 %v3283, %v2314
    %v3290 = vadd.f32 %v3284, %v3285
    %v3291 = vadd.f32 %v3290, %v3286
    %v3292 = vrot.slane %v3291, 4
    %v3293 = vadd.f32 %v3291, %v3292
    %v3294 = vrot.slane %v3293, 2
    %v3295 = vadd.f32 %v3293, %v3294
    %v3296 = vrot.slane %v3295, 1
    %v3297 = vadd.f32 %v3295, %v3296
    %v3298 = vadd.f32 %v3287, %v3288
    %v3299 = vadd.f32 %v3298, %v3289
    %v3300 = vrot.slane %v3299, 4
    %v3301 = vadd.f32 %v3299, %v3300
    %v3302 = vrot.slane %v3301, 2
    %v3303 = vadd.f32 %v3301, %v3302
    %v3304 = vrot.slane %v3303, 1
    %v3305 = vadd.f32 %v3303, %v3304
    %v3306 = vmul.f32 %v3297, 0.055555556
    %v3307 = vmul.f32 %v3305, 0.055555556
    %v3308 = vpack.c.bf16 %v3306, %v3306
    %v3309 = vpack.c.bf16 %v3307, %v3307
    %v3310 = vld [vmem:[%s16] sm:$0xf]
    %v3311 = vld [vmem:[%s16 + $0x4] sm:$0xf]
    %v3312 = vld [vmem:[%s16 + $0x8] sm:$0xf]
    %v3313 = vld [vmem:[%s16 + $0xc] sm:$0xf]
    %v3314 = vld [vmem:[%s16 + $0x10] sm:$0xf]
    %v3315 = vld [vmem:[%s16 + $0x14] sm:$0xf]
    %v3316 = vld [vmem:[%s16 + $0x18] sm:$0xf]
    %v3317 = vld [vmem:[%s16 + $0x1c] sm:$0xf]
    %v3318 = vld [vmem:[%s16 + $0x20] sm:$0xf]
    %v3319 = vld [vmem:[%s16 + $0x24] sm:$0xf]
    %v3320 = vld [vmem:[%s16 + $0x28] sm:$0xf]
    %v3321 = vld [vmem:[%s16 + $0x2c] sm:$0xf]
    %v3322 = vld [vmem:[%s16 + $0x30] sm:$0xf]
    %v3323 = vld [vmem:[%s16 + $0x34] sm:$0xf]
    %v3324 = vld [vmem:[%s16 + $0x38] sm:$0xf]
    %v3325 = vld [vmem:[%s16 + $0x3c] sm:$0xf]
    %v3326 = vld [vmem:[%s17] sm:$0x1]
    %v3328 = vlaneseq
    %v3329 = vshrl.u32 %v3328, 7
    %v3330 = vsub.s32 0, %v3329
    %v3331 = vrot.slane %v3326, %v3330
    %v3335 = vunpack.c.l.b16 %v3308
    %v3336 = vunpack.c.l.b16 %v3309
    %vm3337 = vcmask 1041409
    %v3338 = vsel %vm3337, %v3336, %v3335
    %v3339 = vpack.c.b16 %v3338, %v3338
    %v3357 = vunpack.c.l.b16 %v3310
    %v3358 = vunpack.c.l.b16 %v3311
    %v3359 = vunpack.c.l.b16 %v3312
    %v3360 = vunpack.c.l.b16 %v3313
    %v3361 = vunpack.c.l.b16 %v3314
    %v3362 = vunpack.c.l.b16 %v3315
    %v3363 = vunpack.c.l.b16 %v3316
    %v3364 = vunpack.c.l.b16 %v3317
    %v3365 = vunpack.c.l.b16 %v3318
    %v3366 = vunpack.c.l.b16 %v3319
    %v3367 = vunpack.c.l.b16 %v3320
    %v3368 = vunpack.c.l.b16 %v3321
    %v3369 = vunpack.c.l.b16 %v3322
    %v3370 = vunpack.c.l.b16 %v3323
    %v3371 = vunpack.c.l.b16 %v3324
    %v3372 = vunpack.c.l.b16 %v3325
    %v3373 = vpack.c.b16 %v3358, %v3357
    %v3374 = vpack.c.b16 %v3360, %v3359
    %v3375 = vpack.c.b16 %v3362, %v3361
    %v3376 = vpack.c.b16 %v3364, %v3363
    %v3377 = vpack.c.b16 %v3366, %v3365
    %v3378 = vpack.c.b16 %v3368, %v3367
    %v3379 = vpack.c.b16 %v3370, %v3369
    %v3380 = vpack.c.b16 %v3372, %v3371
    %3389 = vmatprep.subr.bf16.mxu0 0
    %3390 = vmatpush1.bf16.msra.mxu0 %v3373
    %3391 = vmatprep.subr.bf16.mxu0 0
    %3392 = vmatpush1.bf16.msra.mxu0 %v3374
    %3393 = vmatprep.subr.bf16.mxu0 0
    %3394 = vmatpush1.bf16.msra.mxu0 %v3375
    %3395 = vmatprep.subr.bf16.mxu0 0
    %3396 = vmatpush1.bf16.msra.mxu0 %v3376
    %3397 = vmatprep.subr.bf16.mxu0 0
    %3398 = vmatpush1.bf16.msra.mxu0 %v3377
    %3399 = vmatprep.subr.bf16.mxu0 0
    %3400 = vmatpush1.bf16.msra.mxu0 %v3378
    %3401 = vmatprep.subr.bf16.mxu0 0
    %3402 = vmatpush1.bf16.msra.mxu0 %v3379
    %3403 = vmatprep.subr.bf16.mxu0 0
    %3404 = vmatpush1.bf16.msra.mxu0 %v3380
    %3405 = vmatprep.subr.bf16.mxu0 0
    %3406 = vmatpush1.bf16.msra.mxu0 0
    %3407 = vmatprep.subr.bf16.mxu0 0
    %3408 = vmatpush1.bf16.msra.mxu0 0
    %3409 = vmatprep.subr.bf16.mxu0 0
    %3410 = vmatpush1.bf16.msra.mxu0 0
    %3411 = vmatprep.subr.bf16.mxu0 0
    %3412 = vmatpush1.bf16.msra.mxu0 0
    %3413 = vmatprep.subr.bf16.mxu0 0
    %3414 = vmatpush1.bf16.msra.mxu0 0
    %3415 = vmatprep.subr.bf16.mxu0 0
    %3416 = vmatpush1.bf16.msra.mxu0 0
    %3417 = vmatprep.subr.bf16.mxu0 0
    %3418 = vmatpush1.bf16.msra.mxu0 0
    %3419 = vmatprep.subr.bf16.mxu0 0
    %3420 = vmatpush1.bf16.msra.mxu0 0
    %3421 = vmatprep.mubr.bf16.mxu0 0
    %3422 = vmatmul.mubr.bf16.gmra.mrb[0].mxu0 %v3339
    %v3423 = vpop.f32.mrb[0].mxu0
    %v3424 = vadd.f32 %v3331, %v3423
    %v3425 = vpop.f32.mrb[0].mxu0
    %v3426 = vpop.f32.mrb[0].mxu0
    %v3427 = vpop.f32.mrb[0].mxu0
    %3428 = vdwg.mxu0
    %v3429 = vmax.f32 %v3424, 0.0
    %v3430 = vpack.c.bf16 %v3429, %v3429
    %v3431 = vld [vmem:[%s18] sm:$0xf]
    %v3432 = vld [vmem:[%s19] sm:$0x1]
    %v3434 = vlaneseq
    %v3435 = vshrl.u32 %v3434, 7
    %v3436 = vsub.s32 0, %v3435
    %v3437 = vrot.slane %v3432, %v3436
    %vm3439 = vcmask 64512
    %v3441 = vsel %vm3439, %v3430, 0
    %v3444 = vsel %vm130, %v3431, 0
    %3446 = vmatprep.subr.bf16.mxu0 0
    %3447 = vmatpush1.bf16.msra.mxu0 %v3444
    %3448 = vmatprep.subr.bf16.mxu0 0
    %3449 = vmatpush1.bf16.msra.mxu0 0
    %3450 = vmatprep.subr.bf16.mxu0 0
    %3451 = vmatpush1.bf16.msra.mxu0 0
    %3452 = vmatprep.subr.bf16.mxu0 0
    %3453 = vmatpush1.bf16.msra.mxu0 0
    %3454 = vmatprep.subr.bf16.mxu0 0
    %3455 = vmatpush1.bf16.msra.mxu0 0
    %3456 = vmatprep.subr.bf16.mxu0 0
    %3457 = vmatpush1.bf16.msra.mxu0 0
    %3458 = vmatprep.subr.bf16.mxu0 0
    %3459 = vmatpush1.bf16.msra.mxu0 0
    %3460 = vmatprep.subr.bf16.mxu0 0
    %3461 = vmatpush1.bf16.msra.mxu0 0
    %3462 = vmatprep.subr.bf16.mxu0 0
    %3463 = vmatpush1.bf16.msra.mxu0 0
    %3464 = vmatprep.subr.bf16.mxu0 0
    %3465 = vmatpush1.bf16.msra.mxu0 0
    %3466 = vmatprep.subr.bf16.mxu0 0
    %3467 = vmatpush1.bf16.msra.mxu0 0
    %3468 = vmatprep.subr.bf16.mxu0 0
    %3469 = vmatpush1.bf16.msra.mxu0 0
    %3470 = vmatprep.subr.bf16.mxu0 0
    %3471 = vmatpush1.bf16.msra.mxu0 0
    %3472 = vmatprep.subr.bf16.mxu0 0
    %3473 = vmatpush1.bf16.msra.mxu0 0
    %3474 = vmatprep.subr.bf16.mxu0 0
    %3475 = vmatpush1.bf16.msra.mxu0 0
    %3476 = vmatprep.subr.bf16.mxu0 0
    %3477 = vmatpush1.bf16.msra.mxu0 0
    %3478 = vmatprep.mubr.bf16.mxu0 0
    %3479 = vmatmul.mubr.bf16.gmra.mrb[0].mxu0 %v3441
    %v3480 = vpop.f32.mrb[0].mxu0
    %v3481 = vadd.f32 %v3437, %v3480
    %v3482 = vpop.f32.mrb[0].mxu0
    %v3483 = vpop.f32.mrb[0].mxu0
    %v3484 = vpop.f32.mrb[0].mxu0
    %3485 = vdwg.mxu0
    %v3486 = vxor.u32 %v3481, 2147483648
    %v3487 = vmul.f32 %v3486, 1.442695
    %v3488 = vpow.pop %v3487
    %v3489 = vadd.f32 %v3488, 1.0
    %v3490 = vrcp.pop %v3489
    %v3491 = vmul.f32 1.0, %v3490
    %vm3498 = vcmask 1042432
    %v3499 = vrot.slane %v3284, 5
    %v3500 = vrot.slane %v3285, 5
    %v3501 = vsel %vm3498, %v3499, %v3500
    %v3502 = vrot.slane %v3286, 5
    %v3503 = vsel %vm3498, %v3500, %v3502
    %v3504 = vrot.slane %v3287, 5
    %v3505 = vrot.slane %v3288, 5
    %v3506 = vsel %vm3498, %v3504, %v3505
    %v3507 = vrot.slane %v3289, 5
    %v3508 = vsel %vm3498, %v3505, %v3507
    %v3515 = vsel %vm3498, 0.0, %v3499
    %v3516 = vsel %vm3498, 0.0, %v3504
    %v3517 = vld [vmem:[%s20] sm:$0x1]
    %v3518 = vlaneseq
    %v3519 = vshrl.u32 %v3518, 7
    %v3520 = vsub.s32 0, %v3519
    %v3521 = vrot.slane %v3517, %v3520
    %v3522 = vmul.f32 %v3515, %v3521
    %v3523 = vmul.f32 %v3501, %v3521
    %v3524 = vmul.f32 %v3503, %v3521
    %v3525 = vmul.f32 %v3516, %v3521
    %v3526 = vmul.f32 %v3506, %v3521
    %v3527 = vmul.f32 %v3508, %v3521
    %v3528 = vadd.f32 %v3522, 0.0
    %v3529 = vadd.f32 %v3523, 0.0
    %v3530 = vadd.f32 %v3524, 0.0
    %v3531 = vadd.f32 %v3525, 0.0
    %v3532 = vadd.f32 %v3526, 0.0
    %v3533 = vadd.f32 %v3527, 0.0
    %vm3534 = vcmask 1041408
    %v3535 = vrot.slane %v3284, 6
    %v3536 = vrot.slane %v3285, 6
    %v3537 = vsel %vm3534, %v3535, %v3536
    %v3538 = vrot.slane %v3286, 6
    %v3539 = vsel %vm3534, %v3536, %v3538
    %v3540 = vrot.slane %v3287, 6
    %v3541 = vrot.slane %v3288, 6
    %v3542 = vsel %vm3534, %v3540, %v3541
    %v3543 = vrot.slane %v3289, 6
    %v3544 = vsel %vm3534, %v3541, %v3543
    %v3551 = vsel %vm3534, 0.0, %v3535
    %v3552 = vsel %vm3534, 0.0, %v3540
    %v3553 = vld [vmem:[%s20 + $0x1] sm:$0x1]
    %v3554 = vlaneseq
    %v3555 = vshrl.u32 %v3554, 7
    %v3556 = vsub.s32 0, %v3555
    %v3557 = vrot.slane %v3553, %v3556
    %v3558 = vmul.f32 %v3551, %v3557
    %v3559 = vmul.f32 %v3537, %v3557
    %v3560 = vmul.f32 %v3539, %v3557
    %v3561 = vmul.f32 %v3552, %v3557
    %v3562 = vmul.f32 %v3542, %v3557
    %v3563 = vmul.f32 %v3544, %v3557
    %v3564 = vadd.f32 %v3528, %v3558
    %v3565 = vadd.f32 %v3529, %v3559
    %v3566 = vadd.f32 %v3530, %v3560
    %v3567 = vadd.f32 %v3531, %v3561
    %v3568 = vadd.f32 %v3532, %v3562
    %v3569 = vadd.f32 %v3533, %v3563
    %v3570 = vrot.slane %v3284, 7
    %v3571 = vrot.slane %v3285, 7
    %v3572 = vsel %vm2343, %v3570, %v3571
    %v3573 = vrot.slane %v3286, 7
    %v3574 = vsel %vm2343, %v3571, %v3573
    %v3575 = vrot.slane %v3287, 7
    %v3576 = vrot.slane %v3288, 7
    %v3577 = vsel %vm2343, %v3575, %v3576
    %v3578 = vrot.slane %v3289, 7
    %v3579 = vsel %vm2343, %v3576, %v3578
    %v3586 = vsel %vm2343, 0.0, %v3570
    %v3587 = vsel %vm2343, 0.0, %v3575
    %v3588 = vld [vmem:[%s20 + $0x2] sm:$0x1]
    %v3589 = vlaneseq
    %v3590 = vshrl.u32 %v3589, 7
    %v3591 = vsub.s32 0, %v3590
    %v3592 = vrot.slane %v3588, %v3591
    %v3593 = vmul.f32 %v3586, %v3592
    %v3594 = vmul.f32 %v3572, %v3592
    %v3595 = vmul.f32 %v3574, %v3592
    %v3596 = vmul.f32 %v3587, %v3592
    %v3597 = vmul.f32 %v3577, %v3592
    %v3598 = vmul.f32 %v3579, %v3592
    %v3599 = vadd.f32 %v3564, %v3593
    %v3600 = vadd.f32 %v3565, %v3594
    %v3601 = vadd.f32 %v3566, %v3595
    %v3602 = vadd.f32 %v3567, %v3596
    %v3603 = vadd.f32 %v3568, %v3597
    %v3604 = vadd.f32 %v3569, %v3598
    %v3605 = vld [vmem:[%s20 + $0x3] sm:$0x1]
    %v3606 = vlaneseq
    %v3607 = vshrl.u32 %v3606, 7
    %v3608 = vsub.s32 0, %v3607
    %v3609 = vrot.slane %v3605, %v3608
    %v3610 = vmul.f32 %v3284, %v3609
    %v3611 = vmul.f32 %v3285, %v3609
    %v3612 = vmul.f32 %v3286, %v3609
    %v3613 = vmul.f32 %v3287, %v3609
    %v3614 = vmul.f32 %v3288, %v3609
    %v3615 = vmul.f32 %v3289, %v3609
    %v3616 = vadd.f32 %v3599, %v3610
    %v3617 = vadd.f32 %v3600, %v3611
    %v3618 = vadd.f32 %v3601, %v3612
    %v3619 = vadd.f32 %v3602, %v3613
    %v3620 = vadd.f32 %v3603, %v3614
    %v3621 = vadd.f32 %v3604, %v3615
    %v3622 = vrot.slane %v3284, 1
    %v3623 = vrot.slane %v3285, 1
    %v3624 = vsel %vm597, %v3622, %v3623
    %v3625 = vrot.slane %v3286, 1
    %v3626 = vsel %vm597, %v3623, %v3625
    %v3627 = vrot.slane %v3287, 1
    %v3628 = vrot.slane %v3288, 1
    %v3629 = vsel %vm597, %v3627, %v3628
    %v3630 = vrot.slane %v3289, 1
    %v3631 = vsel %vm597, %v3628, %v3630
    %v3638 = vsel %vm597, %v3625, 0.0
    %v3639 = vsel %vm597, %v3630, 0.0
    %v3640 = vld [vmem:[%s20 + $0x4] sm:$0x1]
    %v3641 = vlaneseq
    %v3642 = vshrl.u32 %v3641, 7
    %v3643 = vsub.s32 0, %v3642
    %v3644 = vrot.slane %v3640, %v3643
    %v3645 = vmul.f32 %v3624, %v3644
    %v3646 = vmul.f32 %v3626, %v3644
    %v3647 = vmul.f32 %v3638, %v3644
    %v3648 = vmul.f32 %v3629, %v3644
    %v3649 = vmul.f32 %v3631, %v3644
    %v3650 = vmul.f32 %v3639, %v3644
    %v3651 = vadd.f32 %v3616, %v3645
    %v3652 = vadd.f32 %v3617, %v3646
    %v3653 = vadd.f32 %v3618, %v3647
    %v3654 = vadd.f32 %v3619, %v3648
    %v3655 = vadd.f32 %v3620, %v3649
    %v3656 = vadd.f32 %v3621, %v3650
    %v3657 = vrot.slane %v3284, 2
    %v3658 = vrot.slane %v3285, 2
    %v3659 = vsel %vm1358, %v3657, %v3658
    %v3660 = vrot.slane %v3286, 2
    %v3661 = vsel %vm1358, %v3658, %v3660
    %v3662 = vrot.slane %v3287, 2
    %v3663 = vrot.slane %v3288, 2
    %v3664 = vsel %vm1358, %v3662, %v3663
    %v3665 = vrot.slane %v3289, 2
    %v3666 = vsel %vm1358, %v3663, %v3665
    %v3673 = vsel %vm1358, %v3660, 0.0
    %v3674 = vsel %vm1358, %v3665, 0.0
    %v3675 = vld [vmem:[%s20 + $0x5] sm:$0x1]
    %v3676 = vlaneseq
    %v3677 = vshrl.u32 %v3676, 7
    %v3678 = vsub.s32 0, %v3677
    %v3679 = vrot.slane %v3675, %v3678
    %v3680 = vmul.f32 %v3659, %v3679
    %v3681 = vmul.f32 %v3661, %v3679
    %v3682 = vmul.f32 %v3673, %v3679
    %v3683 = vmul.f32 %v3664, %v3679
    %v3684 = vmul.f32 %v3666, %v3679
    %v3685 = vmul.f32 %v3674, %v3679
    %v3686 = vadd.f32 %v3651, %v3680
    %v3687 = vadd.f32 %v3652, %v3681
    %v3688 = vadd.f32 %v3653, %v3682
    %v3689 = vadd.f32 %v3654, %v3683
    %v3690 = vadd.f32 %v3655, %v3684
    %v3691 = vadd.f32 %v3656, %v3685
    %v3692 = vrot.slane %v3284, 3
    %v3693 = vrot.slane %v3285, 3
    %v3694 = vsel %vm1819, %v3692, %v3693
    %v3695 = vrot.slane %v3286, 3
    %v3696 = vsel %vm1819, %v3693, %v3695
    %v3697 = vrot.slane %v3287, 3
    %v3698 = vrot.slane %v3288, 3
    %v3699 = vsel %vm1819, %v3697, %v3698
    %v3700 = vrot.slane %v3289, 3
    %v3701 = vsel %vm1819, %v3698, %v3700
    %v3708 = vsel %vm1819, %v3695, 0.0
    %v3709 = vsel %vm1819, %v3700, 0.0
    %v3710 = vld [vmem:[%s20 + $0x6] sm:$0x1]
    %v3711 = vlaneseq
    %v3712 = vshrl.u32 %v3711, 7
    %v3713 = vsub.s32 0, %v3712
    %v3714 = vrot.slane %v3710, %v3713
    %v3715 = vmul.f32 %v3694, %v3714
    %v3716 = vmul.f32 %v3696, %v3714
    %v3717 = vmul.f32 %v3708, %v3714
    %v3718 = vmul.f32 %v3699, %v3714
    %v3719 = vmul.f32 %v3701, %v3714
    %v3720 = vmul.f32 %v3709, %v3714
    %v3721 = vadd.f32 %v3686, %v3715
    %v3722 = vadd.f32 %v3687, %v3716
    %v3723 = vadd.f32 %v3688, %v3717
    %v3724 = vadd.f32 %v3689, %v3718
    %v3725 = vadd.f32 %v3690, %v3719
    %v3726 = vadd.f32 %v3691, %v3720
    %3727 = vadd.xlane.f32.xlu0 %v3721
    %v3728 = vpop.xlane.xlu0 %3727
    %3729 = vadd.xlane.f32.xlu0 %v3722
    %v3730 = vpop.xlane.xlu0 %3729
    %3731 = vadd.xlane.f32.xlu0 %v3723
    %v3732 = vpop.xlane.xlu0 %3731
    %3733 = vadd.xlane.f32.xlu0 %v3724
    %v3734 = vpop.xlane.xlu0 %3733
    %3735 = vadd.xlane.f32.xlu0 %v3725
    %v3736 = vpop.xlane.xlu0 %3735
    %3737 = vadd.xlane.f32.xlu0 %v3726
    %v3738 = vpop.xlane.xlu0 %3737
    %s3739 = sld [smem:[#allocation2 + $0x2]]
    %v3740 = vstv %s3739
    %v3741 = vadd.f32 %v3728, %v3740
    %v3742 = vadd.f32 %v3730, %v3740
    %v3743 = vadd.f32 %v3732, %v3740
    %v3744 = vadd.f32 %v3734, %v3740
    %v3745 = vadd.f32 %v3736, %v3740
    %v3746 = vadd.f32 %v3738, %v3740
    %v3747 = vxor.u32 %v3741, 2147483648
    %v3748 = vxor.u32 %v3742, 2147483648
    %v3749 = vxor.u32 %v3743, 2147483648
    %v3750 = vxor.u32 %v3744, 2147483648
    %v3751 = vxor.u32 %v3745, 2147483648
    %v3752 = vxor.u32 %v3746, 2147483648
    %v3753 = vmul.f32 %v3747, 1.442695
    %v3754 = vpow.pop %v3753
    %v3755 = vmul.f32 %v3748, 1.442695
    %v3756 = vpow.pop %v3755
    %v3757 = vmul.f32 %v3749, 1.442695
    %v3758 = vpow.pop %v3757
    %v3759 = vmul.f32 %v3750, 1.442695
    %v3760 = vpow.pop %v3759
    %v3761 = vmul.f32 %v3751, 1.442695
    %v3762 = vpow.pop %v3761
    %v3763 = vmul.f32 %v3752, 1.442695
    %v3764 = vpow.pop %v3763
    %v3765 = vadd.f32 %v3754, 1.0
    %v3766 = vadd.f32 %v3756, 1.0
    %v3767 = vadd.f32 %v3758, 1.0
    %v3768 = vadd.f32 %v3760, 1.0
    %v3769 = vadd.f32 %v3762, 1.0
    %v3770 = vadd.f32 %v3764, 1.0
    %v3771 = vrcp.pop %v3765
    %v3772 = vmul.f32 1.0, %v3771
    %v3773 = vrcp.pop %v3766
    %v3774 = vmul.f32 1.0, %v3773
    %v3775 = vrcp.pop %v3767
    %v3776 = vmul.f32 1.0, %v3775
    %v3777 = vrcp.pop %v3768
    %v3778 = vmul.f32 1.0, %v3777
    %v3779 = vrcp.pop %v3769
    %v3780 = vmul.f32 1.0, %v3779
    %v3781 = vrcp.pop %v3770
    %v3782 = vmul.f32 1.0, %v3781
    %v3783 = vmul.f32 %v3284, %v3772
    %v3784 = vmul.f32 %v3285, %v3774
    %v3785 = vmul.f32 %v3286, %v3776
    %v3786 = vmul.f32 %v3287, %v3778
    %v3787 = vmul.f32 %v3288, %v3780
    %v3788 = vmul.f32 %v3289, %v3782
    %v3789 = vadd.f32 %v3783, %v3784
    %v3790 = vadd.f32 %v3789, %v3785
    %v3791 = vrot.slane %v3790, 4
    %v3792 = vadd.f32 %v3790, %v3791
    %v3793 = vrot.slane %v3792, 2
    %v3794 = vadd.f32 %v3792, %v3793
    %v3795 = vrot.slane %v3794, 1
    %v3796 = vadd.f32 %v3794, %v3795
    %v3797 = vadd.f32 %v3786, %v3787
    %v3798 = vadd.f32 %v3797, %v3788
    %v3799 = vrot.slane %v3798, 4
    %v3800 = vadd.f32 %v3798, %v3799
    %v3801 = vrot.slane %v3800, 2
    %v3802 = vadd.f32 %v3800, %v3801
    %v3803 = vrot.slane %v3802, 1
    %v3804 = vadd.f32 %v3802, %v3803
    %s3805 = sld [smem:[#allocation2]]
    %v3808 = vsel %vm3337, %v3305, %v3297
    %v3810 = vmul.f32 %v3491, %v3808
    %v3811 = vstv %s3805
    %v3812 = vmul.f32 %v3811, %v3810
    %s3813 = sld [smem:[#allocation2 + $0x1]]
    %v3814 = vstv %s3813
    %v3815 = vmul.f32 %v3814, %v3796
    %v3816 = vmul.f32 %v3814, %v3804
    %v3819 = vsel %vm3337, %v3816, %v3815
    %v3821 = vadd.f32 %v3812, %v3819
    %v3824 = vsel %vm3337, %v2336, %v2328
    %v3826 = vadd.f32 %v3821, %v3824
    %v3827 = vmul.f32 %v3826, 0.055555556
    %v3828 = vpack.c.bf16 %v3827, %v3827
    %v3829 = vld [vmem:[%s21] sm:$0xf]
    %v3830 = vld [vmem:[%s21 + $0x4] sm:$0xf]
    %v3831 = vld [vmem:[%s21 + $0x8] sm:$0xf]
    %v3832 = vld [vmem:[%s21 + $0xc] sm:$0xf]
    %v3833 = vld [vmem:[%s21 + $0x10] sm:$0xf]
    %v3834 = vld [vmem:[%s21 + $0x14] sm:$0xf]
    %v3835 = vld [vmem:[%s21 + $0x18] sm:$0xf]
    %v3836 = vld [vmem:[%s21 + $0x1c] sm:$0xf]
    %v3837 = vld [vmem:[%s21 + $0x20] sm:$0xf]
    %v3838 = vld [vmem:[%s21 + $0x24] sm:$0xf]
    %v3839 = vld [vmem:[%s21 + $0x28] sm:$0xf]
    %v3840 = vld [vmem:[%s21 + $0x2c] sm:$0xf]
    %v3841 = vld [vmem:[%s21 + $0x30] sm:$0xf]
    %v3842 = vld [vmem:[%s21 + $0x34] sm:$0xf]
    %v3843 = vld [vmem:[%s21 + $0x38] sm:$0xf]
    %v3844 = vld [vmem:[%s21 + $0x3c] sm:$0xf]
    %v3845 = vld [vmem:[%s22] sm:$0x1]
    %v3847 = vlaneseq
    %v3848 = vshrl.u32 %v3847, 7
    %v3849 = vsub.s32 0, %v3848
    %v3850 = vrot.slane %v3845, %v3849
    %v3868 = vunpack.c.l.b16 %v3829
    %v3869 = vunpack.c.l.b16 %v3830
    %v3870 = vunpack.c.l.b16 %v3831
    %v3871 = vunpack.c.l.b16 %v3832
    %v3872 = vunpack.c.l.b16 %v3833
    %v3873 = vunpack.c.l.b16 %v3834
    %v3874 = vunpack.c.l.b16 %v3835
    %v3875 = vunpack.c.l.b16 %v3836
    %v3876 = vunpack.c.l.b16 %v3837
    %v3877 = vunpack.c.l.b16 %v3838
    %v3878 = vunpack.c.l.b16 %v3839
    %v3879 = vunpack.c.l.b16 %v3840
    %v3880 = vunpack.c.l.b16 %v3841
    %v3881 = vunpack.c.l.b16 %v3842
    %v3882 = vunpack.c.l.b16 %v3843
    %v3883 = vunpack.c.l.b16 %v3844
    %v3884 = vpack.c.b16 %v3869, %v3868
    %v3885 = vpack.c.b16 %v3871, %v3870
    %v3886 = vpack.c.b16 %v3873, %v3872
    %v3887 = vpack.c.b16 %v3875, %v3874
    %v3888 = vpack.c.b16 %v3877, %v3876
    %v3889 = vpack.c.b16 %v3879, %v3878
    %v3890 = vpack.c.b16 %v3881, %v3880
    %v3891 = vpack.c.b16 %v3883, %v3882
    %3900 = vmatprep.subr.bf16.mxu0 0
    %3901 = vmatpush1.bf16.msra.mxu0 %v3884
    %3902 = vmatprep.subr.bf16.mxu0 0
    %3903 = vmatpush1.bf16.msra.mxu0 %v3885
    %3904 = vmatprep.subr.bf16.mxu0 0
    %3905 = vmatpush1.bf16.msra.mxu0 %v3886
    %3906 = vmatprep.subr.bf16.mxu0 0
    %3907 = vmatpush1.bf16.msra.mxu0 %v3887
    %3908 = vmatprep.subr.bf16.mxu0 0
    %3909 = vmatpush1.bf16.msra.mxu0 %v3888
    %3910 = vmatprep.subr.bf16.mxu0 0
    %3911 = vmatpush1.bf16.msra.mxu0 %v3889
    %3912 = vmatprep.subr.bf16.mxu0 0
    %3913 = vmatpush1.bf16.msra.mxu0 %v3890
    %3914 = vmatprep.subr.bf16.mxu0 0
    %3915 = vmatpush1.bf16.msra.mxu0 %v3891
    %3916 = vmatprep.subr.bf16.mxu0 0
    %3917 = vmatpush1.bf16.msra.mxu0 0
    %3918 = vmatprep.subr.bf16.mxu0 0
    %3919 = vmatpush1.bf16.msra.mxu0 0
    %3920 = vmatprep.subr.bf16.mxu0 0
    %3921 = vmatpush1.bf16.msra.mxu0 0
    %3922 = vmatprep.subr.bf16.mxu0 0
    %3923 = vmatpush1.bf16.msra.mxu0 0
    %3924 = vmatprep.subr.bf16.mxu0 0
    %3925 = vmatpush1.bf16.msra.mxu0 0
    %3926 = vmatprep.subr.bf16.mxu0 0
    %3927 = vmatpush1.bf16.msra.mxu0 0
    %3928 = vmatprep.subr.bf16.mxu0 0
    %3929 = vmatpush1.bf16.msra.mxu0 0
    %3930 = vmatprep.subr.bf16.mxu0 0
    %3931 = vmatpush1.bf16.msra.mxu0 0
    %3932 = vmatprep.mubr.bf16.mxu0 0
    %3933 = vmatmul.mubr.bf16.gmra.mrb[0].mxu0 %v3828
    %v3934 = vpop.f32.mrb[0].mxu0
    %v3935 = vadd.f32 %v3850, %v3934
    %v3936 = vpop.f32.mrb[0].mxu0
    %v3937 = vpop.f32.mrb[0].mxu0
    %v3938 = vpop.f32.mrb[0].mxu0
    %3939 = vdwg.mxu0
    %3940 = vst [vmem:[#allocation5] sm:$0x3] %v3935
    // Predicated region
    $region98: #{tcsn_forward.1} parent=1 // pred_check
      _
    $region99: #{tcsn_forward.1} parent=1 // pred_check_branch
      %3942 = sbr.rel (0) target = $region101
    $region100: #{tcsn_forward.1} parent=1 // pred_region
      %s3944 = ssub.s32 32, 32
      %3945 = vsyncadd [#allocation3], %s3944
      %s3947 = sshll.u32 [#allocation5], 4
      %s3948 = int_to_ptr.vmem [resolvable:$true] %s3947
      %3950 = dma.vmem_to_hbm [thread:$0]  %s3948, 32, %s23, [#allocation3]
    $region101: #{tcsn_forward.1} parent=1 // pred_fallthru
      _
    // Predicated region
    $region102: #{tcsn_forward.1} parent=1 // pred_check
      _
    $region103: #{tcsn_forward.1} parent=1 // pred_check_branch
      %3952 = sbr.rel (0) target = $region105
    $region104: #{tcsn_forward.1} parent=1 // pred_region
      %3953 = dma.done [#allocation3], 32
    $region105: #{tcsn_forward.1} parent=1 // pred_fallthru
      _
    %3954 = vsyncpa [#allocation3], 1
    %3955 = vsyncpa [#allocation4], 1

</llo_original>
